<compile_context>
chip_gen: v5e
topology: v5e:2x2
jax: 0.10.0
libtpu: 0.0.40
codegen_flags: <defaults>
</compile_context>

<pallas_src>
import functools

import jax
import jax.numpy as jnp
from jax import lax
from jax.experimental import pallas as pl
from jax.experimental.pallas import tpu as pltpu


def _round_up(n, m):
    return ((n + m - 1) // m) * m


def _row_tile(n, cap=512):
    # Lane-dense row tile: full extent when small, else a 512-row (8-aligned)
    # tile; Pallas masks the partial trailing block.
    return n if n <= cap else cap


# ---------------------------------------------------------------------------
# Kernel 1: fused prenet (Linear+ReLU x2) + positional embedding add
# ---------------------------------------------------------------------------

def _prenet_kernel(x_ref, w1_ref, b1_ref, w2_ref, b2_ref, pos_ref, o_ref):
    # TODO(synk): Dropout is identity (eval mode); stochastic masking not done.
    h = jnp.dot(x_ref[0], w1_ref[...], preferred_element_type=jnp.float32)
    h = jnp.maximum(h + b1_ref[...], 0.0)
    h = jnp.dot(h.astype(jnp.bfloat16), w2_ref[...],
                preferred_element_type=jnp.float32)
    h = jnp.maximum(h + b2_ref[...], 0.0)
    o_ref[0] = (h + pos_ref[...]).astype(o_ref.dtype)


def prenet_pos(x_pad, kp, pos):
    """x_pad: [B,T,Dp] bf16, pos: [T,D] f32 -> [B,T,D] f32."""
    B, T, Dp = x_pad.shape
    D = kp["prenet_w2"].shape[1]
    tt = _row_tile(T)
    return pl.pallas_call(
        _prenet_kernel,
        grid=(B, pl.cdiv(T, tt)),
        in_specs=[
            pl.BlockSpec((1, tt, Dp), lambda b, t: (b, t, 0)),
            pl.BlockSpec(kp["prenet_w1"].shape, lambda b, t: (0, 0)),
            pl.BlockSpec(kp["prenet_b1"].shape, lambda b, t: (0, 0)),
            pl.BlockSpec(kp["prenet_w2"].shape, lambda b, t: (0, 0)),
            pl.BlockSpec(kp["prenet_b2"].shape, lambda b, t: (0, 0)),
            pl.BlockSpec((tt, D), lambda b, t: (t, 0)),
        ],
        out_specs=pl.BlockSpec((1, tt, D), lambda b, t: (b, t, 0)),
        out_shape=jax.ShapeDtypeStruct((B, T, D), jnp.float32),
        compiler_params=pltpu.CompilerParams(
            dimension_semantics=("parallel", "parallel")),
    )(x_pad, kp["prenet_w1"], kp["prenet_b1"], kp["prenet_w2"],
      kp["prenet_b2"], pos)


# ---------------------------------------------------------------------------
# Kernel 2: all residual attention blocks fused, grid=(B, L)
# ---------------------------------------------------------------------------

_BLOCK_PARAM_ORDER = (
    "ln1_g", "ln1_b", "wqkv_s", "bqkv_s", "wo_s", "bo_s",
    "ln2_g", "ln2_b", "wq_c", "bq_c", "wkv_c", "bkv_c", "wo_c", "bo_c",
    "ln3_g", "ln3_b", "w1", "b1", "w2", "b2",
)


def _layers_kernel(x_ref, enc_ref,
                   ln1_g, ln1_b, wqkv_s, bqkv_s, wo_s, bo_s,
                   ln2_g, ln2_b, wq_c, bq_c, wkv_c, bkv_c, wo_c, bo_c,
                   ln3_g, ln3_b, w1, b1, w2, b2,
                   o_ref, aw1_ref, aw2_ref, xs_ref,
                   *, H, dh, eps, K1, K2):
    # TODO(synk): ResidualAttentionBlock source was not provided; this is the
    # standard pre-LN self-attn + cross-attn + Conv1d([K1,K2]) FFN structure
    # implied by the constructor (key projection carries no bias).
    layer = pl.program_id(1)
    D = H * dh
    scale = 1.0 / (dh ** 0.5)

    @pl.when(layer == 0)
    def _():
        xs_ref[...] = x_ref[0]

    x = xs_ref[...]                          # resident f32 residual stream
    enc = enc_ref[0]

    def ln(v, g_ref, b_ref):
        mu = jnp.mean(v, axis=-1, keepdims=True)
        var = jnp.mean(jnp.square(v - mu), axis=-1, keepdims=True)
        return (v - mu) * lax.rsqrt(var + eps) * g_ref[0] + b_ref[0]

    def mha(q2d, k2d, v2d, wo2d, bo2d, aw_ref):
        Tq, Sk = q2d.shape[0], k2d.shape[0]
        qh = q2d.reshape(Tq, H, dh).transpose(1, 0, 2).astype(jnp.bfloat16)
        kh = k2d.reshape(Sk, H, dh).transpose(1, 0, 2).astype(jnp.bfloat16)
        vh = v2d.reshape(Sk, H, dh).transpose(1, 0, 2).astype(jnp.bfloat16)
        s = jnp.einsum("htd,hsd->hts", qh, kh,
                       preferred_element_type=jnp.float32) * scale
        m = jnp.max(s, axis=-1, keepdims=True)
        e = jnp.exp(s - m)
        p = e * pl.reciprocal(jnp.sum(e, axis=-1, keepdims=True), approx=True)
        aw_ref[0, 0] = p
        ctx = jnp.einsum("hts,hsd->htd", p.astype(jnp.bfloat16), vh,
                         preferred_element_type=jnp.float32)
        ctx2d = ctx.transpose(1, 0, 2).reshape(Tq, D)
        # Single full-width output projection ([T,D]@[D,D]) + bias once.
        return jnp.dot(ctx2d.astype(jnp.bfloat16), wo2d,
                       preferred_element_type=jnp.float32) + bo2d

    def conv_same(v, w2d, b2d, K, relu):
        # 'same' Conv1d along time as a single im2col matmul: K rolled copies
        # (XLU) with boundary masks, lane-concatenated to [T, K*Cin].
        Tv, Cin = v.shape
        if K == 1:
            cols = v.astype(jnp.bfloat16)
        else:
            pad = (K - 1) // 2
            row = lax.broadcasted_iota(jnp.int32, (Tv, Cin), 0)
            pieces = []
            for k in range(K):
                d = k - pad
                sh = v if d == 0 else pltpu.roll(v, (-d) % Tv, axis=0)
                keep = (row + d >= 0) & (row + d < Tv)
                pieces.append(jnp.where(keep, sh, 0.0))
            cols = jnp.concatenate(pieces, axis=-1).astype(jnp.bfloat16)
        acc = jnp.dot(cols, w2d, preferred_element_type=jnp.float32) + b2d
        return jnp.maximum(acc, 0.0) if relu else acc

    # ---- self attention: LN1 + fused QKV projection ----
    h1 = ln(x, ln1_g, ln1_b)
    qkv = jnp.dot(h1.astype(jnp.bfloat16), wqkv_s[0],
                  preferred_element_type=jnp.float32) + bqkv_s[0]
    x = x + mha(qkv[:, :D], qkv[:, D:2 * D], qkv[:, 2 * D:],
                wo_s[0], bo_s[0], aw1_ref)

    # ---- cross attention: LN2 + Q proj; fused KV projection of encoder ----
    h2 = ln(x, ln2_g, ln2_b)
    q2 = jnp.dot(h2.astype(jnp.bfloat16), wq_c[0],
                 preferred_element_type=jnp.float32) + bq_c[0]
    kv = jnp.dot(enc.astype(jnp.bfloat16), wkv_c[0],
                 preferred_element_type=jnp.float32) + bkv_c[0]
    x = x + mha(q2, kv[:, :D], kv[:, D:], wo_c[0], bo_c[0], aw2_ref)

    # ---- conv FFN: LN3 + Conv1d(K1)+ReLU + Conv1d(K2) + residual ----
    h3 = ln(x, ln3_g, ln3_b)
    x = x + conv_same(conv_same(h3, w1[0], b1[0], K1, relu=True),
                      w2[0], b2[0], K2, relu=False)

    xs_ref[...] = x

    @pl.when(layer == pl.num_programs(1) - 1)
    def _():
        o_ref[0] = x.astype(o_ref.dtype)


def decoder_layers(x, enc, kp, num_heads):
    """x: [B,T,D] f32, enc: [B,S,D] f32 -> (x' bf16, aw1 [L,B,H,T,T], aw2)."""
    B, T, D = x.shape
    S = enc.shape[1]
    L, K1, K2 = kp["L"], kp["K1"], kp["K2"]
    H = num_heads
    dh = D // H
    lp = kp["layers"]

    weight_args = [lp[name] for name in _BLOCK_PARAM_ORDER]
    in_specs = [pl.BlockSpec((1, T, D), lambda b, l: (b, 0, 0)),
                pl.BlockSpec((1, S, D), lambda b, l: (b, 0, 0))]
    for a in weight_args:
        nd = a.ndim - 1
        in_specs.append(
            pl.BlockSpec((1,) + a.shape[1:],
                         lambda b, l, nd=nd: (l,) + (0,) * nd))

    out_shape = (jax.ShapeDtypeStruct((B, T, D), jnp.bfloat16),
                 jax.ShapeDtypeStruct((L, B, H, T, T), jnp.float32),
                 jax.ShapeDtypeStruct((L, B, H, T, S), jnp.float32))
    out_specs = (pl.BlockSpec((1, T, D), lambda b, l: (b, 0, 0)),
                 pl.BlockSpec((1, 1, H, T, T), lambda b, l: (l, b, 0, 0, 0)),
                 pl.BlockSpec((1, 1, H, T, S), lambda b, l: (l, b, 0, 0, 0)))

    return pl.pallas_call(
        functools.partial(_layers_kernel, H=H, dh=dh, eps=1e-5, K1=K1, K2=K2),
        grid=(B, L),
        in_specs=in_specs,
        out_specs=out_specs,
        out_shape=out_shape,
        scratch_shapes=[pltpu.VMEM((T, D), jnp.float32)],
        compiler_params=pltpu.CompilerParams(
            dimension_semantics=("parallel", "arbitrary"),
            vmem_limit_bytes=48 * 1024 * 1024),
    )(x, enc, *weight_args)


# ---------------------------------------------------------------------------
# Kernel 3: feat_out projection (bias-free), out_dim padded to 128 lanes
# ---------------------------------------------------------------------------

def _feat_out_kernel(x_ref, w_ref, o_ref):
    o_ref[...] = jnp.dot(x_ref[...], w_ref[...],
                         preferred_element_type=jnp.float32).astype(o_ref.dtype)


def feat_out(x2d, w_pad):
    M, _ = x2d.shape
    Np = w_pad.shape[1]
    tm = _row_tile(M)
    return pl.pallas_call(
        _feat_out_kernel,
        grid=(pl.cdiv(M, tm),),
        in_specs=[pl.BlockSpec((tm, x2d.shape[1]), lambda i: (i, 0)),
                  pl.BlockSpec(w_pad.shape, lambda i: (0, 0))],
        out_specs=pl.BlockSpec((tm, Np), lambda i: (i, 0)),
        out_shape=jax.ShapeDtypeStruct((M, Np), jnp.float32),
        compiler_params=pltpu.CompilerParams(
            dimension_semantics=("parallel",)),
    )(x2d, w_pad)


# ---------------------------------------------------------------------------
# Parameter packing: per-layer weights stacked on a leading layer axis,
# fused QKV/KV weights, conv weights pre-reshaped for im2col, bf16 MXU
# operands, lane-padded 80->128 dims.
# ---------------------------------------------------------------------------

def pack_params(params):
    cdt = jnp.bfloat16
    blocks = params["blocks"]
    L = len(blocks)
    D = blocks[0]["ln1_g"].shape[0]
    K1, F = blocks[0]["conv1_w"].shape[0], blocks[0]["conv1_w"].shape[2]
    K2 = blocks[0]["conv2_w"].shape[0]

    def stack(fn, dtype=None):
        a = jnp.stack([fn(b) for b in blocks])
        return a.astype(dtype) if dtype is not None else a

    layers = dict(
        ln1_g=stack(lambda b: b["ln1_g"].reshape(1, D)),
        ln1_b=stack(lambda b: b["ln1_b"].reshape(1, D)),
        wqkv_s=stack(lambda b: jnp.concatenate(
            [b["self_attn"]["wq"], b["self_attn"]["wk"],
             b["self_attn"]["wv"]], axis=1), cdt),
        bqkv_s=stack(lambda b: jnp.concatenate(
            [b["self_attn"]["bq"], jnp.zeros_like(b["self_attn"]["bq"]),
             b["self_attn"]["bv"]]).reshape(1, 3 * D)),
        wo_s=stack(lambda b: b["self_attn"]["wo"], cdt),
        bo_s=stack(lambda b: b["self_attn"]["bo"].reshape(1, D)),
        ln2_g=stack(lambda b: b["ln2_g"].reshape(1, D)),
        ln2_b=stack(lambda b: b["ln2_b"].reshape(1, D)),
        wq_c=stack(lambda b: b["cross_attn"]["wq"], cdt),
        bq_c=stack(lambda b: b["cross_attn"]["bq"].reshape(1, D)),
        wkv_c=stack(lambda b: jnp.concatenate(
            [b["cross_attn"]["wk"], b["cross_attn"]["wv"]], axis=1), cdt),
        bkv_c=stack(lambda b: jnp.concatenate(
            [jnp.zeros_like(b["cross_attn"]["bv"]),
             b["cross_attn"]["bv"]]).reshape(1, 2 * D)),
        wo_c=stack(lambda b: b["cross_attn"]["wo"], cdt),
        bo_c=stack(lambda b: b["cross_attn"]["bo"].reshape(1, D)),
        ln3_g=stack(lambda b: b["ln3_g"].reshape(1, D)),
        ln3_b=stack(lambda b: b["ln3_b"].reshape(1, D)),
        w1=stack(lambda b: b["conv1_w"].reshape(K1 * D, F), cdt),
        b1=stack(lambda b: b["conv1_b"].reshape(1, F)),
        w2=stack(lambda b: b["conv2_w"].reshape(K2 * F, D), cdt),
        b2=stack(lambda b: b["conv2_b"].reshape(1, D)),
    )

    # prenet: zero-pad input feature dim (80) up to a 128-lane multiple.
    w1p = params["prenet_w1"]
    in_dim = w1p.shape[0]
    in_pad = _round_up(in_dim, 128)
    w1p = jnp.pad(w1p, ((0, in_pad - in_dim), (0, 0)))

    # feat_out: zero-pad out_dim (80) up to a 128-lane multiple.
    wf = params["feat_out_w"]
    out_dim = wf.shape[1]
    out_pad = _round_up(out_dim, 128)
    wfp = jnp.pad(wf, ((0, 0), (0, out_pad - out_dim)))

    return dict(
        prenet_w1=w1p.astype(cdt),
        prenet_b1=params["prenet_b1"].reshape(1, -1),
        prenet_w2=params["prenet_w2"].astype(cdt),
        prenet_b2=params["prenet_b2"].reshape(1, -1),
        layers=layers, L=L, K1=K1, K2=K2,
        feat_out_w=wfp.astype(cdt),
        in_dim=in_dim, in_pad=in_pad, out_dim=out_dim, out_pad=out_pad,
    )


# ---------------------------------------------------------------------------
# Forward pass
# ---------------------------------------------------------------------------

def decoder_forward(params, encoder_outs, decoder_targets, num_heads):
    kp = pack_params(params)
    B, T, Din = decoder_targets.shape
    D = kp["prenet_w2"].shape[1]

    x_in = decoder_targets
    if kp["in_pad"] != Din:
        x_in = jnp.pad(x_in, ((0, 0), (0, 0), (0, kp["in_pad"] - Din)))
    x_in = x_in.astype(jnp.bfloat16)
    pos = params["pos_emb"][:T]                                  # [T, D]
    x = prenet_pos(x_in, kp, pos)                                # [B,T,D] f32

    # All layers in one kernel; x stays VMEM-resident across the layer axis.
    x, aw1, aw2 = decoder_layers(x, encoder_outs, kp, num_heads)

    y = feat_out(x.reshape(B * T, D), kp["feat_out_w"])          # [B*T,out_pad]
    outs = y[:, :kp["out_dim"]].reshape(B, T, kp["out_dim"])
    outs = jnp.transpose(outs, (0, 2, 1))                        # [B,out_dim,T]
    # TODO(synk): PyTorch also stores self.aw3 = aw2.sum(dim=2).sum(dim=0) as a
    # module attribute side effect; not materialized here.
    return outs, aw1, aw2


# ---------------------------------------------------------------------------
# Deterministic parameter initialization (same structure as the PyTorch module)
# ---------------------------------------------------------------------------

def init_decoder_params(key, cfg):
    D = cfg["decoder_hidden_dim"]
    F = cfg["ffn_dim"]
    K1, K2 = cfg["dec_kernel_size"]
    keys = iter(jax.random.split(key, 1024))

    def dense(shape, scale=0.02):
        return (scale * jax.random.normal(next(keys), shape)).astype(jnp.float32)

    def attn_params():
        return dict(wq=dense((D, D)), bq=dense((D,)),
                    wk=dense((D, D)),
                    wv=dense((D, D)), bv=dense((D,)),
                    wo=dense((D, D)), bo=dense((D,)))

    blocks = []
    for _ in range(cfg["layers"]):
        blocks.append(dict(
            ln1_g=jnp.ones((D,), jnp.float32), ln1_b=jnp.zeros((D,), jnp.float32),
            self_attn=attn_params(),
            ln2_g=jnp.ones((D,), jnp.float32), ln2_b=jnp.zeros((D,), jnp.float32),
            cross_attn=attn_params(),
            ln3_g=jnp.ones((D,), jnp.float32), ln3_b=jnp.zeros((D,), jnp.float32),
            # NOTE: 'same' padding uses (K-1)//2 left / rest right; matches
            # PyTorch only for odd kernels (fine for K=5, K=1).
            conv1_w=dense((K1, D, F)), conv1_b=dense((F,)),
            conv2_w=dense((K2, F, D)), conv2_b=dense((D,)),
        ))

    return dict(
        prenet_w1=dense((cfg["prenet_in_dim"], cfg["prenet_hidden_dim"])),
        prenet_b1=dense((cfg["prenet_hidden_dim"],)),
        prenet_w2=dense((cfg["prenet_hidden_dim"], D)),
        prenet_b2=dense((D,)),
        pos_emb=dense((cfg["dec_input_maxlen"], D)),
        blocks=blocks,
        feat_out_w=dense((D, cfg["out_dim"])),
    )


# ---------------------------------------------------------------------------

if __name__ == "__main__":
    cfg = dict(decoder_hidden_dim=128, prenet_in_dim=80, out_dim=80, layers=2,
               prenet_hidden_dim=128, ffn_dim=256, num_heads=4,
               dec_kernel_size=(5, 1), dec_input_maxlen=64)

    key = jax.random.PRNGKey(0)
    pkey, ekey, dkey = jax.random.split(key, 3)
    params = init_decoder_params(pkey, cfg)

    B, T, S = 2, 8, 16
    encoder_outs = jax.random.normal(ekey, (B, S, cfg["decoder_hidden_dim"]),
                                     jnp.float32)
    decoder_targets = jax.random.normal(dkey, (B, T, cfg["prenet_in_dim"]),
                                        jnp.float32)

    fwd = jax.jit(decoder_forward, static_argnums=3)
    outs, aw1, aw2 = fwd(params, encoder_outs, decoder_targets, cfg["num_heads"])
    jax.block_until_ready((outs, aw1, aw2))

    assert outs.shape == (B, cfg["out_dim"], T)
    assert aw1.shape == (cfg["layers"], B, cfg["num_heads"], T, T)
    assert aw2.shape == (cfg["layers"], B, cfg["num_heads"], T, S)
    assert bool(jnp.all(jnp.isfinite(outs)))
    print("KERNEL_OK")
</pallas_src>

<mosaic_0001>
module attributes {stable_mosaic.version = 11 : i64} {
  func.func @_prenet_kernel(%arg0: i32, %arg1: i32, %arg2: memref<1x8x128xbf16, #tpu.memory_space<vmem>>, %arg3: memref<128x128xbf16, #tpu.memory_space<vmem>>, %arg4: memref<1x128xf32, #tpu.memory_space<vmem>>, %arg5: memref<128x128xbf16, #tpu.memory_space<vmem>>, %arg6: memref<1x128xf32, #tpu.memory_space<vmem>>, %arg7: memref<8x128xf32, #tpu.memory_space<vmem>>, %arg8: memref<1x8x128xf32, #tpu.memory_space<vmem>>) attributes {dimension_semantics = [#tpu.dimension_semantics<parallel>, #tpu.dimension_semantics<parallel>], iteration_bounds = array<i64: 2, 1>, scalar_prefetch = 0 : i64, scratch_operands = 0 : i64, tpu.core_type = #tpu.core_type<tc>, window_params = [{transform_indices = @transform_0, window_bounds = array<i64: 1, 8, 128>}, {pipeline_mode = #tpu.pipeline_mode<synchronous>, transform_indices = @transform_1, window_bounds = array<i64: 128, 128>}, {pipeline_mode = #tpu.pipeline_mode<synchronous>, transform_indices = @transform_2, window_bounds = array<i64: 1, 128>}, {pipeline_mode = #tpu.pipeline_mode<synchronous>, transform_indices = @transform_3, window_bounds = array<i64: 128, 128>}, {pipeline_mode = #tpu.pipeline_mode<synchronous>, transform_indices = @transform_4, window_bounds = array<i64: 1, 128>}, {transform_indices = @transform_5, window_bounds = array<i64: 8, 128>}, {transform_indices = @transform_6, window_bounds = array<i64: 1, 8, 128>}]} {
    %c0 = arith.constant 0 : index
    %c0_0 = arith.constant 0 : index
    %c0_1 = arith.constant 0 : index
    %0 = vector.load %arg2[%c0, %c0_0, %c0_1] : memref<1x8x128xbf16, #tpu.memory_space<vmem>>, vector<1x8x128xbf16>
    %1 = vector.shape_cast %0 : vector<1x8x128xbf16> to vector<8x128xbf16>
    %c0_2 = arith.constant 0 : index
    %c0_3 = arith.constant 0 : index
    %2 = vector.load %arg3[%c0_2, %c0_3] : memref<128x128xbf16, #tpu.memory_space<vmem>>, vector<128x128xbf16>
    %cst = arith.constant dense<0.000000e+00> : vector<8x128xf32>
    %3 = tpu.matmul %1, %2, %cst {dimension_numbers = #tpu.dot_dimension_numbers<[1], [0], [0], [1], [0, 0, 1, 1], [], []>} : vector<8x128xbf16>, vector<128x128xbf16>, vector<8x128xf32> -> vector<8x128xf32>
    %c0_4 = arith.constant 0 : index
    %c0_5 = arith.constant 0 : index
    %4 = vector.load %arg4[%c0_4, %c0_5] : memref<1x128xf32, #tpu.memory_space<vmem>>, vector<1x128xf32>
    %5 = vector.broadcast %4 : vector<1x128xf32> to vector<8x128xf32>
    %6 = arith.addf %3, %5 : vector<8x128xf32>
    %cst_6 = arith.constant 0.000000e+00 : f32
    %7 = vector.broadcast %cst_6 : f32 to vector<8x128xf32>
    %8 = arith.maximumf %6, %7 : vector<8x128xf32>
    %9 = arith.truncf %8 : vector<8x128xf32> to vector<8x128xbf16>
    %c0_7 = arith.constant 0 : index
    %c0_8 = arith.constant 0 : index
    %10 = vector.load %arg5[%c0_7, %c0_8] : memref<128x128xbf16, #tpu.memory_space<vmem>>, vector<128x128xbf16>
    %cst_9 = arith.constant dense<0.000000e+00> : vector<8x128xf32>
    %11 = tpu.matmul %9, %10, %cst_9 {dimension_numbers = #tpu.dot_dimension_numbers<[1], [0], [0], [1], [0, 0, 1, 1], [], []>} : vector<8x128xbf16>, vector<128x128xbf16>, vector<8x128xf32> -> vector<8x128xf32>
    %c0_10 = arith.constant 0 : index
    %c0_11 = arith.constant 0 : index
    %12 = vector.load %arg6[%c0_10, %c0_11] : memref<1x128xf32, #tpu.memory_space<vmem>>, vector<1x128xf32>
    %13 = vector.broadcast %12 : vector<1x128xf32> to vector<8x128xf32>
    %14 = arith.addf %11, %13 : vector<8x128xf32>
    %cst_12 = arith.constant 0.000000e+00 : f32
    %15 = vector.broadcast %cst_12 : f32 to vector<8x128xf32>
    %16 = arith.maximumf %14, %15 : vector<8x128xf32>
    %c0_13 = arith.constant 0 : index
    %c0_14 = arith.constant 0 : index
    %17 = vector.load %arg7[%c0_13, %c0_14] : memref<8x128xf32, #tpu.memory_space<vmem>>, vector<8x128xf32>
    %18 = arith.addf %16, %17 : vector<8x128xf32>
    %c0_15 = arith.constant 0 : index
    %c0_16 = arith.constant 0 : index
    %c0_17 = arith.constant 0 : index
    %19 = vector.load %arg8[%c0_15, %c0_16, %c0_17] : memref<1x8x128xf32, #tpu.memory_space<vmem>>, vector<1x8x128xf32>
    %20 = vector.shape_cast %19 : vector<1x8x128xf32> to vector<8x128xf32>
    %21 = vector.shape_cast %18 : vector<8x128xf32> to vector<1x8x128xf32>
    tpu.vector_store %arg8[%c0_15, %c0_16, %c0_17], %21 {strides = array<i32>} : memref<1x8x128xf32, #tpu.memory_space<vmem>>, vector<1x8x128xf32>,
    return
  }
  func.func @transform_0(%arg0: i32, %arg1: i32) -> (i32, i32, i32) {
    %c0_i32 = arith.constant 0 : i32
    %c0_i32_0 = arith.constant 0 : i32
    return %arg0, %arg1, %c0_i32 : i32, i32, i32
  }
  func.func @transform_1(%arg0: i32, %arg1: i32) -> (i32, i32) {
    %c0_i32 = arith.constant 0 : i32
    %c0_i32_0 = arith.constant 0 : i32
    %c0_i32_1 = arith.constant 0 : i32
    return %c0_i32, %c0_i32_0 : i32, i32
  }
  func.func @transform_2(%arg0: i32, %arg1: i32) -> (i32, i32) {
    %c0_i32 = arith.constant 0 : i32
    %c0_i32_0 = arith.constant 0 : i32
    %c0_i32_1 = arith.constant 0 : i32
    return %c0_i32, %c0_i32_0 : i32, i32
  }
  func.func @transform_3(%arg0: i32, %arg1: i32) -> (i32, i32) {
    %c0_i32 = arith.constant 0 : i32
    %c0_i32_0 = arith.constant 0 : i32
    %c0_i32_1 = arith.constant 0 : i32
    return %c0_i32, %c0_i32_0 : i32, i32
  }
  func.func @transform_4(%arg0: i32, %arg1: i32) -> (i32, i32) {
    %c0_i32 = arith.constant 0 : i32
    %c0_i32_0 = arith.constant 0 : i32
    %c0_i32_1 = arith.constant 0 : i32
    return %c0_i32, %c0_i32_0 : i32, i32
  }
  func.func @transform_5(%arg0: i32, %arg1: i32) -> (i32, i32) {
    %c0_i32 = arith.constant 0 : i32
    %c0_i32_0 = arith.constant 0 : i32
    return %arg1, %c0_i32 : i32, i32
  }
  func.func @transform_6(%arg0: i32, %arg1: i32) -> (i32, i32, i32) {
    %c0_i32 = arith.constant 0 : i32
    %c0_i32_0 = arith.constant 0 : i32
    return %arg0, %arg1, %c0_i32 : i32, i32, i32
  }
}

module attributes {stable_mosaic.version = 11 : i64} {
  func.func @_feat_out_kernel(%arg0: i32, %arg1: memref<16x128xbf16, #tpu.memory_space<vmem>>, %arg2: memref<128x128xbf16, #tpu.memory_space<vmem>>, %arg3: memref<16x128xf32, #tpu.memory_space<vmem>>) attributes {dimension_semantics = [#tpu.dimension_semantics<parallel>], iteration_bounds = array<i64: 1>, scalar_prefetch = 0 : i64, scratch_operands = 0 : i64, tpu.core_type = #tpu.core_type<tc>, window_params = [{transform_indices = @transform_0, window_bounds = array<i64: 16, 128>}, {pipeline_mode = #tpu.pipeline_mode<synchronous>, transform_indices = @transform_1, window_bounds = array<i64: 128, 128>}, {transform_indices = @transform_2, window_bounds = array<i64: 16, 128>}]} {
    %c0 = arith.constant 0 : index
    %c0_0 = arith.constant 0 : index
    %0 = vector.load %arg1[%c0, %c0_0] : memref<16x128xbf16, #tpu.memory_space<vmem>>, vector<16x128xbf16>
    %c0_1 = arith.constant 0 : index
    %c0_2 = arith.constant 0 : index
    %1 = vector.load %arg2[%c0_1, %c0_2] : memref<128x128xbf16, #tpu.memory_space<vmem>>, vector<128x128xbf16>
    %cst = arith.constant dense<0.000000e+00> : vector<16x128xf32>
    %2 = tpu.matmul %0, %1, %cst {dimension_numbers = #tpu.dot_dimension_numbers<[1], [0], [0], [1], [0, 0, 1, 1], [], []>} : vector<16x128xbf16>, vector<128x128xbf16>, vector<16x128xf32> -> vector<16x128xf32>
    %c0_3 = arith.constant 0 : index
    %c0_4 = arith.constant 0 : index
    %3 = vector.load %arg3[%c0_3, %c0_4] : memref<16x128xf32, #tpu.memory_space<vmem>>, vector<16x128xf32>
    tpu.vector_store %arg3[%c0_3, %c0_4], %2 {strides = array<i32>} : memref<16x128xf32, #tpu.memory_space<vmem>>, vector<16x128xf32>,
    return
  }
  func.func @transform_0(%arg0: i32) -> (i32, i32) {
    %c0_i32 = arith.constant 0 : i32
    %c0_i32_0 = arith.constant 0 : i32
    return %arg0, %c0_i32 : i32, i32
  }
  func.func @transform_1(%arg0: i32) -> (i32, i32) {
    %c0_i32 = arith.constant 0 : i32
    %c0_i32_0 = arith.constant 0 : i32
    %c0_i32_1 = arith.constant 0 : i32
    return %c0_i32, %c0_i32_0 : i32, i32
  }
  func.func @transform_2(%arg0: i32) -> (i32, i32) {
    %c0_i32 = arith.constant 0 : i32
    %c0_i32_0 = arith.constant 0 : i32
    return %arg0, %c0_i32 : i32, i32
  }
}

module attributes {stable_mosaic.version = 11 : i64} {
  func.func @_layers_kernel(%arg0: i32, %arg1: i32, %arg2: memref<1x8x128xf32, #tpu.memory_space<vmem>>, %arg3: memref<1x16x128xf32, #tpu.memory_space<vmem>>, %arg4: memref<1x1x128xf32, #tpu.memory_space<vmem>>, %arg5: memref<1x1x128xf32, #tpu.memory_space<vmem>>, %arg6: memref<1x128x384xbf16, #tpu.memory_space<vmem>>, %arg7: memref<1x1x384xf32, #tpu.memory_space<vmem>>, %arg8: memref<1x128x128xbf16, #tpu.memory_space<vmem>>, %arg9: memref<1x1x128xf32, #tpu.memory_space<vmem>>, %arg10: memref<1x1x128xf32, #tpu.memory_space<vmem>>, %arg11: memref<1x1x128xf32, #tpu.memory_space<vmem>>, %arg12: memref<1x128x128xbf16, #tpu.memory_space<vmem>>, %arg13: memref<1x1x128xf32, #tpu.memory_space<vmem>>, %arg14: memref<1x128x256xbf16, #tpu.memory_space<vmem>>, %arg15: memref<1x1x256xf32, #tpu.memory_space<vmem>>, %arg16: memref<1x128x128xbf16, #tpu.memory_space<vmem>>, %arg17: memref<1x1x128xf32, #tpu.memory_space<vmem>>, %arg18: memref<1x1x128xf32, #tpu.memory_space<vmem>>, %arg19: memref<1x1x128xf32, #tpu.memory_space<vmem>>, %arg20: memref<1x640x256xbf16, #tpu.memory_space<vmem>>, %arg21: memref<1x1x256xf32, #tpu.memory_space<vmem>>, %arg22: memref<1x256x128xbf16, #tpu.memory_space<vmem>>, %arg23: memref<1x1x128xf32, #tpu.memory_space<vmem>>, %arg24: memref<1x8x128xbf16, #tpu.memory_space<vmem>>, %arg25: memref<1x1x4x8x8xf32, #tpu.memory_space<vmem>>, %arg26: memref<1x1x4x8x16xf32, #tpu.memory_space<vmem>>, %arg27: memref<8x128xf32, #tpu.memory_space<vmem>>) attributes {dimension_semantics = [#tpu.dimension_semantics<parallel>, #tpu.dimension_semantics<arbitrary>], iteration_bounds = array<i64: 2, 2>, scalar_prefetch = 0 : i64, scratch_operands = 1 : i64, tpu.core_type = #tpu.core_type<tc>, window_params = [{transform_indices = @transform_0, window_bounds = array<i64: 1, 8, 128>}, {transform_indices = @transform_1, window_bounds = array<i64: 1, 16, 128>}, {transform_indices = @transform_2, window_bounds = array<i64: 1, 1, 128>}, {transform_indices = @transform_3, window_bounds = array<i64: 1, 1, 128>}, {transform_indices = @transform_4, window_bounds = array<i64: 1, 128, 384>}, {transform_indices = @transform_5, window_bounds = array<i64: 1, 1, 384>}, {transform_indices = @transform_6, window_bounds = array<i64: 1, 128, 128>}, {transform_indices = @transform_7, window_bounds = array<i64: 1, 1, 128>}, {transform_indices = @transform_8, window_bounds = array<i64: 1, 1, 128>}, {transform_indices = @transform_9, window_bounds = array<i64: 1, 1, 128>}, {transform_indices = @transform_10, window_bounds = array<i64: 1, 128, 128>}, {transform_indices = @transform_11, window_bounds = array<i64: 1, 1, 128>}, {transform_indices = @transform_12, window_bounds = array<i64: 1, 128, 256>}, {transform_indices = @transform_13, window_bounds = array<i64: 1, 1, 256>}, {transform_indices = @transform_14, window_bounds = array<i64: 1, 128, 128>}, {transform_indices = @transform_15, window_bounds = array<i64: 1, 1, 128>}, {transform_indices = @transform_16, window_bounds = array<i64: 1, 1, 128>}, {transform_indices = @transform_17, window_bounds = array<i64: 1, 1, 128>}, {transform_indices = @transform_18, window_bounds = array<i64: 1, 640, 256>}, {transform_indices = @transform_19, window_bounds = array<i64: 1, 1, 256>}, {transform_indices = @transform_20, window_bounds = array<i64: 1, 256, 128>}, {transform_indices = @transform_21, window_bounds = array<i64: 1, 1, 128>}, {transform_indices = @transform_22, window_bounds = array<i64: 1, 8, 128>}, {transform_indices = @transform_23, window_bounds = array<i64: 1, 1, 4, 8, 8>}, {transform_indices = @transform_24, window_bounds = array<i64: 1, 1, 4, 8, 16>}]} {
    %c0_i32 = arith.constant 0 : i32
    %0 = arith.cmpi eq, %arg1, %c0_i32 : i32
    %1 = arith.extui %0 : i1 to i32
    %c0_i32_0 = arith.constant 0 : i32
    %2 = arith.cmpi ne, %1, %c0_i32_0 : i32
    scf.if %2 {
      %c0_133 = arith.constant 0 : index
      %c0_134 = arith.constant 0 : index
      %c0_135 = arith.constant 0 : index
      %273 = vector.load %arg2[%c0_133, %c0_134, %c0_135] : memref<1x8x128xf32, #tpu.memory_space<vmem>>, vector<1x8x128xf32>
      %274 = vector.shape_cast %273 : vector<1x8x128xf32> to vector<8x128xf32>
      %c0_136 = arith.constant 0 : index
      %c0_137 = arith.constant 0 : index
      %275 = vector.load %arg27[%c0_136, %c0_137] : memref<8x128xf32, #tpu.memory_space<vmem>>, vector<8x128xf32>
      tpu.vector_store %arg27[%c0_136, %c0_137], %274 {strides = array<i32>} : memref<8x128xf32, #tpu.memory_space<vmem>>, vector<8x128xf32>,
    } else {
    }
    %c0 = arith.constant 0 : index
    %c0_1 = arith.constant 0 : index
    %3 = vector.load %arg27[%c0, %c0_1] : memref<8x128xf32, #tpu.memory_space<vmem>>, vector<8x128xf32>
    %c0_2 = arith.constant 0 : index
    %c0_3 = arith.constant 0 : index
    %c0_4 = arith.constant 0 : index
    %4 = vector.load %arg3[%c0_2, %c0_3, %c0_4] : memref<1x16x128xf32, #tpu.memory_space<vmem>>, vector<1x16x128xf32>
    %5 = vector.shape_cast %4 : vector<1x16x128xf32> to vector<16x128xf32>
    %cst = arith.constant dense<0.000000e+00> : vector<8xf32>
    %6 = vector.multi_reduction <add>, %3, %cst [1] : vector<8x128xf32> to vector<8xf32>
    %7 = vector.shape_cast %6 : vector<8xf32> to vector<8x1xf32>
    %cst_5 = arith.constant 1.280000e+02 : f32
    %8 = vector.broadcast %cst_5 : f32 to vector<8x1xf32>
    %9 = arith.divf %7, %8 : vector<8x1xf32>
    %10 = vector.broadcast %9 : vector<8x1xf32> to vector<8x128xf32>
    %11 = arith.subf %3, %10 : vector<8x128xf32>
    %12 = arith.mulf %11, %11 : vector<8x128xf32>
    %cst_6 = arith.constant dense<0.000000e+00> : vector<8xf32>
    %13 = vector.multi_reduction <add>, %12, %cst_6 [1] : vector<8x128xf32> to vector<8xf32>
    %14 = vector.shape_cast %13 : vector<8xf32> to vector<8x1xf32>
    %cst_7 = arith.constant 1.280000e+02 : f32
    %15 = vector.broadcast %cst_7 : f32 to vector<8x1xf32>
    %16 = arith.divf %14, %15 : vector<8x1xf32>
    %17 = vector.broadcast %9 : vector<8x1xf32> to vector<8x128xf32>
    %18 = arith.subf %3, %17 : vector<8x128xf32>
    %cst_8 = arith.constant 9.99999974E-6 : f32
    %19 = vector.broadcast %cst_8 : f32 to vector<8x1xf32>
    %20 = arith.addf %16, %19 : vector<8x1xf32>
    %21 = math.rsqrt %20 : vector<8x1xf32>
    %22 = vector.broadcast %21 : vector<8x1xf32> to vector<8x128xf32>
    %23 = arith.mulf %18, %22 : vector<8x128xf32>
    %c0_9 = arith.constant 0 : index
    %c0_10 = arith.constant 0 : index
    %c0_11 = arith.constant 0 : index
    %24 = vector.load %arg4[%c0_9, %c0_10, %c0_11] : memref<1x1x128xf32, #tpu.memory_space<vmem>>, vector<1x1x128xf32>
    %25 = vector.shape_cast %24 : vector<1x1x128xf32> to vector<1x128xf32>
    %26 = vector.broadcast %25 : vector<1x128xf32> to vector<8x128xf32>
    %27 = arith.mulf %23, %26 : vector<8x128xf32>
    %c0_12 = arith.constant 0 : index
    %c0_13 = arith.constant 0 : index
    %c0_14 = arith.constant 0 : index
    %28 = vector.load %arg5[%c0_12, %c0_13, %c0_14] : memref<1x1x128xf32, #tpu.memory_space<vmem>>, vector<1x1x128xf32>
    %29 = vector.shape_cast %28 : vector<1x1x128xf32> to vector<1x128xf32>
    %30 = vector.broadcast %29 : vector<1x128xf32> to vector<8x128xf32>
    %31 = arith.addf %27, %30 : vector<8x128xf32>
    %32 = arith.truncf %31 : vector<8x128xf32> to vector<8x128xbf16>
    %c0_15 = arith.constant 0 : index
    %c0_16 = arith.constant 0 : index
    %c0_17 = arith.constant 0 : index
    %33 = vector.load %arg6[%c0_15, %c0_16, %c0_17] : memref<1x128x384xbf16, #tpu.memory_space<vmem>>, vector<1x128x384xbf16>
    %34 = vector.shape_cast %33 : vector<1x128x384xbf16> to vector<128x384xbf16>
    %cst_18 = arith.constant dense<0.000000e+00> : vector<8x384xf32>
    %35 = tpu.matmul %32, %34, %cst_18 {dimension_numbers = #tpu.dot_dimension_numbers<[1], [0], [0], [1], [0, 0, 1, 1], [], []>} : vector<8x128xbf16>, vector<128x384xbf16>, vector<8x384xf32> -> vector<8x384xf32>
    %c0_19 = arith.constant 0 : index
    %c0_20 = arith.constant 0 : index
    %c0_21 = arith.constant 0 : index
    %36 = vector.load %arg7[%c0_19, %c0_20, %c0_21] : memref<1x1x384xf32, #tpu.memory_space<vmem>>, vector<1x1x384xf32>
    %37 = vector.shape_cast %36 : vector<1x1x384xf32> to vector<1x384xf32>
    %38 = vector.broadcast %37 : vector<1x384xf32> to vector<8x384xf32>
    %39 = arith.addf %35, %38 : vector<8x384xf32>
    %40 = vector.extract_strided_slice %39 {offsets = [0, 0], sizes = [8, 128], strides = [1, 1]} : vector<8x384xf32> to vector<8x128xf32>
    %41 = vector.extract_strided_slice %39 {offsets = [0, 128], sizes = [8, 128], strides = [1, 1]} : vector<8x384xf32> to vector<8x128xf32>
    %42 = vector.extract_strided_slice %39 {offsets = [0, 256], sizes = [8, 128], strides = [1, 1]} : vector<8x384xf32> to vector<8x128xf32>
    %c0_22 = arith.constant 0 : index
    %c0_23 = arith.constant 0 : index
    %c0_24 = arith.constant 0 : index
    %43 = vector.load %arg8[%c0_22, %c0_23, %c0_24] : memref<1x128x128xbf16, #tpu.memory_space<vmem>>, vector<1x128x128xbf16>
    %44 = vector.shape_cast %43 : vector<1x128x128xbf16> to vector<128x128xbf16>
    %c0_25 = arith.constant 0 : index
    %c0_26 = arith.constant 0 : index
    %c0_27 = arith.constant 0 : index
    %45 = vector.load %arg9[%c0_25, %c0_26, %c0_27] : memref<1x1x128xf32, #tpu.memory_space<vmem>>, vector<1x1x128xf32>
    %46 = vector.shape_cast %45 : vector<1x1x128xf32> to vector<1x128xf32>
    %47 = vector.shape_cast %40 : vector<8x128xf32> to vector<8x4x32xf32>
    %48 = tpu.transpose %47, [1, 0, 2] : vector<8x4x32xf32> -> vector<4x8x32xf32>
    %49 = arith.truncf %48 : vector<4x8x32xf32> to vector<4x8x32xbf16>
    %50 = vector.shape_cast %41 : vector<8x128xf32> to vector<8x4x32xf32>
    %51 = tpu.transpose %50, [1, 0, 2] : vector<8x4x32xf32> -> vector<4x8x32xf32>
    %52 = arith.truncf %51 : vector<4x8x32xf32> to vector<4x8x32xbf16>
    %53 = vector.shape_cast %42 : vector<8x128xf32> to vector<8x4x32xf32>
    %54 = tpu.transpose %53, [1, 0, 2] : vector<8x4x32xf32> -> vector<4x8x32xf32>
    %55 = arith.truncf %54 : vector<4x8x32xf32> to vector<4x8x32xbf16>
    "tpu.trace_start"() <{level = 10 : i32, message = "htd,hsd->hts"}> : () -> ()
    %cst_28 = arith.constant dense<0.000000e+00> : vector<4x8x8xf32>
    %56 = tpu.matmul %49, %52, %cst_28 {dimension_numbers = #tpu.dot_dimension_numbers<[2], [2], [1], [1], [0, 0, 0, 1, 1, 1], [0], [0]>} : vector<4x8x32xbf16>, vector<4x8x32xbf16>, vector<4x8x8xf32> -> vector<4x8x8xf32>
    "tpu.trace_stop"() : () -> ()
    %cst_29 = arith.constant 0.176776692 : f32
    %57 = vector.broadcast %cst_29 : f32 to vector<4x8x8xf32>
    %58 = arith.mulf %56, %57 : vector<4x8x8xf32>
    %cst_30 = arith.constant dense<0xFF800000> : vector<4x8xf32>
    %59 = vector.multi_reduction <maximumf>, %58, %cst_30 [2] : vector<4x8x8xf32> to vector<4x8xf32>
    %60 = vector.shape_cast %59 : vector<4x8xf32> to vector<4x8x1xf32>
    %61 = vector.broadcast %60 : vector<4x8x1xf32> to vector<4x8x8xf32>
    %62 = arith.subf %58, %61 : vector<4x8x8xf32>
    %63 = math.exp %62 : vector<4x8x8xf32>
    %cst_31 = arith.constant dense<0.000000e+00> : vector<4x8xf32>
    %64 = vector.multi_reduction <add>, %63, %cst_31 [2] : vector<4x8x8xf32> to vector<4x8xf32>
    %65 = vector.shape_cast %64 : vector<4x8xf32> to vector<4x8x1xf32>
    %66 = tpu.reciprocal %65 {approx = true} : vector<4x8x1xf32> -> vector<4x8x1xf32>
    %67 = vector.broadcast %66 : vector<4x8x1xf32> to vector<4x8x8xf32>
    %68 = arith.mulf %63, %67 : vector<4x8x8xf32>
    %c0_32 = arith.constant 0 : index
    %c0_33 = arith.constant 0 : index
    %c0_34 = arith.constant 0 : index
    %c0_35 = arith.constant 0 : index
    %c0_36 = arith.constant 0 : index
    %69 = vector.load %arg25[%c0_32, %c0_33, %c0_34, %c0_35, %c0_36] : memref<1x1x4x8x8xf32, #tpu.memory_space<vmem>>, vector<1x1x4x8x8xf32>
    %70 = vector.shape_cast %69 : vector<1x1x4x8x8xf32> to vector<4x8x8xf32>
    %71 = vector.shape_cast %68 : vector<4x8x8xf32> to vector<1x1x4x8x8xf32>
    tpu.vector_store %arg25[%c0_32, %c0_33, %c0_34, %c0_35, %c0_36], %71 {strides = array<i32>} : memref<1x1x4x8x8xf32, #tpu.memory_space<vmem>>, vector<1x1x4x8x8xf32>,
    %72 = arith.truncf %68 : vector<4x8x8xf32> to vector<4x8x8xbf16>
    "tpu.trace_start"() <{level = 10 : i32, message = "hts,hsd->htd"}> : () -> ()
    %cst_37 = arith.constant dense<0.000000e+00> : vector<4x8x32xf32>
    %73 = tpu.matmul %72, %55, %cst_37 {dimension_numbers = #tpu.dot_dimension_numbers<[2], [1], [1], [2], [0, 0, 0, 1, 1, 2], [0], [0]>} : vector<4x8x8xbf16>, vector<4x8x32xbf16>, vector<4x8x32xf32> -> vector<4x8x32xf32>
    "tpu.trace_stop"() : () -> ()
    %74 = tpu.transpose %73, [1, 0, 2] : vector<4x8x32xf32> -> vector<8x4x32xf32>
    %75 = vector.shape_cast %74 : vector<8x4x32xf32> to vector<8x128xf32>
    %76 = arith.truncf %75 : vector<8x128xf32> to vector<8x128xbf16>
    %cst_38 = arith.constant dense<0.000000e+00> : vector<8x128xf32>
    %77 = tpu.matmul %76, %44, %cst_38 {dimension_numbers = #tpu.dot_dimension_numbers<[1], [0], [0], [1], [0, 0, 1, 1], [], []>} : vector<8x128xbf16>, vector<128x128xbf16>, vector<8x128xf32> -> vector<8x128xf32>
    %78 = vector.broadcast %46 : vector<1x128xf32> to vector<8x128xf32>
    %79 = arith.addf %77, %78 : vector<8x128xf32>
    %80 = arith.addf %3, %79 : vector<8x128xf32>
    %cst_39 = arith.constant dense<0.000000e+00> : vector<8xf32>
    %81 = vector.multi_reduction <add>, %80, %cst_39 [1] : vector<8x128xf32> to vector<8xf32>
    %82 = vector.shape_cast %81 : vector<8xf32> to vector<8x1xf32>
    %cst_40 = arith.constant 1.280000e+02 : f32
    %83 = vector.broadcast %cst_40 : f32 to vector<8x1xf32>
    %84 = arith.divf %82, %83 : vector<8x1xf32>
    %85 = vector.broadcast %84 : vector<8x1xf32> to vector<8x128xf32>
    %86 = arith.subf %80, %85 : vector<8x128xf32>
    %87 = arith.mulf %86, %86 : vector<8x128xf32>
    %cst_41 = arith.constant dense<0.000000e+00> : vector<8xf32>
    %88 = vector.multi_reduction <add>, %87, %cst_41 [1] : vector<8x128xf32> to vector<8xf32>
    %89 = vector.shape_cast %88 : vector<8xf32> to vector<8x1xf32>
    %cst_42 = arith.constant 1.280000e+02 : f32
    %90 = vector.broadcast %cst_42 : f32 to vector<8x1xf32>
    %91 = arith.divf %89, %90 : vector<8x1xf32>
    %92 = vector.broadcast %84 : vector<8x1xf32> to vector<8x128xf32>
    %93 = arith.subf %80, %92 : vector<8x128xf32>
    %cst_43 = arith.constant 9.99999974E-6 : f32
    %94 = vector.broadcast %cst_43 : f32 to vector<8x1xf32>
    %95 = arith.addf %91, %94 : vector<8x1xf32>
    %96 = math.rsqrt %95 : vector<8x1xf32>
    %97 = vector.broadcast %96 : vector<8x1xf32> to vector<8x128xf32>
    %98 = arith.mulf %93, %97 : vector<8x128xf32>
    %c0_44 = arith.constant 0 : index
    %c0_45 = arith.constant 0 : index
    %c0_46 = arith.constant 0 : index
    %99 = vector.load %arg10[%c0_44, %c0_45, %c0_46] : memref<1x1x128xf32, #tpu.memory_space<vmem>>, vector<1x1x128xf32>
    %100 = vector.shape_cast %99 : vector<1x1x128xf32> to vector<1x128xf32>
    %101 = vector.broadcast %100 : vector<1x128xf32> to vector<8x128xf32>
    %102 = arith.mulf %98, %101 : vector<8x128xf32>
    %c0_47 = arith.constant 0 : index
    %c0_48 = arith.constant 0 : index
    %c0_49 = arith.constant 0 : index
    %103 = vector.load %arg11[%c0_47, %c0_48, %c0_49] : memref<1x1x128xf32, #tpu.memory_space<vmem>>, vector<1x1x128xf32>
    %104 = vector.shape_cast %103 : vector<1x1x128xf32> to vector<1x128xf32>
    %105 = vector.broadcast %104 : vector<1x128xf32> to vector<8x128xf32>
    %106 = arith.addf %102, %105 : vector<8x128xf32>
    %107 = arith.truncf %106 : vector<8x128xf32> to vector<8x128xbf16>
    %c0_50 = arith.constant 0 : index
    %c0_51 = arith.constant 0 : index
    %c0_52 = arith.constant 0 : index
    %108 = vector.load %arg12[%c0_50, %c0_51, %c0_52] : memref<1x128x128xbf16, #tpu.memory_space<vmem>>, vector<1x128x128xbf16>
    %109 = vector.shape_cast %108 : vector<1x128x128xbf16> to vector<128x128xbf16>
    %cst_53 = arith.constant dense<0.000000e+00> : vector<8x128xf32>
    %110 = tpu.matmul %107, %109, %cst_53 {dimension_numbers = #tpu.dot_dimension_numbers<[1], [0], [0], [1], [0, 0, 1, 1], [], []>} : vector<8x128xbf16>, vector<128x128xbf16>, vector<8x128xf32> -> vector<8x128xf32>
    %c0_54 = arith.constant 0 : index
    %c0_55 = arith.constant 0 : index
    %c0_56 = arith.constant 0 : index
    %111 = vector.load %arg13[%c0_54, %c0_55, %c0_56] : memref<1x1x128xf32, #tpu.memory_space<vmem>>, vector<1x1x128xf32>
    %112 = vector.shape_cast %111 : vector<1x1x128xf32> to vector<1x128xf32>
    %113 = vector.broadcast %112 : vector<1x128xf32> to vector<8x128xf32>
    %114 = arith.addf %110, %113 : vector<8x128xf32>
    %115 = arith.truncf %5 : vector<16x128xf32> to vector<16x128xbf16>
    %c0_57 = arith.constant 0 : index
    %c0_58 = arith.constant 0 : index
    %c0_59 = arith.constant 0 : index
    %116 = vector.load %arg14[%c0_57, %c0_58, %c0_59] : memref<1x128x256xbf16, #tpu.memory_space<vmem>>, vector<1x128x256xbf16>
    %117 = vector.shape_cast %116 : vector<1x128x256xbf16> to vector<128x256xbf16>
    %cst_60 = arith.constant dense<0.000000e+00> : vector<16x256xf32>
    %118 = tpu.matmul %115, %117, %cst_60 {dimension_numbers = #tpu.dot_dimension_numbers<[1], [0], [0], [1], [0, 0, 1, 1], [], []>} : vector<16x128xbf16>, vector<128x256xbf16>, vector<16x256xf32> -> vector<16x256xf32>
    %c0_61 = arith.constant 0 : index
    %c0_62 = arith.constant 0 : index
    %c0_63 = arith.constant 0 : index
    %119 = vector.load %arg15[%c0_61, %c0_62, %c0_63] : memref<1x1x256xf32, #tpu.memory_space<vmem>>, vector<1x1x256xf32>
    %120 = vector.shape_cast %119 : vector<1x1x256xf32> to vector<1x256xf32>
    %121 = vector.broadcast %120 : vector<1x256xf32> to vector<16x256xf32>
    %122 = arith.addf %118, %121 : vector<16x256xf32>
    %123 = vector.extract_strided_slice %122 {offsets = [0, 0], sizes = [16, 128], strides = [1, 1]} : vector<16x256xf32> to vector<16x128xf32>
    %124 = vector.extract_strided_slice %122 {offsets = [0, 128], sizes = [16, 128], strides = [1, 1]} : vector<16x256xf32> to vector<16x128xf32>
    %c0_64 = arith.constant 0 : index
    %c0_65 = arith.constant 0 : index
    %c0_66 = arith.constant 0 : index
    %125 = vector.load %arg16[%c0_64, %c0_65, %c0_66] : memref<1x128x128xbf16, #tpu.memory_space<vmem>>, vector<1x128x128xbf16>
    %126 = vector.shape_cast %125 : vector<1x128x128xbf16> to vector<128x128xbf16>
    %c0_67 = arith.constant 0 : index
    %c0_68 = arith.constant 0 : index
    %c0_69 = arith.constant 0 : index
    %127 = vector.load %arg17[%c0_67, %c0_68, %c0_69] : memref<1x1x128xf32, #tpu.memory_space<vmem>>, vector<1x1x128xf32>
    %128 = vector.shape_cast %127 : vector<1x1x128xf32> to vector<1x128xf32>
    %129 = vector.shape_cast %114 : vector<8x128xf32> to vector<8x4x32xf32>
    %130 = tpu.transpose %129, [1, 0, 2] : vector<8x4x32xf32> -> vector<4x8x32xf32>
    %131 = arith.truncf %130 : vector<4x8x32xf32> to vector<4x8x32xbf16>
    %132 = vector.shape_cast %123 : vector<16x128xf32> to vector<16x4x32xf32>
    %133 = tpu.transpose %132, [1, 0, 2] : vector<16x4x32xf32> -> vector<4x16x32xf32>
    %134 = arith.truncf %133 : vector<4x16x32xf32> to vector<4x16x32xbf16>
    %135 = vector.shape_cast %124 : vector<16x128xf32> to vector<16x4x32xf32>
    %136 = tpu.transpose %135, [1, 0, 2] : vector<16x4x32xf32> -> vector<4x16x32xf32>
    %137 = arith.truncf %136 : vector<4x16x32xf32> to vector<4x16x32xbf16>
    "tpu.trace_start"() <{level = 10 : i32, message = "htd,hsd->hts"}> : () -> ()
    %cst_70 = arith.constant dense<0.000000e+00> : vector<4x8x16xf32>
    %138 = tpu.matmul %131, %134, %cst_70 {dimension_numbers = #tpu.dot_dimension_numbers<[2], [2], [1], [1], [0, 0, 0, 1, 1, 1], [0], [0]>} : vector<4x8x32xbf16>, vector<4x16x32xbf16>, vector<4x8x16xf32> -> vector<4x8x16xf32>
    "tpu.trace_stop"() : () -> ()
    %cst_71 = arith.constant 0.176776692 : f32
    %139 = vector.broadcast %cst_71 : f32 to vector<4x8x16xf32>
    %140 = arith.mulf %138, %139 : vector<4x8x16xf32>
    %cst_72 = arith.constant dense<0xFF800000> : vector<4x8xf32>
    %141 = vector.multi_reduction <maximumf>, %140, %cst_72 [2] : vector<4x8x16xf32> to vector<4x8xf32>
    %142 = vector.shape_cast %141 : vector<4x8xf32> to vector<4x8x1xf32>
    %143 = vector.broadcast %142 : vector<4x8x1xf32> to vector<4x8x16xf32>
    %144 = arith.subf %140, %143 : vector<4x8x16xf32>
    %145 = math.exp %144 : vector<4x8x16xf32>
    %cst_73 = arith.constant dense<0.000000e+00> : vector<4x8xf32>
    %146 = vector.multi_reduction <add>, %145, %cst_73 [2] : vector<4x8x16xf32> to vector<4x8xf32>
    %147 = vector.shape_cast %146 : vector<4x8xf32> to vector<4x8x1xf32>
    %148 = tpu.reciprocal %147 {approx = true} : vector<4x8x1xf32> -> vector<4x8x1xf32>
    %149 = vector.broadcast %148 : vector<4x8x1xf32> to vector<4x8x16xf32>
    %150 = arith.mulf %145, %149 : vector<4x8x16xf32>
    %c0_74 = arith.constant 0 : index
    %c0_75 = arith.constant 0 : index
    %c0_76 = arith.constant 0 : index
    %c0_77 = arith.constant 0 : index
    %c0_78 = arith.constant 0 : index
    %151 = vector.load %arg26[%c0_74, %c0_75, %c0_76, %c0_77, %c0_78] : memref<1x1x4x8x16xf32, #tpu.memory_space<vmem>>, vector<1x1x4x8x16xf32>
    %152 = vector.shape_cast %151 : vector<1x1x4x8x16xf32> to vector<4x8x16xf32>
    %153 = vector.shape_cast %150 : vector<4x8x16xf32> to vector<1x1x4x8x16xf32>
    tpu.vector_store %arg26[%c0_74, %c0_75, %c0_76, %c0_77, %c0_78], %153 {strides = array<i32>} : memref<1x1x4x8x16xf32, #tpu.memory_space<vmem>>, vector<1x1x4x8x16xf32>,
    %154 = arith.truncf %150 : vector<4x8x16xf32> to vector<4x8x16xbf16>
    "tpu.trace_start"() <{level = 10 : i32, message = "hts,hsd->htd"}> : () -> ()
    %cst_79 = arith.constant dense<0.000000e+00> : vector<4x8x32xf32>
    %155 = tpu.matmul %154, %137, %cst_79 {dimension_numbers = #tpu.dot_dimension_numbers<[2], [1], [1], [2], [0, 0, 0, 1, 1, 2], [0], [0]>} : vector<4x8x16xbf16>, vector<4x16x32xbf16>, vector<4x8x32xf32> -> vector<4x8x32xf32>
    "tpu.trace_stop"() : () -> ()
    %156 = tpu.transpose %155, [1, 0, 2] : vector<4x8x32xf32> -> vector<8x4x32xf32>
    %157 = vector.shape_cast %156 : vector<8x4x32xf32> to vector<8x128xf32>
    %158 = arith.truncf %157 : vector<8x128xf32> to vector<8x128xbf16>
    %cst_80 = arith.constant dense<0.000000e+00> : vector<8x128xf32>
    %159 = tpu.matmul %158, %126, %cst_80 {dimension_numbers = #tpu.dot_dimension_numbers<[1], [0], [0], [1], [0, 0, 1, 1], [], []>} : vector<8x128xbf16>, vector<128x128xbf16>, vector<8x128xf32> -> vector<8x128xf32>
    %160 = vector.broadcast %128 : vector<1x128xf32> to vector<8x128xf32>
    %161 = arith.addf %159, %160 : vector<8x128xf32>
    %162 = arith.addf %80, %161 : vector<8x128xf32>
    %cst_81 = arith.constant dense<0.000000e+00> : vector<8xf32>
    %163 = vector.multi_reduction <add>, %162, %cst_81 [1] : vector<8x128xf32> to vector<8xf32>
    %164 = vector.shape_cast %163 : vector<8xf32> to vector<8x1xf32>
    %cst_82 = arith.constant 1.280000e+02 : f32
    %165 = vector.broadcast %cst_82 : f32 to vector<8x1xf32>
    %166 = arith.divf %164, %165 : vector<8x1xf32>
    %167 = vector.broadcast %166 : vector<8x1xf32> to vector<8x128xf32>
    %168 = arith.subf %162, %167 : vector<8x128xf32>
    %169 = arith.mulf %168, %168 : vector<8x128xf32>
    %cst_83 = arith.constant dense<0.000000e+00> : vector<8xf32>
    %170 = vector.multi_reduction <add>, %169, %cst_83 [1] : vector<8x128xf32> to vector<8xf32>
    %171 = vector.shape_cast %170 : vector<8xf32> to vector<8x1xf32>
    %cst_84 = arith.constant 1.280000e+02 : f32
    %172 = vector.broadcast %cst_84 : f32 to vector<8x1xf32>
    %173 = arith.divf %171, %172 : vector<8x1xf32>
    %174 = vector.broadcast %166 : vector<8x1xf32> to vector<8x128xf32>
    %175 = arith.subf %162, %174 : vector<8x128xf32>
    %cst_85 = arith.constant 9.99999974E-6 : f32
    %176 = vector.broadcast %cst_85 : f32 to vector<8x1xf32>
    %177 = arith.addf %173, %176 : vector<8x1xf32>
    %178 = math.rsqrt %177 : vector<8x1xf32>
    %179 = vector.broadcast %178 : vector<8x1xf32> to vector<8x128xf32>
    %180 = arith.mulf %175, %179 : vector<8x128xf32>
    %c0_86 = arith.constant 0 : index
    %c0_87 = arith.constant 0 : index
    %c0_88 = arith.constant 0 : index
    %181 = vector.load %arg18[%c0_86, %c0_87, %c0_88] : memref<1x1x128xf32, #tpu.memory_space<vmem>>, vector<1x1x128xf32>
    %182 = vector.shape_cast %181 : vector<1x1x128xf32> to vector<1x128xf32>
    %183 = vector.broadcast %182 : vector<1x128xf32> to vector<8x128xf32>
    %184 = arith.mulf %180, %183 : vector<8x128xf32>
    %c0_89 = arith.constant 0 : index
    %c0_90 = arith.constant 0 : index
    %c0_91 = arith.constant 0 : index
    %185 = vector.load %arg19[%c0_89, %c0_90, %c0_91] : memref<1x1x128xf32, #tpu.memory_space<vmem>>, vector<1x1x128xf32>
    %186 = vector.shape_cast %185 : vector<1x1x128xf32> to vector<1x128xf32>
    %187 = vector.broadcast %186 : vector<1x128xf32> to vector<8x128xf32>
    %188 = arith.addf %184, %187 : vector<8x128xf32>
    %c0_92 = arith.constant 0 : index
    %c0_93 = arith.constant 0 : index
    %c0_94 = arith.constant 0 : index
    %189 = vector.load %arg20[%c0_92, %c0_93, %c0_94] : memref<1x640x256xbf16, #tpu.memory_space<vmem>>, vector<1x640x256xbf16>
    %190 = vector.shape_cast %189 : vector<1x640x256xbf16> to vector<640x256xbf16>
    %c0_95 = arith.constant 0 : index
    %c0_96 = arith.constant 0 : index
    %c0_97 = arith.constant 0 : index
    %191 = vector.load %arg21[%c0_95, %c0_96, %c0_97] : memref<1x1x256xf32, #tpu.memory_space<vmem>>, vector<1x1x256xf32>
    %192 = vector.shape_cast %191 : vector<1x1x256xf32> to vector<1x256xf32>
    %193 = tpu.iota {dimensions = array<i32: 0>} : vector<8x128xi32>
    %c2_i32 = arith.constant 2 : i32
    %194 = tpu.dynamic_rotate %188 by %c2_i32 dim 0 : vector<8x128xf32>, i32 -> vector<8x128xf32>
    %c-2_i32 = arith.constant -2 : i32
    %195 = vector.broadcast %c-2_i32 : i32 to vector<8x128xi32>
    %196 = arith.addi %193, %195 : vector<8x128xi32>
    %c0_i32_98 = arith.constant 0 : i32
    %197 = vector.broadcast %c0_i32_98 : i32 to vector<8x128xi32>
    %198 = arith.cmpi sge, %196, %197 : vector<8x128xi32>
    %c-2_i32_99 = arith.constant -2 : i32
    %199 = vector.broadcast %c-2_i32_99 : i32 to vector<8x128xi32>
    %200 = arith.addi %193, %199 : vector<8x128xi32>
    %c8_i32 = arith.constant 8 : i32
    %201 = vector.broadcast %c8_i32 : i32 to vector<8x128xi32>
    %202 = arith.cmpi slt, %200, %201 : vector<8x128xi32>
    %203 = arith.andi %198, %202 : vector<8x128xi1>
    %cst_100 = arith.constant 0.000000e+00 : f32
    %204 = vector.broadcast %cst_100 : f32 to vector<8x128xf32>
    %205 = arith.select %203, %194, %204 : vector<8x128xi1>, vector<8x128xf32>
    %c1_i32 = arith.constant 1 : i32
    %206 = tpu.dynamic_rotate %188 by %c1_i32 dim 0 : vector<8x128xf32>, i32 -> vector<8x128xf32>
    %c-1_i32 = arith.constant -1 : i32
    %207 = vector.broadcast %c-1_i32 : i32 to vector<8x128xi32>
    %208 = arith.addi %193, %207 : vector<8x128xi32>
    %c0_i32_101 = arith.constant 0 : i32
    %209 = vector.broadcast %c0_i32_101 : i32 to vector<8x128xi32>
    %210 = arith.cmpi sge, %208, %209 : vector<8x128xi32>
    %c-1_i32_102 = arith.constant -1 : i32
    %211 = vector.broadcast %c-1_i32_102 : i32 to vector<8x128xi32>
    %212 = arith.addi %193, %211 : vector<8x128xi32>
    %c8_i32_103 = arith.constant 8 : i32
    %213 = vector.broadcast %c8_i32_103 : i32 to vector<8x128xi32>
    %214 = arith.cmpi slt, %212, %213 : vector<8x128xi32>
    %215 = arith.andi %210, %214 : vector<8x128xi1>
    %cst_104 = arith.constant 0.000000e+00 : f32
    %216 = vector.broadcast %cst_104 : f32 to vector<8x128xf32>
    %217 = arith.select %215, %206, %216 : vector<8x128xi1>, vector<8x128xf32>
    %c0_i32_105 = arith.constant 0 : i32
    %218 = vector.broadcast %c0_i32_105 : i32 to vector<8x128xi32>
    %219 = arith.addi %193, %218 : vector<8x128xi32>
    %c0_i32_106 = arith.constant 0 : i32
    %220 = vector.broadcast %c0_i32_106 : i32 to vector<8x128xi32>
    %221 = arith.cmpi sge, %219, %220 : vector<8x128xi32>
    %c0_i32_107 = arith.constant 0 : i32
    %222 = vector.broadcast %c0_i32_107 : i32 to vector<8x128xi32>
    %223 = arith.addi %193, %222 : vector<8x128xi32>
    %c8_i32_108 = arith.constant 8 : i32
    %224 = vector.broadcast %c8_i32_108 : i32 to vector<8x128xi32>
    %225 = arith.cmpi slt, %223, %224 : vector<8x128xi32>
    %226 = arith.andi %221, %225 : vector<8x128xi1>
    %cst_109 = arith.constant 0.000000e+00 : f32
    %227 = vector.broadcast %cst_109 : f32 to vector<8x128xf32>
    %228 = arith.select %226, %188, %227 : vector<8x128xi1>, vector<8x128xf32>
    %c7_i32 = arith.constant 7 : i32
    %229 = tpu.dynamic_rotate %188 by %c7_i32 dim 0 : vector<8x128xf32>, i32 -> vector<8x128xf32>
    %c1_i32_110 = arith.constant 1 : i32
    %230 = vector.broadcast %c1_i32_110 : i32 to vector<8x128xi32>
    %231 = arith.addi %193, %230 : vector<8x128xi32>
    %c0_i32_111 = arith.constant 0 : i32
    %232 = vector.broadcast %c0_i32_111 : i32 to vector<8x128xi32>
    %233 = arith.cmpi sge, %231, %232 : vector<8x128xi32>
    %c1_i32_112 = arith.constant 1 : i32
    %234 = vector.broadcast %c1_i32_112 : i32 to vector<8x128xi32>
    %235 = arith.addi %193, %234 : vector<8x128xi32>
    %c8_i32_113 = arith.constant 8 : i32
    %236 = vector.broadcast %c8_i32_113 : i32 to vector<8x128xi32>
    %237 = arith.cmpi slt, %235, %236 : vector<8x128xi32>
    %238 = arith.andi %233, %237 : vector<8x128xi1>
    %cst_114 = arith.constant 0.000000e+00 : f32
    %239 = vector.broadcast %cst_114 : f32 to vector<8x128xf32>
    %240 = arith.select %238, %229, %239 : vector<8x128xi1>, vector<8x128xf32>
    %c6_i32 = arith.constant 6 : i32
    %241 = tpu.dynamic_rotate %188 by %c6_i32 dim 0 : vector<8x128xf32>, i32 -> vector<8x128xf32>
    %c2_i32_115 = arith.constant 2 : i32
    %242 = vector.broadcast %c2_i32_115 : i32 to vector<8x128xi32>
    %243 = arith.addi %193, %242 : vector<8x128xi32>
    %c0_i32_116 = arith.constant 0 : i32
    %244 = vector.broadcast %c0_i32_116 : i32 to vector<8x128xi32>
    %245 = arith.cmpi sge, %243, %244 : vector<8x128xi32>
    %c2_i32_117 = arith.constant 2 : i32
    %246 = vector.broadcast %c2_i32_117 : i32 to vector<8x128xi32>
    %247 = arith.addi %193, %246 : vector<8x128xi32>
    %c8_i32_118 = arith.constant 8 : i32
    %248 = vector.broadcast %c8_i32_118 : i32 to vector<8x128xi32>
    %249 = arith.cmpi slt, %247, %248 : vector<8x128xi32>
    %250 = arith.andi %245, %249 : vector<8x128xi1>
    %cst_119 = arith.constant 0.000000e+00 : f32
    %251 = vector.broadcast %cst_119 : f32 to vector<8x128xf32>
    %252 = arith.select %250, %241, %251 : vector<8x128xi1>, vector<8x128xf32>
    %253 = tpu.concatenate %205, %217, %228, %240, %252 in 1 : vector<8x128xf32>, vector<8x128xf32>, vector<8x128xf32>, vector<8x128xf32>, vector<8x128xf32> -> vector<8x640xf32>
    %254 = arith.truncf %253 : vector<8x640xf32> to vector<8x640xbf16>
    %cst_120 = arith.constant dense<0.000000e+00> : vector<8x256xf32>
    %255 = tpu.matmul %254, %190, %cst_120 {dimension_numbers = #tpu.dot_dimension_numbers<[1], [0], [0], [1], [0, 0, 1, 1], [], []>} : vector<8x640xbf16>, vector<640x256xbf16>, vector<8x256xf32> -> vector<8x256xf32>
    %256 = vector.broadcast %192 : vector<1x256xf32> to vector<8x256xf32>
    %257 = arith.addf %255, %256 : vector<8x256xf32>
    %cst_121 = arith.constant 0.000000e+00 : f32
    %258 = vector.broadcast %cst_121 : f32 to vector<8x256xf32>
    %259 = arith.maximumf %257, %258 : vector<8x256xf32>
    %c0_122 = arith.constant 0 : index
    %c0_123 = arith.constant 0 : index
    %c0_124 = arith.constant 0 : index
    %260 = vector.load %arg22[%c0_122, %c0_123, %c0_124] : memref<1x256x128xbf16, #tpu.memory_space<vmem>>, vector<1x256x128xbf16>
    %261 = vector.shape_cast %260 : vector<1x256x128xbf16> to vector<256x128xbf16>
    %c0_125 = arith.constant 0 : index
    %c0_126 = arith.constant 0 : index
    %c0_127 = arith.constant 0 : index
    %262 = vector.load %arg23[%c0_125, %c0_126, %c0_127] : memref<1x1x128xf32, #tpu.memory_space<vmem>>, vector<1x1x128xf32>
    %263 = vector.shape_cast %262 : vector<1x1x128xf32> to vector<1x128xf32>
    %264 = arith.truncf %259 : vector<8x256xf32> to vector<8x256xbf16>
    %cst_128 = arith.constant dense<0.000000e+00> : vector<8x128xf32>
    %265 = tpu.matmul %264, %261, %cst_128 {dimension_numbers = #tpu.dot_dimension_numbers<[1], [0], [0], [1], [0, 0, 1, 1], [], []>} : vector<8x256xbf16>, vector<256x128xbf16>, vector<8x128xf32> -> vector<8x128xf32>
    %266 = vector.broadcast %263 : vector<1x128xf32> to vector<8x128xf32>
    %267 = arith.addf %265, %266 : vector<8x128xf32>
    %268 = arith.addf %162, %267 : vector<8x128xf32>
    %c0_129 = arith.constant 0 : index
    %c0_130 = arith.constant 0 : index
    %269 = vector.load %arg27[%c0_129, %c0_130] : memref<8x128xf32, #tpu.memory_space<vmem>>, vector<8x128xf32>
    tpu.vector_store %arg27[%c0_129, %c0_130], %268 {strides = array<i32>} : memref<8x128xf32, #tpu.memory_space<vmem>>, vector<8x128xf32>,
    %c1_i32_131 = arith.constant 1 : i32
    %270 = arith.cmpi eq, %arg1, %c1_i32_131 : i32
    %271 = arith.extui %270 : i1 to i32
    %c0_i32_132 = arith.constant 0 : i32
    %272 = arith.cmpi ne, %271, %c0_i32_132 : i32
    scf.if %272 {
      %273 = arith.truncf %268 : vector<8x128xf32> to vector<8x128xbf16>
      %c0_133 = arith.constant 0 : index
      %c0_134 = arith.constant 0 : index
      %c0_135 = arith.constant 0 : index
      %274 = vector.load %arg24[%c0_133, %c0_134, %c0_135] : memref<1x8x128xbf16, #tpu.memory_space<vmem>>, vector<1x8x128xbf16>
      %275 = vector.shape_cast %274 : vector<1x8x128xbf16> to vector<8x128xbf16>
      %276 = vector.shape_cast %273 : vector<8x128xbf16> to vector<1x8x128xbf16>
      tpu.vector_store %arg24[%c0_133, %c0_134, %c0_135], %276 {strides = array<i32>} : memref<1x8x128xbf16, #tpu.memory_space<vmem>>, vector<1x8x128xbf16>,
    } else {
    }
    return
  }
  func.func @transform_0(%arg0: i32, %arg1: i32) -> (i32, i32, i32) {
    %c0_i32 = arith.constant 0 : i32
    %c0_i32_0 = arith.constant 0 : i32
    %c0_i32_1 = arith.constant 0 : i32
    return %arg0, %c0_i32, %c0_i32_0 : i32, i32, i32
  }
  func.func @transform_1(%arg0: i32, %arg1: i32) -> (i32, i32, i32) {
    %c0_i32 = arith.constant 0 : i32
    %c0_i32_0 = arith.constant 0 : i32
    %c0_i32_1 = arith.constant 0 : i32
    return %arg0, %c0_i32, %c0_i32_0 : i32, i32, i32
  }
  func.func @transform_2(%arg0: i32, %arg1: i32) -> (i32, i32, i32) {
    %c0_i32 = arith.constant 0 : i32
    %c0_i32_0 = arith.constant 0 : i32
    %c0_i32_1 = arith.constant 0 : i32
    return %arg1, %c0_i32, %c0_i32_0 : i32, i32, i32
  }
  func.func @transform_3(%arg0: i32, %arg1: i32) -> (i32, i32, i32) {
    %c0_i32 = arith.constant 0 : i32
    %c0_i32_0 = arith.constant 0 : i32
    %c0_i32_1 = arith.constant 0 : i32
    return %arg1, %c0_i32, %c0_i32_0 : i32, i32, i32
  }
  func.func @transform_4(%arg0: i32, %arg1: i32) -> (i32, i32, i32) {
    %c0_i32 = arith.constant 0 : i32
    %c0_i32_0 = arith.constant 0 : i32
    %c0_i32_1 = arith.constant 0 : i32
    return %arg1, %c0_i32, %c0_i32_0 : i32, i32, i32
  }
  func.func @transform_5(%arg0: i32, %arg1: i32) -> (i32, i32, i32) {
    %c0_i32 = arith.constant 0 : i32
    %c0_i32_0 = arith.constant 0 : i32
    %c0_i32_1 = arith.constant 0 : i32
    return %arg1, %c0_i32, %c0_i32_0 : i32, i32, i32
  }
  func.func @transform_6(%arg0: i32, %arg1: i32) -> (i32, i32, i32) {
    %c0_i32 = arith.constant 0 : i32
    %c0_i32_0 = arith.constant 0 : i32
    %c0_i32_1 = arith.constant 0 : i32
    return %arg1, %c0_i32, %c0_i32_0 : i32, i32, i32
  }
  func.func @transform_7(%arg0: i32, %arg1: i32) -> (i32, i32, i32) {
    %c0_i32 = arith.constant 0 : i32
    %c0_i32_0 = arith.constant 0 : i32
    %c0_i32_1 = arith.constant 0 : i32
    return %arg1, %c0_i32, %c0_i32_0 : i32, i32, i32
  }
  func.func @transform_8(%arg0: i32, %arg1: i32) -> (i32, i32, i32) {
    %c0_i32 = arith.constant 0 : i32
    %c0_i32_0 = arith.constant 0 : i32
    %c0_i32_1 = arith.constant 0 : i32
    return %arg1, %c0_i32, %c0_i32_0 : i32, i32, i32
  }
  func.func @transform_9(%arg0: i32, %arg1: i32) -> (i32, i32, i32) {
    %c0_i32 = arith.constant 0 : i32
    %c0_i32_0 = arith.constant 0 : i32
    %c0_i32_1 = arith.constant 0 : i32
    return %arg1, %c0_i32, %c0_i32_0 : i32, i32, i32
  }
  func.func @transform_10(%arg0: i32, %arg1: i32) -> (i32, i32, i32) {
    %c0_i32 = arith.constant 0 : i32
    %c0_i32_0 = arith.constant 0 : i32
    %c0_i32_1 = arith.constant 0 : i32
    return %arg1, %c0_i32, %c0_i32_0 : i32, i32, i32
  }
  func.func @transform_11(%arg0: i32, %arg1: i32) -> (i32, i32, i32) {
    %c0_i32 = arith.constant 0 : i32
    %c0_i32_0 = arith.constant 0 : i32
    %c0_i32_1 = arith.constant 0 : i32
    return %arg1, %c0_i32, %c0_i32_0 : i32, i32, i32
  }
  func.func @transform_12(%arg0: i32, %arg1: i32) -> (i32, i32, i32) {
    %c0_i32 = arith.constant 0 : i32
    %c0_i32_0 = arith.constant 0 : i32
    %c0_i32_1 = arith.constant 0 : i32
    return %arg1, %c0_i32, %c0_i32_0 : i32, i32, i32
  }
  func.func @transform_13(%arg0: i32, %arg1: i32) -> (i32, i32, i32) {
    %c0_i32 = arith.constant 0 : i32
    %c0_i32_0 = arith.constant 0 : i32
    %c0_i32_1 = arith.constant 0 : i32
    return %arg1, %c0_i32, %c0_i32_0 : i32, i32, i32
  }
  func.func @transform_14(%arg0: i32, %arg1: i32) -> (i32, i32, i32) {
    %c0_i32 = arith.constant 0 : i32
    %c0_i32_0 = arith.constant 0 : i32
    %c0_i32_1 = arith.constant 0 : i32
    return %arg1, %c0_i32, %c0_i32_0 : i32, i32, i32
  }
  func.func @transform_15(%arg0: i32, %arg1: i32) -> (i32, i32, i32) {
    %c0_i32 = arith.constant 0 : i32
    %c0_i32_0 = arith.constant 0 : i32
    %c0_i32_1 = arith.constant 0 : i32
    return %arg1, %c0_i32, %c0_i32_0 : i32, i32, i32
  }
  func.func @transform_16(%arg0: i32, %arg1: i32) -> (i32, i32, i32) {
    %c0_i32 = arith.constant 0 : i32
    %c0_i32_0 = arith.constant 0 : i32
    %c0_i32_1 = arith.constant 0 : i32
    return %arg1, %c0_i32, %c0_i32_0 : i32, i32, i32
  }
  func.func @transform_17(%arg0: i32, %arg1: i32) -> (i32, i32, i32) {
    %c0_i32 = arith.constant 0 : i32
    %c0_i32_0 = arith.constant 0 : i32
    %c0_i32_1 = arith.constant 0 : i32
    return %arg1, %c0_i32, %c0_i32_0 : i32, i32, i32
  }
  func.func @transform_18(%arg0: i32, %arg1: i32) -> (i32, i32, i32) {
    %c0_i32 = arith.constant 0 : i32
    %c0_i32_0 = arith.constant 0 : i32
    %c0_i32_1 = arith.constant 0 : i32
    return %arg1, %c0_i32, %c0_i32_0 : i32, i32, i32
  }
  func.func @transform_19(%arg0: i32, %arg1: i32) -> (i32, i32, i32) {
    %c0_i32 = arith.constant 0 : i32
    %c0_i32_0 = arith.constant 0 : i32
    %c0_i32_1 = arith.constant 0 : i32
    return %arg1, %c0_i32, %c0_i32_0 : i32, i32, i32
  }
  func.func @transform_20(%arg0: i32, %arg1: i32) -> (i32, i32, i32) {
    %c0_i32 = arith.constant 0 : i32
    %c0_i32_0 = arith.constant 0 : i32
    %c0_i32_1 = arith.constant 0 : i32
    return %arg1, %c0_i32, %c0_i32_0 : i32, i32, i32
  }
  func.func @transform_21(%arg0: i32, %arg1: i32) -> (i32, i32, i32) {
    %c0_i32 = arith.constant 0 : i32
    %c0_i32_0 = arith.constant 0 : i32
    %c0_i32_1 = arith.constant 0 : i32
    return %arg1, %c0_i32, %c0_i32_0 : i32, i32, i32
  }
  func.func @transform_22(%arg0: i32, %arg1: i32) -> (i32, i32, i32) {
    %c0_i32 = arith.constant 0 : i32
    %c0_i32_0 = arith.constant 0 : i32
    %c0_i32_1 = arith.constant 0 : i32
    return %arg0, %c0_i32, %c0_i32_0 : i32, i32, i32
  }
  func.func @transform_23(%arg0: i32, %arg1: i32) -> (i32, i32, i32, i32, i32) {
    %c0_i32 = arith.constant 0 : i32
    %c0_i32_0 = arith.constant 0 : i32
    %c0_i32_1 = arith.constant 0 : i32
    %c0_i32_2 = arith.constant 0 : i32
    return %arg1, %arg0, %c0_i32, %c0_i32_0, %c0_i32_1 : i32, i32, i32, i32, i32
  }
  func.func @transform_24(%arg0: i32, %arg1: i32) -> (i32, i32, i32, i32, i32) {
    %c0_i32 = arith.constant 0 : i32
    %c0_i32_0 = arith.constant 0 : i32
    %c0_i32_1 = arith.constant 0 : i32
    %c0_i32_2 = arith.constant 0 : i32
    return %arg1, %arg0, %c0_i32, %c0_i32_0, %c0_i32_1 : i32, i32, i32, i32, i32
  }
}

</mosaic_0001>

<llo_original>
// kernel: decoder_forward.5
$region0: #{decoder_forward.5}
  #allocation0 [shape = 'u32[]', space=smem, size = 0x4, offset = 0x4, fixed_abs, tag = 'smem constant byte address 0x4 - core index']
  #allocation1 [shape = 'u32[72,128]{1,0:T(1,128)}', space=vmem, size = 0x9000, scoped, tag = 'internal scratch']
  %s0 = inlined_call_operand.vmem [shape: bf16[16,128], index: 0, kind: input, shape index: {}]
  %s1 = inlined_call_operand.vmem [shape: bf16[128,128], index: 1, kind: input, shape index: {}]
  %s2 = inlined_call_operand.vmem [shape: f32[16,128], index: 2, kind: output, shape index: {}]
  %s3 = sld [smem:[#allocation0]]
  $region18: #{decoder_forward.5} parent=0
    _
  %s5 = ssub.s32 1, %s3
  %s6 = scalar_select 0, %s5, %s3
  // Predicated region
  $region2: #{decoder_forward.5} parent=0 // pred_check
    _
  $region3: #{decoder_forward.5} parent=0 // pred_check_branch
    %8 = sbr.rel (0) target = $region5
  $region4: #{decoder_forward.5} parent=0 // pred_region
    _
  $region5: #{decoder_forward.5} parent=0 // pred_fallthru
    _
  // Predicated region
  $region6: #{decoder_forward.5} parent=0 // pred_check
    _
  $region7: #{decoder_forward.5} parent=0 // pred_check_branch
    %10 = sbr.rel (0) target = $region9
  $region8: #{decoder_forward.5} parent=0 // pred_region
    _
  $region9: #{decoder_forward.5} parent=0 // pred_fallthru
    _
  %v11 = vld [vmem:[%s0] sm:$0xf]
  %v12 = vld [vmem:[%s0 + $0x4] sm:$0xf]
  %v13 = vld [vmem:[%s1] sm:$0xf]
  %v14 = vld [vmem:[%s1 + $0x4] sm:$0xf]
  %v15 = vld [vmem:[%s1 + $0x8] sm:$0xf]
  %v16 = vld [vmem:[%s1 + $0xc] sm:$0xf]
  %v17 = vld [vmem:[%s1 + $0x10] sm:$0xf]
  %v18 = vld [vmem:[%s1 + $0x14] sm:$0xf]
  %v19 = vld [vmem:[%s1 + $0x18] sm:$0xf]
  %v20 = vld [vmem:[%s1 + $0x1c] sm:$0xf]
  %v21 = vld [vmem:[%s1 + $0x20] sm:$0xf]
  %v22 = vld [vmem:[%s1 + $0x24] sm:$0xf]
  %v23 = vld [vmem:[%s1 + $0x28] sm:$0xf]
  %v24 = vld [vmem:[%s1 + $0x2c] sm:$0xf]
  %v25 = vld [vmem:[%s1 + $0x30] sm:$0xf]
  %v26 = vld [vmem:[%s1 + $0x34] sm:$0xf]
  %v27 = vld [vmem:[%s1 + $0x38] sm:$0xf]
  %v28 = vld [vmem:[%s1 + $0x3c] sm:$0xf]
  %v31 = vunpack.c.l.b16 %v11
  %v32 = vunpack.c.l.b16 %v12
  %v33 = vpack.c.b16 %v32, %v31
  %v51 = vunpack.c.l.b16 %v13
  %v52 = vunpack.c.l.b16 %v14
  %v53 = vunpack.c.l.b16 %v15
  %v54 = vunpack.c.l.b16 %v16
  %v55 = vunpack.c.l.b16 %v17
  %v56 = vunpack.c.l.b16 %v18
  %v57 = vunpack.c.l.b16 %v19
  %v58 = vunpack.c.l.b16 %v20
  %v59 = vunpack.c.l.b16 %v21
  %v60 = vunpack.c.l.b16 %v22
  %v61 = vunpack.c.l.b16 %v23
  %v62 = vunpack.c.l.b16 %v24
  %v63 = vunpack.c.l.b16 %v25
  %v64 = vunpack.c.l.b16 %v26
  %v65 = vunpack.c.l.b16 %v27
  %v66 = vunpack.c.l.b16 %v28
  %v67 = vpack.c.b16 %v52, %v51
  %v68 = vpack.c.b16 %v54, %v53
  %v69 = vpack.c.b16 %v56, %v55
  %v70 = vpack.c.b16 %v58, %v57
  %v71 = vpack.c.b16 %v60, %v59
  %v72 = vpack.c.b16 %v62, %v61
  %v73 = vpack.c.b16 %v64, %v63
  %v74 = vpack.c.b16 %v66, %v65
  %83 = vmatpush.bf16.msra.mxu0 %v74
  %84 = vmatpush.bf16.msra.mxu0 %v73
  %85 = vmatpush.bf16.msra.mxu0 %v72
  %86 = vmatpush.bf16.msra.mxu0 %v71
  %87 = vmatpush.bf16.msra.mxu0 %v70
  %88 = vmatpush.bf16.msra.mxu0 %v69
  %89 = vmatpush.bf16.msra.mxu0 %v68
  %90 = vmatpush.bf16.msra.mxu0 %v67
  %91 = vmatmul.bf16.gmra.mxu0 %v33
  %v92 = vpop.f32.mrf.mxu0
  %v93 = vadd.f32 0.0, %v92
  %v94 = vpop.f32.mrf.mxu0
  %v95 = vadd.f32 0.0, %v94
  %96 = vdwg.mxu0
  %97 = vst [vmem:[%s2] sm:$0xff] %v93
  %98 = vst [vmem:[%s2 + $0x8] sm:$0xff] %v95
  // Predicated region
  $region10: #{decoder_forward.5} parent=0 // pred_check
    _
  $region11: #{decoder_forward.5} parent=0 // pred_check_branch
    %100 = sbr.rel (0) target = $region13
  $region12: #{decoder_forward.5} parent=0 // pred_region
    _
  $region13: #{decoder_forward.5} parent=0 // pred_fallthru
    _
  // Predicated region
  $region14: #{decoder_forward.5} parent=0 // pred_check
    _
  $region15: #{decoder_forward.5} parent=0 // pred_check_branch
    %102 = sbr.rel (0) target = $region17
  $region16: #{decoder_forward.5} parent=0 // pred_region
    _
  $region17: #{decoder_forward.5} parent=0 // pred_fallthru
    _

// kernel: decoder_forward.3
$region0: #{decoder_forward.3}
  #allocation0 [shape = 'u32[]', space=smem, size = 0x4, offset = 0x4, fixed_abs, tag = 'smem constant byte address 0x4 - core index']
  #allocation1 [shape = 'u32[72,128]{1,0:T(1,128)}', space=vmem, size = 0x9000, scoped, tag = 'internal scratch']
  %s0 = inlined_call_operand.vmem [shape: bf16[2,8,128], index: 0, kind: input, shape index: {}]
  %s1 = inlined_call_operand.vmem [shape: bf16[128,128], index: 1, kind: input, shape index: {}]
  %s2 = inlined_call_operand.vmem [shape: f32[1,128], index: 2, kind: input, shape index: {}]
  %s3 = inlined_call_operand.vmem [shape: bf16[128,128], index: 3, kind: input, shape index: {}]
  %s4 = inlined_call_operand.vmem [shape: f32[1,128], index: 4, kind: input, shape index: {}]
  %s5 = inlined_call_operand.vmem [shape: f32[8,128], index: 5, kind: input, shape index: {}]
  %s6 = inlined_call_operand.vmem [shape: f32[2,8,128], index: 6, kind: output, shape index: {}]
  %s7 = sld [smem:[#allocation0]]
  $region57: #{decoder_forward.3} parent=0
    _
  %s9 = ssub.s32 1, %s7
  %s10 = scalar_select 0, %s9, %s7
  loop: start=0, step=1, limit=4
  $region2: #{decoder_forward.3} parent=0 // loop_pre_header
    _
  $region3: #{decoder_forward.3} parent=0 // loop_header
    %s12 = sphi 0, %s16
    %p13 = scmp.ge.s32.totalorder %s12, 4
    %s19 = sphi 0, %s31
    %s20 = sphi 0, %s27
    %s21 = sphi 0, %s19
    %s22 = sphi 0, %s20
    %s23 = sphi 0, %s21
    %s24 = sphi 0, %s22
    %s36 = sphi 0, %s38
    %s39 = sphi 0, %s36
    %s40 = sphi 0, %s39
    %s56 = sphi 0, %s40
    %s60 = sphi 0, %s60
    %s62 = sphi 0, %s60
    %s63 = sphi 0, %s62
    %s77 = sphi 0, %s63
    %s81 = sphi 0, %s81
    %s83 = sphi 0, %s81
    %s84 = sphi 0, %s83
    %s98 = sphi 0, %s84
    %s102 = sphi 0, %s102
    %s104 = sphi 0, %s102
    %s105 = sphi 0, %s104
    %s119 = sphi 0, %s105
    %s123 = sphi 0, %s123
    %s125 = sphi 0, %s123
    %s126 = sphi 0, %s125
    %s140 = sphi 0, %s126
    %s146 = sphi 0, %s148
    %s149 = sphi 0, %s146
    %s150 = sphi 0, %s149
    %s166 = sphi 0, %s150
    %s174 = sphi 0, %s176
    %s177 = sphi 0, %s174
    %s178 = sphi 0, %s177
    %s194 = sphi 0, %s178
  $region4: #{decoder_forward.3} parent=0 // loop_header_branch
    %15 = sbr.rel (%p13) target = $region8
  $region5: #{decoder_forward.3} parent=0 // loop_body
    %s17 = ssub.s32 %s12, 1
    %s18 = ssub.s32 %s12, 2
    %s25 = sadd.s32 1, %s20
    %p26 = scmp.ge.s32.totalorder %s25, 1
    %s27 = scalar_select %p26, 0, %s25
    %s28 = sadd.s32 1, %s19
    %s29 = scalar_select %p26, %s28, %s19
    %p30 = scmp.ge.s32.totalorder %s29, 2
    %s31 = scalar_select %p30, 0, %s29
    %s32 = ssub.s32 %s19, %s31
    %s33 = ssub.s32 %s20, %s27
    %s34 = sor.u32 %s32, %s33
    %p35 = scmp.eq.s32.totalorder %s34, 0
    %s37 = sadd.s32 %s36, 1
    %s38 = scalar_select %p35, %s36, %s37
    %p41 = pneg %p35
    %p42 = scmp.eq.s32.totalorder %s12, 1
    %p43 = por %p41, %p42
    %p44 = scmp.ne.s32.totalorder %s36, %s39
    %p45 = scmp.eq.s32.totalorder %s12, 0
    %p46 = por %p44, %p45
    %p47 = scmp.ne.s32.totalorder %s36, %s39
    %p48 = scmp.eq.s32.totalorder %s17, 1
    %p49 = por %p47, %p48
    %p50 = scmp.ne.s32.totalorder %s39, %s40
    %p51 = scmp.eq.s32.totalorder %s17, 0
    %p52 = por %p50, %p51
    %p53 = scmp.ne.s32.totalorder %s39, %s40
    %p54 = scmp.eq.s32.totalorder %s18, 1
    %p55 = por %p53, %p54
    %p57 = scmp.ne.s32.totalorder %s40, %s56
    %p58 = scmp.eq.s32.totalorder %s18, 0
    %p59 = por %p57, %p58
    %s61 = sadd.s32 %s60, 1
    %p64 = scmp.eq.s32.totalorder %s12, 1
    %p65 = scmp.ne.s32.totalorder %s60, %s62
    %p66 = scmp.eq.s32.totalorder %s12, 0
    %p67 = por %p65, %p66
    %p68 = scmp.ne.s32.totalorder %s60, %s62
    %p69 = scmp.eq.s32.totalorder %s17, 1
    %p70 = por %p68, %p69
    %p71 = scmp.ne.s32.totalorder %s62, %s63
    %p72 = scmp.eq.s32.totalorder %s17, 0
    %p73 = por %p71, %p72
    %p74 = scmp.ne.s32.totalorder %s62, %s63
    %p75 = scmp.eq.s32.totalorder %s18, 1
    %p76 = por %p74, %p75
    %p78 = scmp.ne.s32.totalorder %s63, %s77
    %p79 = scmp.eq.s32.totalorder %s18, 0
    %p80 = por %p78, %p79
    %s82 = sadd.s32 %s81, 1
    %p85 = scmp.eq.s32.totalorder %s12, 1
    %p86 = scmp.ne.s32.totalorder %s81, %s83
    %p87 = scmp.eq.s32.totalorder %s12, 0
    %p88 = por %p86, %p87
    %p89 = scmp.ne.s32.totalorder %s81, %s83
    %p90 = scmp.eq.s32.totalorder %s17, 1
    %p91 = por %p89, %p90
    %p92 = scmp.ne.s32.totalorder %s83, %s84
    %p93 = scmp.eq.s32.totalorder %s17, 0
    %p94 = por %p92, %p93
    %p95 = scmp.ne.s32.totalorder %s83, %s84
    %p96 = scmp.eq.s32.totalorder %s18, 1
    %p97 = por %p95, %p96
    %p99 = scmp.ne.s32.totalorder %s84, %s98
    %p100 = scmp.eq.s32.totalorder %s18, 0
    %p101 = por %p99, %p100
    %s103 = sadd.s32 %s102, 1
    %p106 = scmp.eq.s32.totalorder %s12, 1
    %p107 = scmp.ne.s32.totalorder %s102, %s104
    %p108 = scmp.eq.s32.totalorder %s12, 0
    %p109 = por %p107, %p108
    %p110 = scmp.ne.s32.totalorder %s102, %s104
    %p111 = scmp.eq.s32.totalorder %s17, 1
    %p112 = por %p110, %p111
    %p113 = scmp.ne.s32.totalorder %s104, %s105
    %p114 = scmp.eq.s32.totalorder %s17, 0
    %p115 = por %p113, %p114
    %p116 = scmp.ne.s32.totalorder %s104, %s105
    %p117 = scmp.eq.s32.totalorder %s18, 1
    %p118 = por %p116, %p117
    %p120 = scmp.ne.s32.totalorder %s105, %s119
    %p121 = scmp.eq.s32.totalorder %s18, 0
    %p122 = por %p120, %p121
    %s124 = sadd.s32 %s123, 1
    %p127 = scmp.eq.s32.totalorder %s12, 1
    %p128 = scmp.ne.s32.totalorder %s123, %s125
    %p129 = scmp.eq.s32.totalorder %s12, 0
    %p130 = por %p128, %p129
    %p131 = scmp.ne.s32.totalorder %s123, %s125
    %p132 = scmp.eq.s32.totalorder %s17, 1
    %p133 = por %p131, %p132
    %p134 = scmp.ne.s32.totalorder %s125, %s126
    %p135 = scmp.eq.s32.totalorder %s17, 0
    %p136 = por %p134, %p135
    %p137 = scmp.ne.s32.totalorder %s125, %s126
    %p138 = scmp.eq.s32.totalorder %s18, 1
    %p139 = por %p137, %p138
    %p141 = scmp.ne.s32.totalorder %s126, %s140
    %p142 = scmp.eq.s32.totalorder %s18, 0
    %p143 = por %p141, %p142
    %s144 = ssub.s32 %s20, %s27
    %p145 = scmp.eq.s32.totalorder %s144, 0
    %s147 = sadd.s32 %s146, 1
    %s148 = scalar_select %p145, %s146, %s147
    %p151 = pneg %p145
    %p152 = scmp.eq.s32.totalorder %s12, 1
    %p153 = por %p151, %p152
    %p154 = scmp.ne.s32.totalorder %s146, %s149
    %p155 = scmp.eq.s32.totalorder %s12, 0
    %p156 = por %p154, %p155
    %p157 = scmp.ne.s32.totalorder %s146, %s149
    %p158 = scmp.eq.s32.totalorder %s17, 1
    %p159 = por %p157, %p158
    %p160 = scmp.ne.s32.totalorder %s149, %s150
    %p161 = scmp.eq.s32.totalorder %s17, 0
    %p162 = por %p160, %p161
    %p163 = scmp.ne.s32.totalorder %s149, %s150
    %p164 = scmp.eq.s32.totalorder %s18, 1
    %p165 = por %p163, %p164
    %p167 = scmp.ne.s32.totalorder %s150, %s166
    %p168 = scmp.eq.s32.totalorder %s18, 0
    %p169 = por %p167, %p168
    %s170 = ssub.s32 %s19, %s31
    %s171 = ssub.s32 %s20, %s27
    %s172 = sor.u32 %s170, %s171
    %p173 = scmp.eq.s32.totalorder %s172, 0
    %s175 = sadd.s32 %s174, 1
    %s176 = scalar_select %p173, %s174, %s175
    %p179 = pneg %p173
    %p180 = scmp.eq.s32.totalorder %s12, 1
    %p181 = por %p179, %p180
    %p182 = scmp.ne.s32.totalorder %s174, %s177
    %p183 = scmp.eq.s32.totalorder %s12, 0
    %p184 = por %p182, %p183
    %p185 = scmp.ne.s32.totalorder %s174, %s177
    %p186 = scmp.eq.s32.totalorder %s17, 1
    %p187 = por %p185, %p186
    %p188 = scmp.ne.s32.totalorder %s177, %s178
    %p189 = scmp.eq.s32.totalorder %s17, 0
    %p190 = por %p188, %p189
    %p191 = scmp.ne.s32.totalorder %s177, %s178
    %p192 = scmp.eq.s32.totalorder %s18, 1
    %p193 = por %p191, %p192
    %p195 = scmp.ne.s32.totalorder %s178, %s194
    %p196 = scmp.eq.s32.totalorder %s18, 0
    %p197 = por %p195, %p196
    %p198 = scmp.le.s32.totalorder 1, %s12
    %p199 = scmp.lt.s32.totalorder %s12, 3
    %p200 = pnand %p198, %p199
    %p201 = pneg %p200
    // Predicated region
    $region9: #{decoder_forward.3} parent=5 // pred_check
      _
    $region10: #{decoder_forward.3} parent=5 // pred_check_branch
      %203 = sbr.rel (%p200) target = $region12
    $region11: #{decoder_forward.3} parent=5 // pred_region
      %s204 = ssub.s32 %s12, 1
      // Predicated region
      $region13: #{decoder_forward.3} parent=11 // pred_check
        %p205 = pneg %p73
      $region14: #{decoder_forward.3} parent=11 // pred_check_branch
        %207 = sbr.rel (%p205) target = $region16
      $region15: #{decoder_forward.3} parent=11 // pred_region
        _
      $region16: #{decoder_forward.3} parent=11 // pred_fallthru
        _
      // Predicated region
      $region17: #{decoder_forward.3} parent=11 // pred_check
        %p208 = pneg %p94
      $region18: #{decoder_forward.3} parent=11 // pred_check_branch
        %210 = sbr.rel (%p208) target = $region20
      $region19: #{decoder_forward.3} parent=11 // pred_region
        _
      $region20: #{decoder_forward.3} parent=11 // pred_fallthru
        _
      // Predicated region
      $region21: #{decoder_forward.3} parent=11 // pred_check
        %p211 = pneg %p115
      $region22: #{decoder_forward.3} parent=11 // pred_check_branch
        %213 = sbr.rel (%p211) target = $region24
      $region23: #{decoder_forward.3} parent=11 // pred_region
        _
      $region24: #{decoder_forward.3} parent=11 // pred_fallthru
        _
      // Predicated region
      $region25: #{decoder_forward.3} parent=11 // pred_check
        %p214 = pneg %p136
      $region26: #{decoder_forward.3} parent=11 // pred_check_branch
        %216 = sbr.rel (%p214) target = $region28
      $region27: #{decoder_forward.3} parent=11 // pred_region
        _
      $region28: #{decoder_forward.3} parent=11 // pred_fallthru
        _
      // Predicated region
      $region29: #{decoder_forward.3} parent=11 // pred_check
        %p217 = pneg %p162
      $region30: #{decoder_forward.3} parent=11 // pred_check_branch
        %219 = sbr.rel (%p217) target = $region32
      $region31: #{decoder_forward.3} parent=11 // pred_region
        %p220 = scmp.lt.s32.totalorder %s22, 0
        %s221 = scalar_select %p220, %s22, 0
        %s222 = smul.addr %s221, 8
        %s223 = scalar_lea.vmem %s5, %s222
      $region32: #{decoder_forward.3} parent=11 // pred_fallthru
        _
    $region12: #{decoder_forward.3} parent=5 // pred_fallthru
      _
    %p224 = scmp.lt.s32.totalorder %s12, 2
    // Predicated region
    $region33: #{decoder_forward.3} parent=5 // pred_check
      %p225 = pneg %p224
    $region34: #{decoder_forward.3} parent=5 // pred_check_branch
      %227 = sbr.rel (%p225) target = $region36
    $region35: #{decoder_forward.3} parent=5 // pred_region
      // Predicated region
      $region37: #{decoder_forward.3} parent=35 // pred_check
        %p228 = pneg %p46
      $region38: #{decoder_forward.3} parent=35 // pred_check_branch
        %230 = sbr.rel (%p228) target = $region40
      $region39: #{decoder_forward.3} parent=35 // pred_region
        %p231 = scmp.lt.s32.totalorder %s19, 1
        %s232 = scalar_select %p231, %s19, 1
        %p233 = scmp.lt.s32.totalorder %s20, 0
        %s234 = scalar_select %p233, %s20, 0
        %s235 = sadd.s32 %s234, %s232
        %s236 = smul.addr %s235, 4
        %s237 = scalar_lea.vmem %s0, %s236
      $region40: #{decoder_forward.3} parent=35 // pred_fallthru
        _
    $region36: #{decoder_forward.3} parent=5 // pred_fallthru
      _
    %p238 = scmp.le.s32.totalorder 1, %s12
    %p239 = scmp.lt.s32.totalorder %s12, 3
    %p240 = pnand %p238, %p239
    %p241 = pneg %p240
    // Predicated region
    $region41: #{decoder_forward.3} parent=5 // pred_check
      _
    $region42: #{decoder_forward.3} parent=5 // pred_check_branch
      %243 = sbr.rel (%p240) target = $region44
    $region43: #{decoder_forward.3} parent=5 // pred_region
      %s244 = ssub.s32 %s12, 1
      %p245 = scmp.lt.s32.totalorder %s21, 1
      %s246 = scalar_select %p245, %s21, 1
      %p247 = scmp.lt.s32.totalorder %s22, 0
      %s248 = scalar_select %p247, %s22, 0
      %s249 = sadd.s32 %s248, %s246
      %s250 = smul.addr %s249, 4
      %s251 = scalar_lea.vmem %s0, %s250
      %p252 = pneg %p52
      %p253 = pneg %p49
      %p254 = pneg %p73
      %p255 = pneg %p70
      %p256 = pneg %p94
      %p257 = pneg %p91
      %p258 = pneg %p115
      %p259 = pneg %p112
      %p260 = pneg %p136
      %p261 = pneg %p133
      %p262 = scmp.lt.s32.totalorder %s22, 0
      %s263 = scalar_select %p262, %s22, 0
      %s264 = smul.addr %s263, 8
      %s265 = scalar_lea.vmem %s5, %s264
      %p266 = pneg %p162
      %p267 = pneg %p159
      %p268 = pneg %p190
      %p269 = pneg %p187
      %p270 = scmp.lt.s32.totalorder %s21, 1
      %s271 = scalar_select %p270, %s21, 1
      %p272 = scmp.lt.s32.totalorder %s22, 0
      %s273 = scalar_select %p272, %s22, 0
      %s274 = sadd.s32 %s273, %s271
      %s275 = smul.addr %s274, 8
      %s276 = scalar_lea.vmem %s6, %s275
      %p277 = scmp.lt.s32.totalorder %s21, 1
      %s278 = scalar_select %p277, %s21, 1
      %p279 = scmp.lt.s32.totalorder %s22, 0
      %s280 = scalar_select %p279, %s22, 0
      %s281 = sadd.s32 %s280, %s278
      %s282 = smul.addr %s281, 4
      %s283 = scalar_lea.vmem %s0, %s282
      %p284 = scmp.lt.s32.totalorder %s22, 0
      %s285 = scalar_select %p284, %s22, 0
      %s286 = smul.addr %s285, 8
      %s287 = scalar_lea.vmem %s5, %s286
      %p288 = scmp.lt.s32.totalorder %s21, 1
      %s289 = scalar_select %p288, %s21, 1
      %p290 = scmp.lt.s32.totalorder %s22, 0
      %s291 = scalar_select %p290, %s22, 0
      %s292 = sadd.s32 %s291, %s289
      %s293 = smul.addr %s292, 8
      %s294 = scalar_lea.vmem %s6, %s293
      %v295 = vld [vmem:[%s283] sm:$0xf]
      %v296 = vld [vmem:[%s1] sm:$0xf]
      %v297 = vld [vmem:[%s1 + $0x4] sm:$0xf]
      %v298 = vld [vmem:[%s1 + $0x8] sm:$0xf]
      %v299 = vld [vmem:[%s1 + $0xc] sm:$0xf]
      %v300 = vld [vmem:[%s1 + $0x10] sm:$0xf]
      %v301 = vld [vmem:[%s1 + $0x14] sm:$0xf]
      %v302 = vld [vmem:[%s1 + $0x18] sm:$0xf]
      %v303 = vld [vmem:[%s1 + $0x1c] sm:$0xf]
      %v304 = vld [vmem:[%s1 + $0x20] sm:$0xf]
      %v305 = vld [vmem:[%s1 + $0x24] sm:$0xf]
      %v306 = vld [vmem:[%s1 + $0x28] sm:$0xf]
      %v307 = vld [vmem:[%s1 + $0x2c] sm:$0xf]
      %v308 = vld [vmem:[%s1 + $0x30] sm:$0xf]
      %v309 = vld [vmem:[%s1 + $0x34] sm:$0xf]
      %v310 = vld [vmem:[%s1 + $0x38] sm:$0xf]
      %v311 = vld [vmem:[%s1 + $0x3c] sm:$0xf]
      %v312 = vld [vmem:[%s2] sm:$0x1]
      %v314 = vperm.slane %v312, 0
      %v332 = vunpack.c.l.b16 %v296
      %v333 = vunpack.c.l.b16 %v297
      %v334 = vunpack.c.l.b16 %v298
      %v335 = vunpack.c.l.b16 %v299
      %v336 = vunpack.c.l.b16 %v300
      %v337 = vunpack.c.l.b16 %v301
      %v338 = vunpack.c.l.b16 %v302
      %v339 = vunpack.c.l.b16 %v303
      %v340 = vunpack.c.l.b16 %v304
      %v341 = vunpack.c.l.b16 %v305
      %v342 = vunpack.c.l.b16 %v306
      %v343 = vunpack.c.l.b16 %v307
      %v344 = vunpack.c.l.b16 %v308
      %v345 = vunpack.c.l.b16 %v309
      %v346 = vunpack.c.l.b16 %v310
      %v347 = vunpack.c.l.b16 %v311
      %v348 = vpack.c.b16 %v333, %v332
      %v349 = vpack.c.b16 %v335, %v334
      %v350 = vpack.c.b16 %v337, %v336
      %v351 = vpack.c.b16 %v339, %v338
      %v352 = vpack.c.b16 %v341, %v340
      %v353 = vpack.c.b16 %v343, %v342
      %v354 = vpack.c.b16 %v345, %v344
      %v355 = vpack.c.b16 %v347, %v346
      %364 = vmatpush.bf16.msra.mxu0 %v355
      %365 = vmatpush.bf16.msra.mxu0 %v354
      %366 = vmatpush.bf16.msra.mxu0 %v353
      %367 = vmatpush.bf16.msra.mxu0 %v352
      %368 = vmatpush.bf16.msra.mxu0 %v351
      %369 = vmatpush.bf16.msra.mxu0 %v350
      %370 = vmatpush.bf16.msra.mxu0 %v349
      %371 = vmatpush.bf16.msra.mxu0 %v348
      %372 = vmatmul.bf16.gmra.mxu0 %v295
      %v373 = vpop.f32.mrf.mxu0
      %v374 = vadd.f32 %v314, %v373
      %v375 = vpop.f32.mrf.mxu0
      %376 = vdwg.mxu0
      %v377 = vmax.f32 %v374, 0.0
      %v378 = vpack.c.bf16 %v377, %v377
      %v379 = vld [vmem:[%s3] sm:$0xf]
      %v380 = vld [vmem:[%s3 + $0x4] sm:$0xf]
      %v381 = vld [vmem:[%s3 + $0x8] sm:$0xf]
      %v382 = vld [vmem:[%s3 + $0xc] sm:$0xf]
      %v383 = vld [vmem:[%s3 + $0x10] sm:$0xf]
      %v384 = vld [vmem:[%s3 + $0x14] sm:$0xf]
      %v385 = vld [vmem:[%s3 + $0x18] sm:$0xf]
      %v386 = vld [vmem:[%s3 + $0x1c] sm:$0xf]
      %v387 = vld [vmem:[%s3 + $0x20] sm:$0xf]
      %v388 = vld [vmem:[%s3 + $0x24] sm:$0xf]
      %v389 = vld [vmem:[%s3 + $0x28] sm:$0xf]
      %v390 = vld [vmem:[%s3 + $0x2c] sm:$0xf]
      %v391 = vld [vmem:[%s3 + $0x30] sm:$0xf]
      %v392 = vld [vmem:[%s3 + $0x34] sm:$0xf]
      %v393 = vld [vmem:[%s3 + $0x38] sm:$0xf]
      %v394 = vld [vmem:[%s3 + $0x3c] sm:$0xf]
      %v395 = vld [vmem:[%s4] sm:$0x1]
      %v397 = vperm.slane %v395, 0
      %v415 = vunpack.c.l.b16 %v379
      %v416 = vunpack.c.l.b16 %v380
      %v417 = vunpack.c.l.b16 %v381
      %v418 = vunpack.c.l.b16 %v382
      %v419 = vunpack.c.l.b16 %v383
      %v420 = vunpack.c.l.b16 %v384
      %v421 = vunpack.c.l.b16 %v385
      %v422 = vunpack.c.l.b16 %v386
      %v423 = vunpack.c.l.b16 %v387
      %v424 = vunpack.c.l.b16 %v388
      %v425 = vunpack.c.l.b16 %v389
      %v426 = vunpack.c.l.b16 %v390
      %v427 = vunpack.c.l.b16 %v391
      %v428 = vunpack.c.l.b16 %v392
      %v429 = vunpack.c.l.b16 %v393
      %v430 = vunpack.c.l.b16 %v394
      %v431 = vpack.c.b16 %v416, %v415
      %v432 = vpack.c.b16 %v418, %v417
      %v433 = vpack.c.b16 %v420, %v419
      %v434 = vpack.c.b16 %v422, %v421
      %v435 = vpack.c.b16 %v424, %v423
      %v436 = vpack.c.b16 %v426, %v425
      %v437 = vpack.c.b16 %v428, %v427
      %v438 = vpack.c.b16 %v430, %v429
      %447 = vmatpush.bf16.msra.mxu0 %v438
      %448 = vmatpush.bf16.msra.mxu0 %v437
      %449 = vmatpush.bf16.msra.mxu0 %v436
      %450 = vmatpush.bf16.msra.mxu0 %v435
      %451 = vmatpush.bf16.msra.mxu0 %v434
      %452 = vmatpush.bf16.msra.mxu0 %v433
      %453 = vmatpush.bf16.msra.mxu0 %v432
      %454 = vmatpush.bf16.msra.mxu0 %v431
      %455 = vmatmul.bf16.gmra.mxu0 %v378
      %v456 = vpop.f32.mrf.mxu0
      %v457 = vadd.f32 %v397, %v456
      %v458 = vpop.f32.mrf.mxu0
      %459 = vdwg.mxu0
      %v460 = vmax.f32 %v457, 0.0
      %v461 = vld [vmem:[%s287] sm:$0xff]
      %v462 = vadd.f32 %v460, %v461
      %463 = vst [vmem:[%s294] sm:$0xff] %v462
      %p464 = scmp.lt.s32.totalorder %s21, 1
      %s465 = scalar_select %p464, %s21, 1
      %p466 = scmp.lt.s32.totalorder %s22, 0
      %s467 = scalar_select %p466, %s22, 0
      %s468 = sadd.s32 %s467, %s465
      %s469 = smul.addr %s468, 8
      %s470 = scalar_lea.vmem %s6, %s469
      // Predicated region
      $region45: #{decoder_forward.3} parent=43 // pred_check
        %p471 = pneg %p187
      $region46: #{decoder_forward.3} parent=43 // pred_check_branch
        %473 = sbr.rel (%p471) target = $region48
      $region47: #{decoder_forward.3} parent=43 // pred_region
        _
      $region48: #{decoder_forward.3} parent=43 // pred_fallthru
        _
    $region44: #{decoder_forward.3} parent=5 // pred_fallthru
      _
    %p474 = scmp.le.s32.totalorder 2, %s12
    // Predicated region
    $region49: #{decoder_forward.3} parent=5 // pred_check
      %p475 = pneg %p474
    $region50: #{decoder_forward.3} parent=5 // pred_check_branch
      %477 = sbr.rel (%p475) target = $region52
    $region51: #{decoder_forward.3} parent=5 // pred_region
      %s478 = ssub.s32 %s12, 2
      // Predicated region
      $region53: #{decoder_forward.3} parent=51 // pred_check
        %p479 = pneg %p193
      $region54: #{decoder_forward.3} parent=51 // pred_check_branch
        %481 = sbr.rel (%p479) target = $region56
      $region55: #{decoder_forward.3} parent=51 // pred_region
        %p482 = scmp.lt.s32.totalorder %s23, 1
        %s483 = scalar_select %p482, %s23, 1
        %p484 = scmp.lt.s32.totalorder %s24, 0
        %s485 = scalar_select %p484, %s24, 0
        %s486 = sadd.s32 %s485, %s483
        %s487 = smul.addr %s486, 8
        %s488 = scalar_lea.vmem %s6, %s487
      $region56: #{decoder_forward.3} parent=51 // pred_fallthru
        _
    $region52: #{decoder_forward.3} parent=5 // pred_fallthru
      _
  $region6: #{decoder_forward.3} parent=0 // loop_footer
    %s16 = sadd.s32 1, %s12
  $region7: #{decoder_forward.3} parent=0 // loop_footer_branch
    %11 = sbr.rel target = $region3
  $region8: #{decoder_forward.3} parent=0 // loop_exit
    _

// kernel: decoder_forward.4
$region0: #{decoder_forward.4}
  #allocation0 [shape = 'u32[]', space=smem, size = 0x4, offset = 0x4, fixed_abs, tag = 'smem constant byte address 0x4 - core index']
  #allocation1 [shape = 'u32[72,128]{1,0:T(1,128)}', space=vmem, size = 0x9000, scoped, tag = 'internal scratch']
  #allocation2 [shape = 'f32[8,128]{1,0:T(8,128)}', space=vmem, size = 0x1000, scoped, tag = 'scratch operand']
  %s0 = inlined_call_operand.vmem [shape: f32[2,8,128], index: 0, kind: input, shape index: {}]
  %s1 = inlined_call_operand.vmem [shape: f32[2,16,128], index: 1, kind: input, shape index: {}]
  %s2 = inlined_call_operand.vmem [shape: f32[2,1,128], index: 2, kind: input, shape index: {}]
  %s3 = inlined_call_operand.vmem [shape: f32[2,1,128], index: 3, kind: input, shape index: {}]
  %s4 = inlined_call_operand.vmem [shape: bf16[2,128,384], index: 4, kind: input, shape index: {}]
  %s5 = inlined_call_operand.vmem [shape: f32[2,1,384], index: 5, kind: input, shape index: {}]
  %s6 = inlined_call_operand.vmem [shape: bf16[2,128,128], index: 6, kind: input, shape index: {}]
  %s7 = inlined_call_operand.vmem [shape: f32[2,1,128], index: 7, kind: input, shape index: {}]
  %s8 = inlined_call_operand.vmem [shape: f32[2,1,128], index: 8, kind: input, shape index: {}]
  %s9 = inlined_call_operand.vmem [shape: f32[2,1,128], index: 9, kind: input, shape index: {}]
  %s10 = inlined_call_operand.vmem [shape: bf16[2,128,128], index: 10, kind: input, shape index: {}]
  %s11 = inlined_call_operand.vmem [shape: f32[2,1,128], index: 11, kind: input, shape index: {}]
  %s12 = inlined_call_operand.vmem [shape: bf16[2,128,256], index: 12, kind: input, shape index: {}]
  %s13 = inlined_call_operand.vmem [shape: f32[2,1,256], index: 13, kind: input, shape index: {}]
  %s14 = inlined_call_operand.vmem [shape: bf16[2,128,128], index: 14, kind: input, shape index: {}]
  %s15 = inlined_call_operand.vmem [shape: f32[2,1,128], index: 15, kind: input, shape index: {}]
  %s16 = inlined_call_operand.vmem [shape: f32[2,1,128], index: 16, kind: input, shape index: {}]
  %s17 = inlined_call_operand.vmem [shape: f32[2,1,128], index: 17, kind: input, shape index: {}]
  %s18 = inlined_call_operand.vmem [shape: bf16[2,640,256], index: 18, kind: input, shape index: {}]
  %s19 = inlined_call_operand.vmem [shape: f32[2,1,256], index: 19, kind: input, shape index: {}]
  %s20 = inlined_call_operand.vmem [shape: bf16[2,256,128], index: 20, kind: input, shape index: {}]
  %s21 = inlined_call_operand.vmem [shape: f32[2,1,128], index: 21, kind: input, shape index: {}]
  %s22 = inlined_call_operand.vmem [shape: bf16[2,8,128], index: 22, kind: output, shape index: {0}]
  %s23 = inlined_call_operand.hbm [shape: f32[2,2,4,8,8], index: 23, kind: output, shape index: {1}]
  %s24 = inlined_call_operand.hbm [shape: f32[2,2,4,8,16], index: 24, kind: output, shape index: {2}]
  %25 = xla_tuple %s22, %s23, %s24
  %s26 = sld [smem:[#allocation0]]
  $region145: #{decoder_forward.4} parent=0
    _
  %s28 = ssub.s32 1, %s26
  %s29 = scalar_select 0, %s28, %s26
  $region1: #{decoder_forward.4} parent=0
    #allocation3 [shape = 'u8[32768]{0}', space=vmem, size = 0x8000, scoped, tag = 'output window, operand 1']
    #allocation4 [shape = 's32[2]{0}', space=sflag, size = 0x8, scoped, tag = 'scoped memory for decoder_forward.4']
    #allocation5 [shape = 'u8[32768]{0}', space=vmem, size = 0x8000, scoped, tag = 'output window, operand 2']
    #allocation6 [shape = 's32[2]{0}', space=sflag, size = 0x8, scoped, tag = 'scoped memory for decoder_forward.4']
    %30 = vsyncpa [#allocation4], 0
    %s31 = scalar_lea.sflag [#allocation4], 1
    %32 = vsyncpa %s31, 0
    %33 = vsyncpa [#allocation6], 0
    %s34 = scalar_lea.sflag [#allocation6], 1
    %35 = vsyncpa %s34, 0
    loop: start=0, step=1, limit=6
    $region2: #{decoder_forward.4} parent=1 // loop_pre_header
      _
    $region3: #{decoder_forward.4} parent=1 // loop_header
      %s37 = sphi 0, %s41
      %p38 = scmp.ge.s32.totalorder %s37, 6
      %s44 = sphi 0, %s56
      %s45 = sphi 0, %s52
      %s46 = sphi 0, %s44
      %s47 = sphi 0, %s45
      %s48 = sphi 0, %s46
      %s49 = sphi 0, %s47
      %s59 = sphi 0, %s61
      %s62 = sphi 0, %s59
      %s63 = sphi 0, %s62
      %s79 = sphi 0, %s63
      %s85 = sphi 0, %s87
      %s88 = sphi 0, %s85
      %s89 = sphi 0, %s88
      %s105 = sphi 0, %s89
      %s111 = sphi 0, %s113
      %s114 = sphi 0, %s111
      %s115 = sphi 0, %s114
      %s131 = sphi 0, %s115
      %s137 = sphi 0, %s139
      %s140 = sphi 0, %s137
      %s141 = sphi 0, %s140
      %s157 = sphi 0, %s141
      %s163 = sphi 0, %s165
      %s166 = sphi 0, %s163
      %s167 = sphi 0, %s166
      %s183 = sphi 0, %s167
      %s189 = sphi 0, %s191
      %s192 = sphi 0, %s189
      %s193 = sphi 0, %s192
      %s209 = sphi 0, %s193
      %s215 = sphi 0, %s217
      %s218 = sphi 0, %s215
      %s219 = sphi 0, %s218
      %s235 = sphi 0, %s219
      %s241 = sphi 0, %s243
      %s244 = sphi 0, %s241
      %s245 = sphi 0, %s244
      %s261 = sphi 0, %s245
      %s267 = sphi 0, %s269
      %s270 = sphi 0, %s267
      %s271 = sphi 0, %s270
      %s287 = sphi 0, %s271
      %s293 = sphi 0, %s295
      %s296 = sphi 0, %s293
      %s297 = sphi 0, %s296
      %s313 = sphi 0, %s297
      %s319 = sphi 0, %s321
      %s322 = sphi 0, %s319
      %s323 = sphi 0, %s322
      %s339 = sphi 0, %s323
      %s345 = sphi 0, %s347
      %s348 = sphi 0, %s345
      %s349 = sphi 0, %s348
      %s365 = sphi 0, %s349
      %s371 = sphi 0, %s373
      %s374 = sphi 0, %s371
      %s375 = sphi 0, %s374
      %s391 = sphi 0, %s375
      %s397 = sphi 0, %s399
      %s400 = sphi 0, %s397
      %s401 = sphi 0, %s400
      %s417 = sphi 0, %s401
      %s423 = sphi 0, %s425
      %s426 = sphi 0, %s423
      %s427 = sphi 0, %s426
      %s443 = sphi 0, %s427
      %s449 = sphi 0, %s451
      %s452 = sphi 0, %s449
      %s453 = sphi 0, %s452
      %s469 = sphi 0, %s453
      %s475 = sphi 0, %s477
      %s478 = sphi 0, %s475
      %s479 = sphi 0, %s478
      %s495 = sphi 0, %s479
      %s501 = sphi 0, %s503
      %s504 = sphi 0, %s501
      %s505 = sphi 0, %s504
      %s521 = sphi 0, %s505
      %s527 = sphi 0, %s529
      %s530 = sphi 0, %s527
      %s531 = sphi 0, %s530
      %s547 = sphi 0, %s531
      %s553 = sphi 0, %s555
      %s556 = sphi 0, %s553
      %s557 = sphi 0, %s556
      %s573 = sphi 0, %s557
      %s579 = sphi 0, %s581
      %s582 = sphi 0, %s579
      %s583 = sphi 0, %s582
      %s599 = sphi 0, %s583
      %s605 = sphi 0, %s607
      %s608 = sphi 0, %s605
      %s609 = sphi 0, %s608
      %s625 = sphi 0, %s609
      %s631 = sphi 0, %s633
      %s634 = sphi 0, %s631
      %s635 = sphi 0, %s634
      %s651 = sphi 0, %s635
      %s659 = sphi 0, %s661
      %s662 = sphi 0, %s659
      %s663 = sphi 0, %s662
      %s679 = sphi 0, %s663
      %s687 = sphi 0, %s689
      %s690 = sphi 0, %s687
      %s691 = sphi 0, %s690
      %s707 = sphi 0, %s691
    $region4: #{decoder_forward.4} parent=1 // loop_header_branch
      %40 = sbr.rel (%p38) target = $region8
    $region5: #{decoder_forward.4} parent=1 // loop_body
      %s42 = ssub.s32 %s37, 1
      %s43 = ssub.s32 %s37, 2
      %s50 = sadd.s32 1, %s45
      %p51 = scmp.ge.s32.totalorder %s50, 2
      %s52 = scalar_select %p51, 0, %s50
      %s53 = sadd.s32 1, %s44
      %s54 = scalar_select %p51, %s53, %s44
      %p55 = scmp.ge.s32.totalorder %s54, 2
      %s56 = scalar_select %p55, 0, %s54
      %s57 = ssub.s32 %s44, %s56
      %p58 = scmp.eq.s32.totalorder %s57, 0
      %s60 = sadd.s32 %s59, 1
      %s61 = scalar_select %p58, %s59, %s60
      %p64 = pneg %p58
      %p65 = scmp.eq.s32.totalorder %s37, 3
      %p66 = por %p64, %p65
      %p67 = scmp.ne.s32.totalorder %s59, %s62
      %p68 = scmp.eq.s32.totalorder %s37, 0
      %p69 = por %p67, %p68
      %p70 = scmp.ne.s32.totalorder %s59, %s62
      %p71 = scmp.eq.s32.totalorder %s42, 3
      %p72 = por %p70, %p71
      %p73 = scmp.ne.s32.totalorder %s62, %s63
      %p74 = scmp.eq.s32.totalorder %s42, 0
      %p75 = por %p73, %p74
      %p76 = scmp.ne.s32.totalorder %s62, %s63
      %p77 = scmp.eq.s32.totalorder %s43, 3
      %p78 = por %p76, %p77
      %p80 = scmp.ne.s32.totalorder %s63, %s79
      %p81 = scmp.eq.s32.totalorder %s43, 0
      %p82 = por %p80, %p81
      %s83 = ssub.s32 %s44, %s56
      %p84 = scmp.eq.s32.totalorder %s83, 0
      %s86 = sadd.s32 %s85, 1
      %s87 = scalar_select %p84, %s85, %s86
      %p90 = pneg %p84
      %p91 = scmp.eq.s32.totalorder %s37, 3
      %p92 = por %p90, %p91
      %p93 = scmp.ne.s32.totalorder %s85, %s88
      %p94 = scmp.eq.s32.totalorder %s37, 0
      %p95 = por %p93, %p94
      %p96 = scmp.ne.s32.totalorder %s85, %s88
      %p97 = scmp.eq.s32.totalorder %s42, 3
      %p98 = por %p96, %p97
      %p99 = scmp.ne.s32.totalorder %s88, %s89
      %p100 = scmp.eq.s32.totalorder %s42, 0
      %p101 = por %p99, %p100
      %p102 = scmp.ne.s32.totalorder %s88, %s89
      %p103 = scmp.eq.s32.totalorder %s43, 3
      %p104 = por %p102, %p103
      %p106 = scmp.ne.s32.totalorder %s89, %s105
      %p107 = scmp.eq.s32.totalorder %s43, 0
      %p108 = por %p106, %p107
      %s109 = ssub.s32 %s45, %s52
      %p110 = scmp.eq.s32.totalorder %s109, 0
      %s112 = sadd.s32 %s111, 1
      %s113 = scalar_select %p110, %s111, %s112
      %p116 = pneg %p110
      %p117 = scmp.eq.s32.totalorder %s37, 3
      %p118 = por %p116, %p117
      %p119 = scmp.ne.s32.totalorder %s111, %s114
      %p120 = scmp.eq.s32.totalorder %s37, 0
      %p121 = por %p119, %p120
      %p122 = scmp.ne.s32.totalorder %s111, %s114
      %p123 = scmp.eq.s32.totalorder %s42, 3
      %p124 = por %p122, %p123
      %p125 = scmp.ne.s32.totalorder %s114, %s115
      %p126 = scmp.eq.s32.totalorder %s42, 0
      %p127 = por %p125, %p126
      %p128 = scmp.ne.s32.totalorder %s114, %s115
      %p129 = scmp.eq.s32.totalorder %s43, 3
      %p130 = por %p128, %p129
      %p132 = scmp.ne.s32.totalorder %s115, %s131
      %p133 = scmp.eq.s32.totalorder %s43, 0
      %p134 = por %p132, %p133
      %s135 = ssub.s32 %s45, %s52
      %p136 = scmp.eq.s32.totalorder %s135, 0
      %s138 = sadd.s32 %s137, 1
      %s139 = scalar_select %p136, %s137, %s138
      %p142 = pneg %p136
      %p143 = scmp.eq.s32.totalorder %s37, 3
      %p144 = por %p142, %p143
      %p145 = scmp.ne.s32.totalorder %s137, %s140
      %p146 = scmp.eq.s32.totalorder %s37, 0
      %p147 = por %p145, %p146
      %p148 = scmp.ne.s32.totalorder %s137, %s140
      %p149 = scmp.eq.s32.totalorder %s42, 3
      %p150 = por %p148, %p149
      %p151 = scmp.ne.s32.totalorder %s140, %s141
      %p152 = scmp.eq.s32.totalorder %s42, 0
      %p153 = por %p151, %p152
      %p154 = scmp.ne.s32.totalorder %s140, %s141
      %p155 = scmp.eq.s32.totalorder %s43, 3
      %p156 = por %p154, %p155
      %p158 = scmp.ne.s32.totalorder %s141, %s157
      %p159 = scmp.eq.s32.totalorder %s43, 0
      %p160 = por %p158, %p159
      %s161 = ssub.s32 %s45, %s52
      %p162 = scmp.eq.s32.totalorder %s161, 0
      %s164 = sadd.s32 %s163, 1
      %s165 = scalar_select %p162, %s163, %s164
      %p168 = pneg %p162
      %p169 = scmp.eq.s32.totalorder %s37, 3
      %p170 = por %p168, %p169
      %p171 = scmp.ne.s32.totalorder %s163, %s166
      %p172 = scmp.eq.s32.totalorder %s37, 0
      %p173 = por %p171, %p172
      %p174 = scmp.ne.s32.totalorder %s163, %s166
      %p175 = scmp.eq.s32.totalorder %s42, 3
      %p176 = por %p174, %p175
      %p177 = scmp.ne.s32.totalorder %s166, %s167
      %p178 = scmp.eq.s32.totalorder %s42, 0
      %p179 = por %p177, %p178
      %p180 = scmp.ne.s32.totalorder %s166, %s167
      %p181 = scmp.eq.s32.totalorder %s43, 3
      %p182 = por %p180, %p181
      %p184 = scmp.ne.s32.totalorder %s167, %s183
      %p185 = scmp.eq.s32.totalorder %s43, 0
      %p186 = por %p184, %p185
      %s187 = ssub.s32 %s45, %s52
      %p188 = scmp.eq.s32.totalorder %s187, 0
      %s190 = sadd.s32 %s189, 1
      %s191 = scalar_select %p188, %s189, %s190
      %p194 = pneg %p188
      %p195 = scmp.eq.s32.totalorder %s37, 3
      %p196 = por %p194, %p195
      %p197 = scmp.ne.s32.totalorder %s189, %s192
      %p198 = scmp.eq.s32.totalorder %s37, 0
      %p199 = por %p197, %p198
      %p200 = scmp.ne.s32.totalorder %s189, %s192
      %p201 = scmp.eq.s32.totalorder %s42, 3
      %p202 = por %p200, %p201
      %p203 = scmp.ne.s32.totalorder %s192, %s193
      %p204 = scmp.eq.s32.totalorder %s42, 0
      %p205 = por %p203, %p204
      %p206 = scmp.ne.s32.totalorder %s192, %s193
      %p207 = scmp.eq.s32.totalorder %s43, 3
      %p208 = por %p206, %p207
      %p210 = scmp.ne.s32.totalorder %s193, %s209
      %p211 = scmp.eq.s32.totalorder %s43, 0
      %p212 = por %p210, %p211
      %s213 = ssub.s32 %s45, %s52
      %p214 = scmp.eq.s32.totalorder %s213, 0
      %s216 = sadd.s32 %s215, 1
      %s217 = scalar_select %p214, %s215, %s216
      %p220 = pneg %p214
      %p221 = scmp.eq.s32.totalorder %s37, 3
      %p222 = por %p220, %p221
      %p223 = scmp.ne.s32.totalorder %s215, %s218
      %p224 = scmp.eq.s32.totalorder %s37, 0
      %p225 = por %p223, %p224
      %p226 = scmp.ne.s32.totalorder %s215, %s218
      %p227 = scmp.eq.s32.totalorder %s42, 3
      %p228 = por %p226, %p227
      %p229 = scmp.ne.s32.totalorder %s218, %s219
      %p230 = scmp.eq.s32.totalorder %s42, 0
      %p231 = por %p229, %p230
      %p232 = scmp.ne.s32.totalorder %s218, %s219
      %p233 = scmp.eq.s32.totalorder %s43, 3
      %p234 = por %p232, %p233
      %p236 = scmp.ne.s32.totalorder %s219, %s235
      %p237 = scmp.eq.s32.totalorder %s43, 0
      %p238 = por %p236, %p237
      %s239 = ssub.s32 %s45, %s52
      %p240 = scmp.eq.s32.totalorder %s239, 0
      %s242 = sadd.s32 %s241, 1
      %s243 = scalar_select %p240, %s241, %s242
      %p246 = pneg %p240
      %p247 = scmp.eq.s32.totalorder %s37, 3
      %p248 = por %p246, %p247
      %p249 = scmp.ne.s32.totalorder %s241, %s244
      %p250 = scmp.eq.s32.totalorder %s37, 0
      %p251 = por %p249, %p250
      %p252 = scmp.ne.s32.totalorder %s241, %s244
      %p253 = scmp.eq.s32.totalorder %s42, 3
      %p254 = por %p252, %p253
      %p255 = scmp.ne.s32.totalorder %s244, %s245
      %p256 = scmp.eq.s32.totalorder %s42, 0
      %p257 = por %p255, %p256
      %p258 = scmp.ne.s32.totalorder %s244, %s245
      %p259 = scmp.eq.s32.totalorder %s43, 3
      %p260 = por %p258, %p259
      %p262 = scmp.ne.s32.totalorder %s245, %s261
      %p263 = scmp.eq.s32.totalorder %s43, 0
      %p264 = por %p262, %p263
      %s265 = ssub.s32 %s45, %s52
      %p266 = scmp.eq.s32.totalorder %s265, 0
      %s268 = sadd.s32 %s267, 1
      %s269 = scalar_select %p266, %s267, %s268
      %p272 = pneg %p266
      %p273 = scmp.eq.s32.totalorder %s37, 3
      %p274 = por %p272, %p273
      %p275 = scmp.ne.s32.totalorder %s267, %s270
      %p276 = scmp.eq.s32.totalorder %s37, 0
      %p277 = por %p275, %p276
      %p278 = scmp.ne.s32.totalorder %s267, %s270
      %p279 = scmp.eq.s32.totalorder %s42, 3
      %p280 = por %p278, %p279
      %p281 = scmp.ne.s32.totalorder %s270, %s271
      %p282 = scmp.eq.s32.totalorder %s42, 0
      %p283 = por %p281, %p282
      %p284 = scmp.ne.s32.totalorder %s270, %s271
      %p285 = scmp.eq.s32.totalorder %s43, 3
      %p286 = por %p284, %p285
      %p288 = scmp.ne.s32.totalorder %s271, %s287
      %p289 = scmp.eq.s32.totalorder %s43, 0
      %p290 = por %p288, %p289
      %s291 = ssub.s32 %s45, %s52
      %p292 = scmp.eq.s32.totalorder %s291, 0
      %s294 = sadd.s32 %s293, 1
      %s295 = scalar_select %p292, %s293, %s294
      %p298 = pneg %p292
      %p299 = scmp.eq.s32.totalorder %s37, 3
      %p300 = por %p298, %p299
      %p301 = scmp.ne.s32.totalorder %s293, %s296
      %p302 = scmp.eq.s32.totalorder %s37, 0
      %p303 = por %p301, %p302
      %p304 = scmp.ne.s32.totalorder %s293, %s296
      %p305 = scmp.eq.s32.totalorder %s42, 3
      %p306 = por %p304, %p305
      %p307 = scmp.ne.s32.totalorder %s296, %s297
      %p308 = scmp.eq.s32.totalorder %s42, 0
      %p309 = por %p307, %p308
      %p310 = scmp.ne.s32.totalorder %s296, %s297
      %p311 = scmp.eq.s32.totalorder %s43, 3
      %p312 = por %p310, %p311
      %p314 = scmp.ne.s32.totalorder %s297, %s313
      %p315 = scmp.eq.s32.totalorder %s43, 0
      %p316 = por %p314, %p315
      %s317 = ssub.s32 %s45, %s52
      %p318 = scmp.eq.s32.totalorder %s317, 0
      %s320 = sadd.s32 %s319, 1
      %s321 = scalar_select %p318, %s319, %s320
      %p324 = pneg %p318
      %p325 = scmp.eq.s32.totalorder %s37, 3
      %p326 = por %p324, %p325
      %p327 = scmp.ne.s32.totalorder %s319, %s322
      %p328 = scmp.eq.s32.totalorder %s37, 0
      %p329 = por %p327, %p328
      %p330 = scmp.ne.s32.totalorder %s319, %s322
      %p331 = scmp.eq.s32.totalorder %s42, 3
      %p332 = por %p330, %p331
      %p333 = scmp.ne.s32.totalorder %s322, %s323
      %p334 = scmp.eq.s32.totalorder %s42, 0
      %p335 = por %p333, %p334
      %p336 = scmp.ne.s32.totalorder %s322, %s323
      %p337 = scmp.eq.s32.totalorder %s43, 3
      %p338 = por %p336, %p337
      %p340 = scmp.ne.s32.totalorder %s323, %s339
      %p341 = scmp.eq.s32.totalorder %s43, 0
      %p342 = por %p340, %p341
      %s343 = ssub.s32 %s45, %s52
      %p344 = scmp.eq.s32.totalorder %s343, 0
      %s346 = sadd.s32 %s345, 1
      %s347 = scalar_select %p344, %s345, %s346
      %p350 = pneg %p344
      %p351 = scmp.eq.s32.totalorder %s37, 3
      %p352 = por %p350, %p351
      %p353 = scmp.ne.s32.totalorder %s345, %s348
      %p354 = scmp.eq.s32.totalorder %s37, 0
      %p355 = por %p353, %p354
      %p356 = scmp.ne.s32.totalorder %s345, %s348
      %p357 = scmp.eq.s32.totalorder %s42, 3
      %p358 = por %p356, %p357
      %p359 = scmp.ne.s32.totalorder %s348, %s349
      %p360 = scmp.eq.s32.totalorder %s42, 0
      %p361 = por %p359, %p360
      %p362 = scmp.ne.s32.totalorder %s348, %s349
      %p363 = scmp.eq.s32.totalorder %s43, 3
      %p364 = por %p362, %p363
      %p366 = scmp.ne.s32.totalorder %s349, %s365
      %p367 = scmp.eq.s32.totalorder %s43, 0
      %p368 = por %p366, %p367
      %s369 = ssub.s32 %s45, %s52
      %p370 = scmp.eq.s32.totalorder %s369, 0
      %s372 = sadd.s32 %s371, 1
      %s373 = scalar_select %p370, %s371, %s372
      %p376 = pneg %p370
      %p377 = scmp.eq.s32.totalorder %s37, 3
      %p378 = por %p376, %p377
      %p379 = scmp.ne.s32.totalorder %s371, %s374
      %p380 = scmp.eq.s32.totalorder %s37, 0
      %p381 = por %p379, %p380
      %p382 = scmp.ne.s32.totalorder %s371, %s374
      %p383 = scmp.eq.s32.totalorder %s42, 3
      %p384 = por %p382, %p383
      %p385 = scmp.ne.s32.totalorder %s374, %s375
      %p386 = scmp.eq.s32.totalorder %s42, 0
      %p387 = por %p385, %p386
      %p388 = scmp.ne.s32.totalorder %s374, %s375
      %p389 = scmp.eq.s32.totalorder %s43, 3
      %p390 = por %p388, %p389
      %p392 = scmp.ne.s32.totalorder %s375, %s391
      %p393 = scmp.eq.s32.totalorder %s43, 0
      %p394 = por %p392, %p393
      %s395 = ssub.s32 %s45, %s52
      %p396 = scmp.eq.s32.totalorder %s395, 0
      %s398 = sadd.s32 %s397, 1
      %s399 = scalar_select %p396, %s397, %s398
      %p402 = pneg %p396
      %p403 = scmp.eq.s32.totalorder %s37, 3
      %p404 = por %p402, %p403
      %p405 = scmp.ne.s32.totalorder %s397, %s400
      %p406 = scmp.eq.s32.totalorder %s37, 0
      %p407 = por %p405, %p406
      %p408 = scmp.ne.s32.totalorder %s397, %s400
      %p409 = scmp.eq.s32.totalorder %s42, 3
      %p410 = por %p408, %p409
      %p411 = scmp.ne.s32.totalorder %s400, %s401
      %p412 = scmp.eq.s32.totalorder %s42, 0
      %p413 = por %p411, %p412
      %p414 = scmp.ne.s32.totalorder %s400, %s401
      %p415 = scmp.eq.s32.totalorder %s43, 3
      %p416 = por %p414, %p415
      %p418 = scmp.ne.s32.totalorder %s401, %s417
      %p419 = scmp.eq.s32.totalorder %s43, 0
      %p420 = por %p418, %p419
      %s421 = ssub.s32 %s45, %s52
      %p422 = scmp.eq.s32.totalorder %s421, 0
      %s424 = sadd.s32 %s423, 1
      %s425 = scalar_select %p422, %s423, %s424
      %p428 = pneg %p422
      %p429 = scmp.eq.s32.totalorder %s37, 3
      %p430 = por %p428, %p429
      %p431 = scmp.ne.s32.totalorder %s423, %s426
      %p432 = scmp.eq.s32.totalorder %s37, 0
      %p433 = por %p431, %p432
      %p434 = scmp.ne.s32.totalorder %s423, %s426
      %p435 = scmp.eq.s32.totalorder %s42, 3
      %p436 = por %p434, %p435
      %p437 = scmp.ne.s32.totalorder %s426, %s427
      %p438 = scmp.eq.s32.totalorder %s42, 0
      %p439 = por %p437, %p438
      %p440 = scmp.ne.s32.totalorder %s426, %s427
      %p441 = scmp.eq.s32.totalorder %s43, 3
      %p442 = por %p440, %p441
      %p444 = scmp.ne.s32.totalorder %s427, %s443
      %p445 = scmp.eq.s32.totalorder %s43, 0
      %p446 = por %p444, %p445
      %s447 = ssub.s32 %s45, %s52
      %p448 = scmp.eq.s32.totalorder %s447, 0
      %s450 = sadd.s32 %s449, 1
      %s451 = scalar_select %p448, %s449, %s450
      %p454 = pneg %p448
      %p455 = scmp.eq.s32.totalorder %s37, 3
      %p456 = por %p454, %p455
      %p457 = scmp.ne.s32.totalorder %s449, %s452
      %p458 = scmp.eq.s32.totalorder %s37, 0
      %p459 = por %p457, %p458
      %p460 = scmp.ne.s32.totalorder %s449, %s452
      %p461 = scmp.eq.s32.totalorder %s42, 3
      %p462 = por %p460, %p461
      %p463 = scmp.ne.s32.totalorder %s452, %s453
      %p464 = scmp.eq.s32.totalorder %s42, 0
      %p465 = por %p463, %p464
      %p466 = scmp.ne.s32.totalorder %s452, %s453
      %p467 = scmp.eq.s32.totalorder %s43, 3
      %p468 = por %p466, %p467
      %p470 = scmp.ne.s32.totalorder %s453, %s469
      %p471 = scmp.eq.s32.totalorder %s43, 0
      %p472 = por %p470, %p471
      %s473 = ssub.s32 %s45, %s52
      %p474 = scmp.eq.s32.totalorder %s473, 0
      %s476 = sadd.s32 %s475, 1
      %s477 = scalar_select %p474, %s475, %s476
      %p480 = pneg %p474
      %p481 = scmp.eq.s32.totalorder %s37, 3
      %p482 = por %p480, %p481
      %p483 = scmp.ne.s32.totalorder %s475, %s478
      %p484 = scmp.eq.s32.totalorder %s37, 0
      %p485 = por %p483, %p484
      %p486 = scmp.ne.s32.totalorder %s475, %s478
      %p487 = scmp.eq.s32.totalorder %s42, 3
      %p488 = por %p486, %p487
      %p489 = scmp.ne.s32.totalorder %s478, %s479
      %p490 = scmp.eq.s32.totalorder %s42, 0
      %p491 = por %p489, %p490
      %p492 = scmp.ne.s32.totalorder %s478, %s479
      %p493 = scmp.eq.s32.totalorder %s43, 3
      %p494 = por %p492, %p493
      %p496 = scmp.ne.s32.totalorder %s479, %s495
      %p497 = scmp.eq.s32.totalorder %s43, 0
      %p498 = por %p496, %p497
      %s499 = ssub.s32 %s45, %s52
      %p500 = scmp.eq.s32.totalorder %s499, 0
      %s502 = sadd.s32 %s501, 1
      %s503 = scalar_select %p500, %s501, %s502
      %p506 = pneg %p500
      %p507 = scmp.eq.s32.totalorder %s37, 3
      %p508 = por %p506, %p507
      %p509 = scmp.ne.s32.totalorder %s501, %s504
      %p510 = scmp.eq.s32.totalorder %s37, 0
      %p511 = por %p509, %p510
      %p512 = scmp.ne.s32.totalorder %s501, %s504
      %p513 = scmp.eq.s32.totalorder %s42, 3
      %p514 = por %p512, %p513
      %p515 = scmp.ne.s32.totalorder %s504, %s505
      %p516 = scmp.eq.s32.totalorder %s42, 0
      %p517 = por %p515, %p516
      %p518 = scmp.ne.s32.totalorder %s504, %s505
      %p519 = scmp.eq.s32.totalorder %s43, 3
      %p520 = por %p518, %p519
      %p522 = scmp.ne.s32.totalorder %s505, %s521
      %p523 = scmp.eq.s32.totalorder %s43, 0
      %p524 = por %p522, %p523
      %s525 = ssub.s32 %s45, %s52
      %p526 = scmp.eq.s32.totalorder %s525, 0
      %s528 = sadd.s32 %s527, 1
      %s529 = scalar_select %p526, %s527, %s528
      %p532 = pneg %p526
      %p533 = scmp.eq.s32.totalorder %s37, 3
      %p534 = por %p532, %p533
      %p535 = scmp.ne.s32.totalorder %s527, %s530
      %p536 = scmp.eq.s32.totalorder %s37, 0
      %p537 = por %p535, %p536
      %p538 = scmp.ne.s32.totalorder %s527, %s530
      %p539 = scmp.eq.s32.totalorder %s42, 3
      %p540 = por %p538, %p539
      %p541 = scmp.ne.s32.totalorder %s530, %s531
      %p542 = scmp.eq.s32.totalorder %s42, 0
      %p543 = por %p541, %p542
      %p544 = scmp.ne.s32.totalorder %s530, %s531
      %p545 = scmp.eq.s32.totalorder %s43, 3
      %p546 = por %p544, %p545
      %p548 = scmp.ne.s32.totalorder %s531, %s547
      %p549 = scmp.eq.s32.totalorder %s43, 0
      %p550 = por %p548, %p549
      %s551 = ssub.s32 %s45, %s52
      %p552 = scmp.eq.s32.totalorder %s551, 0
      %s554 = sadd.s32 %s553, 1
      %s555 = scalar_select %p552, %s553, %s554
      %p558 = pneg %p552
      %p559 = scmp.eq.s32.totalorder %s37, 3
      %p560 = por %p558, %p559
      %p561 = scmp.ne.s32.totalorder %s553, %s556
      %p562 = scmp.eq.s32.totalorder %s37, 0
      %p563 = por %p561, %p562
      %p564 = scmp.ne.s32.totalorder %s553, %s556
      %p565 = scmp.eq.s32.totalorder %s42, 3
      %p566 = por %p564, %p565
      %p567 = scmp.ne.s32.totalorder %s556, %s557
      %p568 = scmp.eq.s32.totalorder %s42, 0
      %p569 = por %p567, %p568
      %p570 = scmp.ne.s32.totalorder %s556, %s557
      %p571 = scmp.eq.s32.totalorder %s43, 3
      %p572 = por %p570, %p571
      %p574 = scmp.ne.s32.totalorder %s557, %s573
      %p575 = scmp.eq.s32.totalorder %s43, 0
      %p576 = por %p574, %p575
      %s577 = ssub.s32 %s45, %s52
      %p578 = scmp.eq.s32.totalorder %s577, 0
      %s580 = sadd.s32 %s579, 1
      %s581 = scalar_select %p578, %s579, %s580
      %p584 = pneg %p578
      %p585 = scmp.eq.s32.totalorder %s37, 3
      %p586 = por %p584, %p585
      %p587 = scmp.ne.s32.totalorder %s579, %s582
      %p588 = scmp.eq.s32.totalorder %s37, 0
      %p589 = por %p587, %p588
      %p590 = scmp.ne.s32.totalorder %s579, %s582
      %p591 = scmp.eq.s32.totalorder %s42, 3
      %p592 = por %p590, %p591
      %p593 = scmp.ne.s32.totalorder %s582, %s583
      %p594 = scmp.eq.s32.totalorder %s42, 0
      %p595 = por %p593, %p594
      %p596 = scmp.ne.s32.totalorder %s582, %s583
      %p597 = scmp.eq.s32.totalorder %s43, 3
      %p598 = por %p596, %p597
      %p600 = scmp.ne.s32.totalorder %s583, %s599
      %p601 = scmp.eq.s32.totalorder %s43, 0
      %p602 = por %p600, %p601
      %s603 = ssub.s32 %s45, %s52
      %p604 = scmp.eq.s32.totalorder %s603, 0
      %s606 = sadd.s32 %s605, 1
      %s607 = scalar_select %p604, %s605, %s606
      %p610 = pneg %p604
      %p611 = scmp.eq.s32.totalorder %s37, 3
      %p612 = por %p610, %p611
      %p613 = scmp.ne.s32.totalorder %s605, %s608
      %p614 = scmp.eq.s32.totalorder %s37, 0
      %p615 = por %p613, %p614
      %p616 = scmp.ne.s32.totalorder %s605, %s608
      %p617 = scmp.eq.s32.totalorder %s42, 3
      %p618 = por %p616, %p617
      %p619 = scmp.ne.s32.totalorder %s608, %s609
      %p620 = scmp.eq.s32.totalorder %s42, 0
      %p621 = por %p619, %p620
      %p622 = scmp.ne.s32.totalorder %s608, %s609
      %p623 = scmp.eq.s32.totalorder %s43, 3
      %p624 = por %p622, %p623
      %p626 = scmp.ne.s32.totalorder %s609, %s625
      %p627 = scmp.eq.s32.totalorder %s43, 0
      %p628 = por %p626, %p627
      %s629 = ssub.s32 %s44, %s56
      %p630 = scmp.eq.s32.totalorder %s629, 0
      %s632 = sadd.s32 %s631, 1
      %s633 = scalar_select %p630, %s631, %s632
      %p636 = pneg %p630
      %p637 = scmp.eq.s32.totalorder %s37, 3
      %p638 = por %p636, %p637
      %p639 = scmp.ne.s32.totalorder %s631, %s634
      %p640 = scmp.eq.s32.totalorder %s37, 0
      %p641 = por %p639, %p640
      %p642 = scmp.ne.s32.totalorder %s631, %s634
      %p643 = scmp.eq.s32.totalorder %s42, 3
      %p644 = por %p642, %p643
      %p645 = scmp.ne.s32.totalorder %s634, %s635
      %p646 = scmp.eq.s32.totalorder %s42, 0
      %p647 = por %p645, %p646
      %p648 = scmp.ne.s32.totalorder %s634, %s635
      %p649 = scmp.eq.s32.totalorder %s43, 3
      %p650 = por %p648, %p649
      %p652 = scmp.ne.s32.totalorder %s635, %s651
      %p653 = scmp.eq.s32.totalorder %s43, 0
      %p654 = por %p652, %p653
      %s655 = ssub.s32 %s45, %s52
      %s656 = ssub.s32 %s44, %s56
      %s657 = sor.u32 %s655, %s656
      %p658 = scmp.eq.s32.totalorder %s657, 0
      %s660 = sadd.s32 %s659, 1
      %s661 = scalar_select %p658, %s659, %s660
      %p664 = pneg %p658
      %p665 = scmp.eq.s32.totalorder %s37, 3
      %p666 = por %p664, %p665
      %p667 = scmp.ne.s32.totalorder %s659, %s662
      %p668 = scmp.eq.s32.totalorder %s37, 0
      %p669 = por %p667, %p668
      %p670 = scmp.ne.s32.totalorder %s659, %s662
      %p671 = scmp.eq.s32.totalorder %s42, 3
      %p672 = por %p670, %p671
      %p673 = scmp.ne.s32.totalorder %s662, %s663
      %p674 = scmp.eq.s32.totalorder %s42, 0
      %p675 = por %p673, %p674
      %p676 = scmp.ne.s32.totalorder %s662, %s663
      %p677 = scmp.eq.s32.totalorder %s43, 3
      %p678 = por %p676, %p677
      %p680 = scmp.ne.s32.totalorder %s663, %s679
      %p681 = scmp.eq.s32.totalorder %s43, 0
      %p682 = por %p680, %p681
      %s683 = ssub.s32 %s45, %s52
      %s684 = ssub.s32 %s44, %s56
      %s685 = sor.u32 %s683, %s684
      %p686 = scmp.eq.s32.totalorder %s685, 0
      %s688 = sadd.s32 %s687, 1
      %s689 = scalar_select %p686, %s687, %s688
      %p692 = pneg %p686
      %p693 = scmp.eq.s32.totalorder %s37, 3
      %p694 = por %p692, %p693
      %p695 = scmp.ne.s32.totalorder %s687, %s690
      %p696 = scmp.eq.s32.totalorder %s37, 0
      %p697 = por %p695, %p696
      %p698 = scmp.ne.s32.totalorder %s687, %s690
      %p699 = scmp.eq.s32.totalorder %s42, 3
      %p700 = por %p698, %p699
      %p701 = scmp.ne.s32.totalorder %s690, %s691
      %p702 = scmp.eq.s32.totalorder %s42, 0
      %p703 = por %p701, %p702
      %p704 = scmp.ne.s32.totalorder %s690, %s691
      %p705 = scmp.eq.s32.totalorder %s43, 3
      %p706 = por %p704, %p705
      %p708 = scmp.ne.s32.totalorder %s691, %s707
      %p709 = scmp.eq.s32.totalorder %s43, 0
      %p710 = por %p708, %p709
      %p711 = scmp.le.s32.totalorder 1, %s37
      %p712 = scmp.lt.s32.totalorder %s37, 5
      %p713 = pnand %p711, %p712
      %p714 = pneg %p713
      // Predicated region
      $region9: #{decoder_forward.4} parent=5 // pred_check
        _
      $region10: #{decoder_forward.4} parent=5 // pred_check_branch
        %716 = sbr.rel (%p713) target = $region12
      $region11: #{decoder_forward.4} parent=5 // pred_region
        %s717 = ssub.s32 %s37, 1
      $region12: #{decoder_forward.4} parent=5 // pred_fallthru
        _
      %p718 = scmp.lt.s32.totalorder %s37, 4
      // Predicated region
      $region13: #{decoder_forward.4} parent=5 // pred_check
        %p719 = pneg %p718
      $region14: #{decoder_forward.4} parent=5 // pred_check_branch
        %721 = sbr.rel (%p719) target = $region16
      $region15: #{decoder_forward.4} parent=5 // pred_region
        // Predicated region
        $region17: #{decoder_forward.4} parent=15 // pred_check
          %p722 = pneg %p69
        $region18: #{decoder_forward.4} parent=15 // pred_check_branch
          %724 = sbr.rel (%p722) target = $region20
        $region19: #{decoder_forward.4} parent=15 // pred_region
          %p725 = scmp.lt.s32.totalorder %s44, 1
          %s726 = scalar_select %p725, %s44, 1
          %s727 = smul.addr %s726, 8
          %s728 = scalar_lea.vmem %s0, %s727
        $region20: #{decoder_forward.4} parent=15 // pred_fallthru
          _
        // Predicated region
        $region21: #{decoder_forward.4} parent=15 // pred_check
          %p729 = pneg %p95
        $region22: #{decoder_forward.4} parent=15 // pred_check_branch
          %731 = sbr.rel (%p729) target = $region24
        $region23: #{decoder_forward.4} parent=15 // pred_region
          %p732 = scmp.lt.s32.totalorder %s44, 1
          %s733 = scalar_select %p732, %s44, 1
          %s734 = smul.addr %s733, 2
          %s735 = smul.addr %s734, 8
          %s736 = scalar_lea.vmem %s1, %s735
        $region24: #{decoder_forward.4} parent=15 // pred_fallthru
          _
        // Predicated region
        $region25: #{decoder_forward.4} parent=15 // pred_check
          %p737 = pneg %p121
        $region26: #{decoder_forward.4} parent=15 // pred_check_branch
          %739 = sbr.rel (%p737) target = $region28
        $region27: #{decoder_forward.4} parent=15 // pred_region
          %p740 = scmp.lt.s32.totalorder %s45, 1
          %s741 = scalar_select %p740, %s45, 1
          %s742 = scalar_lea.vmem %s2, %s741
        $region28: #{decoder_forward.4} parent=15 // pred_fallthru
          _
        // Predicated region
        $region29: #{decoder_forward.4} parent=15 // pred_check
          %p743 = pneg %p147
        $region30: #{decoder_forward.4} parent=15 // pred_check_branch
          %745 = sbr.rel (%p743) target = $region32
        $region31: #{decoder_forward.4} parent=15 // pred_region
          %p746 = scmp.lt.s32.totalorder %s45, 1
          %s747 = scalar_select %p746, %s45, 1
          %s748 = scalar_lea.vmem %s3, %s747
        $region32: #{decoder_forward.4} parent=15 // pred_fallthru
          _
        // Predicated region
        $region33: #{decoder_forward.4} parent=15 // pred_check
          %p749 = pneg %p173
        $region34: #{decoder_forward.4} parent=15 // pred_check_branch
          %751 = sbr.rel (%p749) target = $region36
        $region35: #{decoder_forward.4} parent=15 // pred_region
          %p752 = scmp.lt.s32.totalorder %s45, 1
          %s753 = scalar_select %p752, %s45, 1
          %s754 = smul.addr %s753, 48
          %s755 = smul.addr %s754, 4
          %s756 = scalar_lea.vmem %s4, %s755
        $region36: #{decoder_forward.4} parent=15 // pred_fallthru
          _
        // Predicated region
        $region37: #{decoder_forward.4} parent=15 // pred_check
          %p757 = pneg %p199
        $region38: #{decoder_forward.4} parent=15 // pred_check_branch
          %759 = sbr.rel (%p757) target = $region40
        $region39: #{decoder_forward.4} parent=15 // pred_region
          %p760 = scmp.lt.s32.totalorder %s45, 1
          %s761 = scalar_select %p760, %s45, 1
          %s762 = smul.addr %s761, 3
          %s763 = scalar_lea.vmem %s5, %s762
        $region40: #{decoder_forward.4} parent=15 // pred_fallthru
          _
        // Predicated region
        $region41: #{decoder_forward.4} parent=15 // pred_check
          %p764 = pneg %p225
        $region42: #{decoder_forward.4} parent=15 // pred_check_branch
          %766 = sbr.rel (%p764) target = $region44
        $region43: #{decoder_forward.4} parent=15 // pred_region
          %p767 = scmp.lt.s32.totalorder %s45, 1
          %s768 = scalar_select %p767, %s45, 1
          %s769 = smul.addr %s768, 16
          %s770 = smul.addr %s769, 4
          %s771 = scalar_lea.vmem %s6, %s770
        $region44: #{decoder_forward.4} parent=15 // pred_fallthru
          _
        // Predicated region
        $region45: #{decoder_forward.4} parent=15 // pred_check
          %p772 = pneg %p251
        $region46: #{decoder_forward.4} parent=15 // pred_check_branch
          %774 = sbr.rel (%p772) target = $region48
        $region47: #{decoder_forward.4} parent=15 // pred_region
          %p775 = scmp.lt.s32.totalorder %s45, 1
          %s776 = scalar_select %p775, %s45, 1
          %s777 = scalar_lea.vmem %s7, %s776
        $region48: #{decoder_forward.4} parent=15 // pred_fallthru
          _
        // Predicated region
        $region49: #{decoder_forward.4} parent=15 // pred_check
          %p778 = pneg %p277
        $region50: #{decoder_forward.4} parent=15 // pred_check_branch
          %780 = sbr.rel (%p778) target = $region52
        $region51: #{decoder_forward.4} parent=15 // pred_region
          %p781 = scmp.lt.s32.totalorder %s45, 1
          %s782 = scalar_select %p781, %s45, 1
          %s783 = scalar_lea.vmem %s8, %s782
        $region52: #{decoder_forward.4} parent=15 // pred_fallthru
          _
        // Predicated region
        $region53: #{decoder_forward.4} parent=15 // pred_check
          %p784 = pneg %p303
        $region54: #{decoder_forward.4} parent=15 // pred_check_branch
          %786 = sbr.rel (%p784) target = $region56
        $region55: #{decoder_forward.4} parent=15 // pred_region
          %p787 = scmp.lt.s32.totalorder %s45, 1
          %s788 = scalar_select %p787, %s45, 1
          %s789 = scalar_lea.vmem %s9, %s788
        $region56: #{decoder_forward.4} parent=15 // pred_fallthru
          _
        // Predicated region
        $region57: #{decoder_forward.4} parent=15 // pred_check
          %p790 = pneg %p329
        $region58: #{decoder_forward.4} parent=15 // pred_check_branch
          %792 = sbr.rel (%p790) target = $region60
        $region59: #{decoder_forward.4} parent=15 // pred_region
          %p793 = scmp.lt.s32.totalorder %s45, 1
          %s794 = scalar_select %p793, %s45, 1
          %s795 = smul.addr %s794, 16
          %s796 = smul.addr %s795, 4
          %s797 = scalar_lea.vmem %s10, %s796
        $region60: #{decoder_forward.4} parent=15 // pred_fallthru
          _
        // Predicated region
        $region61: #{decoder_forward.4} parent=15 // pred_check
          %p798 = pneg %p355
        $region62: #{decoder_forward.4} parent=15 // pred_check_branch
          %800 = sbr.rel (%p798) target = $region64
        $region63: #{decoder_forward.4} parent=15 // pred_region
          %p801 = scmp.lt.s32.totalorder %s45, 1
          %s802 = scalar_select %p801, %s45, 1
          %s803 = scalar_lea.vmem %s11, %s802
        $region64: #{decoder_forward.4} parent=15 // pred_fallthru
          _
        // Predicated region
        $region65: #{decoder_forward.4} parent=15 // pred_check
          %p804 = pneg %p381
        $region66: #{decoder_forward.4} parent=15 // pred_check_branch
          %806 = sbr.rel (%p804) target = $region68
        $region67: #{decoder_forward.4} parent=15 // pred_region
          %p807 = scmp.lt.s32.totalorder %s45, 1
          %s808 = scalar_select %p807, %s45, 1
          %s809 = smul.addr %s808, 32
          %s810 = smul.addr %s809, 4
          %s811 = scalar_lea.vmem %s12, %s810
        $region68: #{decoder_forward.4} parent=15 // pred_fallthru
          _
        // Predicated region
        $region69: #{decoder_forward.4} parent=15 // pred_check
          %p812 = pneg %p407
        $region70: #{decoder_forward.4} parent=15 // pred_check_branch
          %814 = sbr.rel (%p812) target = $region72
        $region71: #{decoder_forward.4} parent=15 // pred_region
          %p815 = scmp.lt.s32.totalorder %s45, 1
          %s816 = scalar_select %p815, %s45, 1
          %s817 = smul.addr %s816, 2
          %s818 = scalar_lea.vmem %s13, %s817
        $region72: #{decoder_forward.4} parent=15 // pred_fallthru
          _
        // Predicated region
        $region73: #{decoder_forward.4} parent=15 // pred_check
          %p819 = pneg %p433
        $region74: #{decoder_forward.4} parent=15 // pred_check_branch
          %821 = sbr.rel (%p819) target = $region76
        $region75: #{decoder_forward.4} parent=15 // pred_region
          %p822 = scmp.lt.s32.totalorder %s45, 1
          %s823 = scalar_select %p822, %s45, 1
          %s824 = smul.addr %s823, 16
          %s825 = smul.addr %s824, 4
          %s826 = scalar_lea.vmem %s14, %s825
        $region76: #{decoder_forward.4} parent=15 // pred_fallthru
          _
        // Predicated region
        $region77: #{decoder_forward.4} parent=15 // pred_check
          %p827 = pneg %p459
        $region78: #{decoder_forward.4} parent=15 // pred_check_branch
          %829 = sbr.rel (%p827) target = $region80
        $region79: #{decoder_forward.4} parent=15 // pred_region
          %p830 = scmp.lt.s32.totalorder %s45, 1
          %s831 = scalar_select %p830, %s45, 1
          %s832 = scalar_lea.vmem %s15, %s831
        $region80: #{decoder_forward.4} parent=15 // pred_fallthru
          _
        // Predicated region
        $region81: #{decoder_forward.4} parent=15 // pred_check
          %p833 = pneg %p485
        $region82: #{decoder_forward.4} parent=15 // pred_check_branch
          %835 = sbr.rel (%p833) target = $region84
        $region83: #{decoder_forward.4} parent=15 // pred_region
          %p836 = scmp.lt.s32.totalorder %s45, 1
          %s837 = scalar_select %p836, %s45, 1
          %s838 = scalar_lea.vmem %s16, %s837
        $region84: #{decoder_forward.4} parent=15 // pred_fallthru
          _
        // Predicated region
        $region85: #{decoder_forward.4} parent=15 // pred_check
          %p839 = pneg %p511
        $region86: #{decoder_forward.4} parent=15 // pred_check_branch
          %841 = sbr.rel (%p839) target = $region88
        $region87: #{decoder_forward.4} parent=15 // pred_region
          %p842 = scmp.lt.s32.totalorder %s45, 1
          %s843 = scalar_select %p842, %s45, 1
          %s844 = scalar_lea.vmem %s17, %s843
        $region88: #{decoder_forward.4} parent=15 // pred_fallthru
          _
        // Predicated region
        $region89: #{decoder_forward.4} parent=15 // pred_check
          %p845 = pneg %p537
        $region90: #{decoder_forward.4} parent=15 // pred_check_branch
          %847 = sbr.rel (%p845) target = $region92
        $region91: #{decoder_forward.4} parent=15 // pred_region
          %p848 = scmp.lt.s32.totalorder %s45, 1
          %s849 = scalar_select %p848, %s45, 1
          %s850 = smul.addr %s849, 160
          %s851 = smul.addr %s850, 4
          %s852 = scalar_lea.vmem %s18, %s851
        $region92: #{decoder_forward.4} parent=15 // pred_fallthru
          _
        // Predicated region
        $region93: #{decoder_forward.4} parent=15 // pred_check
          %p853 = pneg %p563
        $region94: #{decoder_forward.4} parent=15 // pred_check_branch
          %855 = sbr.rel (%p853) target = $region96
        $region95: #{decoder_forward.4} parent=15 // pred_region
          %p856 = scmp.lt.s32.totalorder %s45, 1
          %s857 = scalar_select %p856, %s45, 1
          %s858 = smul.addr %s857, 2
          %s859 = scalar_lea.vmem %s19, %s858
        $region96: #{decoder_forward.4} parent=15 // pred_fallthru
          _
        // Predicated region
        $region97: #{decoder_forward.4} parent=15 // pred_check
          %p860 = pneg %p589
        $region98: #{decoder_forward.4} parent=15 // pred_check_branch
          %862 = sbr.rel (%p860) target = $region100
        $region99: #{decoder_forward.4} parent=15 // pred_region
          %p863 = scmp.lt.s32.totalorder %s45, 1
          %s864 = scalar_select %p863, %s45, 1
          %s865 = smul.addr %s864, 32
          %s866 = smul.addr %s865, 4
          %s867 = scalar_lea.vmem %s20, %s866
        $region100: #{decoder_forward.4} parent=15 // pred_fallthru
          _
        // Predicated region
        $region101: #{decoder_forward.4} parent=15 // pred_check
          %p868 = pneg %p615
        $region102: #{decoder_forward.4} parent=15 // pred_check_branch
          %870 = sbr.rel (%p868) target = $region104
        $region103: #{decoder_forward.4} parent=15 // pred_region
          %p871 = scmp.lt.s32.totalorder %s45, 1
          %s872 = scalar_select %p871, %s45, 1
          %s873 = scalar_lea.vmem %s21, %s872
        $region104: #{decoder_forward.4} parent=15 // pred_fallthru
          _
      $region16: #{decoder_forward.4} parent=5 // pred_fallthru
        _
      %p874 = scmp.le.s32.totalorder 1, %s37
      %p875 = scmp.lt.s32.totalorder %s37, 5
      %p876 = pnand %p874, %p875
      %p877 = pneg %p876
      // Predicated region
      $region105: #{decoder_forward.4} parent=5 // pred_check
        _
      $region106: #{decoder_forward.4} parent=5 // pred_check_branch
        %879 = sbr.rel (%p876) target = $region108
      $region107: #{decoder_forward.4} parent=5 // pred_region
        %s880 = ssub.s32 %s37, 1
        %p881 = scmp.lt.s32.totalorder %s46, 1
        %s882 = scalar_select %p881, %s46, 1
        %s883 = smul.addr %s882, 8
        %s884 = scalar_lea.vmem %s0, %s883
        %p885 = pneg %p75
        %p886 = pneg %p72
        %p887 = scmp.lt.s32.totalorder %s46, 1
        %s888 = scalar_select %p887, %s46, 1
        %s889 = smul.addr %s888, 2
        %s890 = smul.addr %s889, 8
        %s891 = scalar_lea.vmem %s1, %s890
        %p892 = pneg %p101
        %p893 = pneg %p98
        %p894 = scmp.lt.s32.totalorder %s47, 1
        %s895 = scalar_select %p894, %s47, 1
        %s896 = scalar_lea.vmem %s2, %s895
        %p897 = pneg %p127
        %p898 = pneg %p124
        %p899 = scmp.lt.s32.totalorder %s47, 1
        %s900 = scalar_select %p899, %s47, 1
        %s901 = scalar_lea.vmem %s3, %s900
        %p902 = pneg %p153
        %p903 = pneg %p150
        %p904 = scmp.lt.s32.totalorder %s47, 1
        %s905 = scalar_select %p904, %s47, 1
        %s906 = smul.addr %s905, 48
        %s907 = smul.addr %s906, 4
        %s908 = scalar_lea.vmem %s4, %s907
        %p909 = pneg %p179
        %p910 = pneg %p176
        %p911 = scmp.lt.s32.totalorder %s47, 1
        %s912 = scalar_select %p911, %s47, 1
        %s913 = smul.addr %s912, 3
        %s914 = scalar_lea.vmem %s5, %s913
        %p915 = pneg %p205
        %p916 = pneg %p202
        %p917 = scmp.lt.s32.totalorder %s47, 1
        %s918 = scalar_select %p917, %s47, 1
        %s919 = smul.addr %s918, 16
        %s920 = smul.addr %s919, 4
        %s921 = scalar_lea.vmem %s6, %s920
        %p922 = pneg %p231
        %p923 = pneg %p228
        %p924 = scmp.lt.s32.totalorder %s47, 1
        %s925 = scalar_select %p924, %s47, 1
        %s926 = scalar_lea.vmem %s7, %s925
        %p927 = pneg %p257
        %p928 = pneg %p254
        %p929 = scmp.lt.s32.totalorder %s47, 1
        %s930 = scalar_select %p929, %s47, 1
        %s931 = scalar_lea.vmem %s8, %s930
        %p932 = pneg %p283
        %p933 = pneg %p280
        %p934 = scmp.lt.s32.totalorder %s47, 1
        %s935 = scalar_select %p934, %s47, 1
        %s936 = scalar_lea.vmem %s9, %s935
        %p937 = pneg %p309
        %p938 = pneg %p306
        %p939 = scmp.lt.s32.totalorder %s47, 1
        %s940 = scalar_select %p939, %s47, 1
        %s941 = smul.addr %s940, 16
        %s942 = smul.addr %s941, 4
        %s943 = scalar_lea.vmem %s10, %s942
        %p944 = pneg %p335
        %p945 = pneg %p332
        %p946 = scmp.lt.s32.totalorder %s47, 1
        %s947 = scalar_select %p946, %s47, 1
        %s948 = scalar_lea.vmem %s11, %s947
        %p949 = pneg %p361
        %p950 = pneg %p358
        %p951 = scmp.lt.s32.totalorder %s47, 1
        %s952 = scalar_select %p951, %s47, 1
        %s953 = smul.addr %s952, 32
        %s954 = smul.addr %s953, 4
        %s955 = scalar_lea.vmem %s12, %s954
        %p956 = pneg %p387
        %p957 = pneg %p384
        %p958 = scmp.lt.s32.totalorder %s47, 1
        %s959 = scalar_select %p958, %s47, 1
        %s960 = smul.addr %s959, 2
        %s961 = scalar_lea.vmem %s13, %s960
        %p962 = pneg %p413
        %p963 = pneg %p410
        %p964 = scmp.lt.s32.totalorder %s47, 1
        %s965 = scalar_select %p964, %s47, 1
        %s966 = smul.addr %s965, 16
        %s967 = smul.addr %s966, 4
        %s968 = scalar_lea.vmem %s14, %s967
        %p969 = pneg %p439
        %p970 = pneg %p436
        %p971 = scmp.lt.s32.totalorder %s47, 1
        %s972 = scalar_select %p971, %s47, 1
        %s973 = scalar_lea.vmem %s15, %s972
        %p974 = pneg %p465
        %p975 = pneg %p462
        %p976 = scmp.lt.s32.totalorder %s47, 1
        %s977 = scalar_select %p976, %s47, 1
        %s978 = scalar_lea.vmem %s16, %s977
        %p979 = pneg %p491
        %p980 = pneg %p488
        %p981 = scmp.lt.s32.totalorder %s47, 1
        %s982 = scalar_select %p981, %s47, 1
        %s983 = scalar_lea.vmem %s17, %s982
        %p984 = pneg %p517
        %p985 = pneg %p514
        %p986 = scmp.lt.s32.totalorder %s47, 1
        %s987 = scalar_select %p986, %s47, 1
        %s988 = smul.addr %s987, 160
        %s989 = smul.addr %s988, 4
        %s990 = scalar_lea.vmem %s18, %s989
        %p991 = pneg %p543
        %p992 = pneg %p540
        %p993 = scmp.lt.s32.totalorder %s47, 1
        %s994 = scalar_select %p993, %s47, 1
        %s995 = smul.addr %s994, 2
        %s996 = scalar_lea.vmem %s19, %s995
        %p997 = pneg %p569
        %p998 = pneg %p566
        %p999 = scmp.lt.s32.totalorder %s47, 1
        %s1000 = scalar_select %p999, %s47, 1
        %s1001 = smul.addr %s1000, 32
        %s1002 = smul.addr %s1001, 4
        %s1003 = scalar_lea.vmem %s20, %s1002
        %p1004 = pneg %p595
        %p1005 = pneg %p592
        %p1006 = scmp.lt.s32.totalorder %s47, 1
        %s1007 = scalar_select %p1006, %s47, 1
        %s1008 = scalar_lea.vmem %s21, %s1007
        %p1009 = pneg %p621
        %p1010 = pneg %p618
        %p1011 = pneg %p647
        %p1012 = pneg %p644
        %p1013 = scmp.lt.s32.totalorder %s46, 1
        %s1014 = scalar_select %p1013, %s46, 1
        %s1015 = smul.addr %s1014, 4
        %s1016 = scalar_lea.vmem %s22, %s1015
        %p1017 = pneg %p675
        %p1018 = pneg %p672
        %s1019 = sand.u32 %s662, 1
        %s1020 = scalar_lea.sflag [#allocation4], %s1019
        %s1021 = sand.u32 %s662, 1
        %s1022 = smul.addr %s1021, 32
        %s1023 = scalar_lea.vmem [#allocation3], %s1022
        %p1024 = pneg %p703
        %p1025 = pneg %p700
        %s1026 = sand.u32 %s690, 1
        %s1027 = scalar_lea.sflag [#allocation6], %s1026
        %s1028 = sand.u32 %s690, 1
        %s1029 = smul.addr %s1028, 32
        %s1030 = scalar_lea.vmem [#allocation5], %s1029
        %p1031 = scmp.lt.s32.totalorder %s46, 1
        %s1032 = scalar_select %p1031, %s46, 1
        %s1033 = smul.addr %s1032, 8
        %s1034 = scalar_lea.vmem %s0, %s1033
        %p1035 = scmp.lt.s32.totalorder %s46, 1
        %s1036 = scalar_select %p1035, %s46, 1
        %s1037 = smul.addr %s1036, 2
        %s1038 = smul.addr %s1037, 8
        %s1039 = scalar_lea.vmem %s1, %s1038
        %p1040 = scmp.lt.s32.totalorder %s47, 1
        %s1041 = scalar_select %p1040, %s47, 1
        %s1042 = scalar_lea.vmem %s2, %s1041
        %p1043 = scmp.lt.s32.totalorder %s47, 1
        %s1044 = scalar_select %p1043, %s47, 1
        %s1045 = scalar_lea.vmem %s3, %s1044
        %p1046 = scmp.lt.s32.totalorder %s47, 1
        %s1047 = scalar_select %p1046, %s47, 1
        %s1048 = smul.addr %s1047, 48
        %s1049 = smul.addr %s1048, 4
        %s1050 = scalar_lea.vmem %s4, %s1049
        %p1051 = scmp.lt.s32.totalorder %s47, 1
        %s1052 = scalar_select %p1051, %s47, 1
        %s1053 = smul.addr %s1052, 3
        %s1054 = scalar_lea.vmem %s5, %s1053
        %p1055 = scmp.lt.s32.totalorder %s47, 1
        %s1056 = scalar_select %p1055, %s47, 1
        %s1057 = smul.addr %s1056, 16
        %s1058 = smul.addr %s1057, 4
        %s1059 = scalar_lea.vmem %s6, %s1058
        %p1060 = scmp.lt.s32.totalorder %s47, 1
        %s1061 = scalar_select %p1060, %s47, 1
        %s1062 = scalar_lea.vmem %s7, %s1061
        %p1063 = scmp.lt.s32.totalorder %s47, 1
        %s1064 = scalar_select %p1063, %s47, 1
        %s1065 = scalar_lea.vmem %s8, %s1064
        %p1066 = scmp.lt.s32.totalorder %s47, 1
        %s1067 = scalar_select %p1066, %s47, 1
        %s1068 = scalar_lea.vmem %s9, %s1067
        %p1069 = scmp.lt.s32.totalorder %s47, 1
        %s1070 = scalar_select %p1069, %s47, 1
        %s1071 = smul.addr %s1070, 16
        %s1072 = smul.addr %s1071, 4
        %s1073 = scalar_lea.vmem %s10, %s1072
        %p1074 = scmp.lt.s32.totalorder %s47, 1
        %s1075 = scalar_select %p1074, %s47, 1
        %s1076 = scalar_lea.vmem %s11, %s1075
        %p1077 = scmp.lt.s32.totalorder %s47, 1
        %s1078 = scalar_select %p1077, %s47, 1
        %s1079 = smul.addr %s1078, 32
        %s1080 = smul.addr %s1079, 4
        %s1081 = scalar_lea.vmem %s12, %s1080
        %p1082 = scmp.lt.s32.totalorder %s47, 1
        %s1083 = scalar_select %p1082, %s47, 1
        %s1084 = smul.addr %s1083, 2
        %s1085 = scalar_lea.vmem %s13, %s1084
        %p1086 = scmp.lt.s32.totalorder %s47, 1
        %s1087 = scalar_select %p1086, %s47, 1
        %s1088 = smul.addr %s1087, 16
        %s1089 = smul.addr %s1088, 4
        %s1090 = scalar_lea.vmem %s14, %s1089
        %p1091 = scmp.lt.s32.totalorder %s47, 1
        %s1092 = scalar_select %p1091, %s47, 1
        %s1093 = scalar_lea.vmem %s15, %s1092
        %p1094 = scmp.lt.s32.totalorder %s47, 1
        %s1095 = scalar_select %p1094, %s47, 1
        %s1096 = scalar_lea.vmem %s16, %s1095
        %p1097 = scmp.lt.s32.totalorder %s47, 1
        %s1098 = scalar_select %p1097, %s47, 1
        %s1099 = scalar_lea.vmem %s17, %s1098
        %p1100 = scmp.lt.s32.totalorder %s47, 1
        %s1101 = scalar_select %p1100, %s47, 1
        %s1102 = smul.addr %s1101, 160
        %s1103 = smul.addr %s1102, 4
        %s1104 = scalar_lea.vmem %s18, %s1103
        %p1105 = scmp.lt.s32.totalorder %s47, 1
        %s1106 = scalar_select %p1105, %s47, 1
        %s1107 = smul.addr %s1106, 2
        %s1108 = scalar_lea.vmem %s19, %s1107
        %p1109 = scmp.lt.s32.totalorder %s47, 1
        %s1110 = scalar_select %p1109, %s47, 1
        %s1111 = smul.addr %s1110, 32
        %s1112 = smul.addr %s1111, 4
        %s1113 = scalar_lea.vmem %s20, %s1112
        %p1114 = scmp.lt.s32.totalorder %s47, 1
        %s1115 = scalar_select %p1114, %s47, 1
        %s1116 = scalar_lea.vmem %s21, %s1115
        %p1117 = scmp.lt.s32.totalorder %s46, 1
        %s1118 = scalar_select %p1117, %s46, 1
        %s1119 = smul.addr %s1118, 4
        %s1120 = scalar_lea.vmem %s22, %s1119
        %p1122 = scmp.eq.s32.totalorder %s47, 0
        // Predicated region
        $region109: #{decoder_forward.4} parent=107 // pred_check
          %p1123 = pneg %p1122
        $region110: #{decoder_forward.4} parent=107 // pred_check_branch
          %1125 = sbr.rel (%p1123) target = $region112
        $region111: #{decoder_forward.4} parent=107 // pred_region
          %v1126 = vld [vmem:[%s1034] sm:$0xff]
          %1127 = vst [vmem:[#allocation2] sm:$0xff] %v1126
        $region112: #{decoder_forward.4} parent=107 // pred_fallthru
          _
        %v1128 = vld [vmem:[#allocation2] sm:$0xff]
        %v1129 = vld [vmem:[%s1039] sm:$0xff]
        %v1130 = vld [vmem:[%s1039 + $0x8] sm:$0xff]
        %1131 = vadd.xlane.f32.xlu0 %v1128
        %v1132 = vpop.xlane.xlu0 %1131
        %v1133 = vrcp.pop 128.0
        %v1134 = vmul.f32 128.0, %v1133
        %v1135 = vsub.f32 1.0, %v1134
        %v1136 = vmul.f32 %v1133, %v1135
        %v1137 = vadd.f32 %v1133, %v1136
        %vm1138 = vweird.f32 %v1133
        %v1139 = vsel %vm1138, %v1133, %v1137
        %v1140 = vmul.f32 %v1132, %v1139
        %v1141 = vsub.f32 %v1128, %v1140
        %v1142 = vmul.f32 %v1141, %v1141
        %1143 = vadd.xlane.f32.xlu0 %v1142
        %v1144 = vpop.xlane.xlu0 %1143
        %v1145 = vmul.f32 %v1144, %v1139
        %v1146 = vadd.f32 %v1145, 1e-05
        %v1147 = vrsqrt.pop %v1146
        %v1148 = vmul.f32 %v1147, %v1146
        %v1149 = vmul.f32 %v1148, %v1147
        %v1150 = vmul.f32 0.5, %v1149
        %v1151 = vsub.f32 1.5, %v1150
        %v1152 = vmul.f32 %v1147, %v1151
        %vm1153 = vweird.f32 %v1146
        %vm1154 = vweird.f32 %v1147
        %vm1155 = vmor %vm1153, %vm1154
        %v1156 = vsel %vm1155, %v1147, %v1152
        %v1157 = vmul.f32 %v1141, %v1156
        %v1158 = vld [vmem:[%s1042] sm:$0x1]
        %v1160 = vperm.slane %v1158, 0
        %v1162 = vmul.f32 %v1157, %v1160
        %v1163 = vld [vmem:[%s1045] sm:$0x1]
        %v1165 = vperm.slane %v1163, 0
        %v1167 = vadd.f32 %v1162, %v1165
        %v1168 = vpack.c.bf16 %v1167, %v1167
        %v1169 = vld [vmem:[%s1050] sm:$0xff]
        %v1170 = vld [vmem:[%s1050 + $0x8] sm:$0xf]
        %v1171 = vld [vmem:[%s1050 + $0xc] sm:$0xff]
        %v1172 = vld [vmem:[%s1050 + $0x14] sm:$0xf]
        %v1173 = vld [vmem:[%s1050 + $0x18] sm:$0xff]
        %v1174 = vld [vmem:[%s1050 + $0x20] sm:$0xf]
        %v1175 = vld [vmem:[%s1050 + $0x24] sm:$0xff]
        %v1176 = vld [vmem:[%s1050 + $0x2c] sm:$0xf]
        %v1177 = vld [vmem:[%s1050 + $0x30] sm:$0xff]
        %v1178 = vld [vmem:[%s1050 + $0x38] sm:$0xf]
        %v1179 = vld [vmem:[%s1050 + $0x3c] sm:$0xff]
        %v1180 = vld [vmem:[%s1050 + $0x44] sm:$0xf]
        %v1181 = vld [vmem:[%s1050 + $0x48] sm:$0xff]
        %v1182 = vld [vmem:[%s1050 + $0x50] sm:$0xf]
        %v1183 = vld [vmem:[%s1050 + $0x54] sm:$0xff]
        %v1184 = vld [vmem:[%s1050 + $0x5c] sm:$0xf]
        %v1185 = vld [vmem:[%s1050 + $0x60] sm:$0xff]
        %v1186 = vld [vmem:[%s1050 + $0x68] sm:$0xf]
        %v1187 = vld [vmem:[%s1050 + $0x6c] sm:$0xff]
        %v1188 = vld [vmem:[%s1050 + $0x74] sm:$0xf]
        %v1189 = vld [vmem:[%s1050 + $0x78] sm:$0xff]
        %v1190 = vld [vmem:[%s1050 + $0x80] sm:$0xf]
        %v1191 = vld [vmem:[%s1050 + $0x84] sm:$0xff]
        %v1192 = vld [vmem:[%s1050 + $0x8c] sm:$0xf]
        %v1193 = vld [vmem:[%s1050 + $0x90] sm:$0xff]
        %v1194 = vld [vmem:[%s1050 + $0x98] sm:$0xf]
        %v1195 = vld [vmem:[%s1050 + $0x9c] sm:$0xff]
        %v1196 = vld [vmem:[%s1050 + $0xa4] sm:$0xf]
        %v1197 = vld [vmem:[%s1050 + $0xa8] sm:$0xff]
        %v1198 = vld [vmem:[%s1050 + $0xb0] sm:$0xf]
        %v1199 = vld [vmem:[%s1050 + $0xb4] sm:$0xff]
        %v1200 = vld [vmem:[%s1050 + $0xbc] sm:$0xf]
        %v1201 = vld [vmem:[%s1054] sm:$0x7]
        %v1203 = vperm.slane %v1201, 0
        %v1204 = vperm.slane %v1201, 1
        %v1205 = vperm.slane %v1201, 2
        %v1241 = vunpack.c.l.b16 %v1169
        %v1242 = vunpack.c.h.b16 %v1169
        %v1243 = vunpack.c.l.b16 %v1170
        %v1244 = vunpack.c.l.b16 %v1171
        %v1245 = vunpack.c.h.b16 %v1171
        %v1246 = vunpack.c.l.b16 %v1172
        %v1247 = vunpack.c.l.b16 %v1173
        %v1248 = vunpack.c.h.b16 %v1173
        %v1249 = vunpack.c.l.b16 %v1174
        %v1250 = vunpack.c.l.b16 %v1175
        %v1251 = vunpack.c.h.b16 %v1175
        %v1252 = vunpack.c.l.b16 %v1176
        %v1253 = vunpack.c.l.b16 %v1177
        %v1254 = vunpack.c.h.b16 %v1177
        %v1255 = vunpack.c.l.b16 %v1178
        %v1256 = vunpack.c.l.b16 %v1179
        %v1257 = vunpack.c.h.b16 %v1179
        %v1258 = vunpack.c.l.b16 %v1180
        %v1259 = vunpack.c.l.b16 %v1181
        %v1260 = vunpack.c.h.b16 %v1181
        %v1261 = vunpack.c.l.b16 %v1182
        %v1262 = vunpack.c.l.b16 %v1183
        %v1263 = vunpack.c.h.b16 %v1183
        %v1264 = vunpack.c.l.b16 %v1184
        %v1265 = vunpack.c.l.b16 %v1185
        %v1266 = vunpack.c.h.b16 %v1185
        %v1267 = vunpack.c.l.b16 %v1186
        %v1268 = vunpack.c.l.b16 %v1187
        %v1269 = vunpack.c.h.b16 %v1187
        %v1270 = vunpack.c.l.b16 %v1188
        %v1271 = vunpack.c.l.b16 %v1189
        %v1272 = vunpack.c.h.b16 %v1189
        %v1273 = vunpack.c.l.b16 %v1190
        %v1274 = vunpack.c.l.b16 %v1191
        %v1275 = vunpack.c.h.b16 %v1191
        %v1276 = vunpack.c.l.b16 %v1192
        %v1277 = vunpack.c.l.b16 %v1193
        %v1278 = vunpack.c.h.b16 %v1193
        %v1279 = vunpack.c.l.b16 %v1194
        %v1280 = vunpack.c.l.b16 %v1195
        %v1281 = vunpack.c.h.b16 %v1195
        %v1282 = vunpack.c.l.b16 %v1196
        %v1283 = vunpack.c.l.b16 %v1197
        %v1284 = vunpack.c.h.b16 %v1197
        %v1285 = vunpack.c.l.b16 %v1198
        %v1286 = vunpack.c.l.b16 %v1199
        %v1287 = vunpack.c.h.b16 %v1199
        %v1288 = vunpack.c.l.b16 %v1200
        %v1289 = vpack.c.b16 %v1244, %v1241
        %v1290 = vpack.c.b16 %v1245, %v1242
        %v1291 = vpack.c.b16 %v1246, %v1243
        %v1292 = vpack.c.b16 %v1250, %v1247
        %v1293 = vpack.c.b16 %v1251, %v1248
        %v1294 = vpack.c.b16 %v1252, %v1249
        %v1295 = vpack.c.b16 %v1256, %v1253
        %v1296 = vpack.c.b16 %v1257, %v1254
        %v1297 = vpack.c.b16 %v1258, %v1255
        %v1298 = vpack.c.b16 %v1262, %v1259
        %v1299 = vpack.c.b16 %v1263, %v1260
        %v1300 = vpack.c.b16 %v1264, %v1261
        %v1301 = vpack.c.b16 %v1268, %v1265
        %v1302 = vpack.c.b16 %v1269, %v1266
        %v1303 = vpack.c.b16 %v1270, %v1267
        %v1304 = vpack.c.b16 %v1274, %v1271
        %v1305 = vpack.c.b16 %v1275, %v1272
        %v1306 = vpack.c.b16 %v1276, %v1273
        %v1307 = vpack.c.b16 %v1280, %v1277
        %v1308 = vpack.c.b16 %v1281, %v1278
        %v1309 = vpack.c.b16 %v1282, %v1279
        %v1310 = vpack.c.b16 %v1286, %v1283
        %v1311 = vpack.c.b16 %v1287, %v1284
        %v1312 = vpack.c.b16 %v1288, %v1285
        %1337 = vmatpush.bf16.msra.mxu0 %v1310
        %1338 = vmatpush.bf16.msra.mxu0 %v1307
        %1339 = vmatpush.bf16.msra.mxu0 %v1304
        %1340 = vmatpush.bf16.msra.mxu0 %v1301
        %1341 = vmatpush.bf16.msra.mxu0 %v1298
        %1342 = vmatpush.bf16.msra.mxu0 %v1295
        %1343 = vmatpush.bf16.msra.mxu0 %v1292
        %1344 = vmatpush.bf16.msra.mxu0 %v1289
        %1345 = vmatmul.bf16.gmra.mxu0 %v1168
        %v1346 = vpop.f32.mrf.mxu0
        %v1347 = vadd.f32 %v1203, %v1346
        %v1348 = vpop.f32.mrf.mxu0
        %1349 = vdwg.mxu0
        %1350 = vmatpush.bf16.msra.mxu0 %v1311
        %1351 = vmatpush.bf16.msra.mxu0 %v1308
        %1352 = vmatpush.bf16.msra.mxu0 %v1305
        %1353 = vmatpush.bf16.msra.mxu0 %v1302
        %1354 = vmatpush.bf16.msra.mxu0 %v1299
        %1355 = vmatpush.bf16.msra.mxu0 %v1296
        %1356 = vmatpush.bf16.msra.mxu0 %v1293
        %1357 = vmatpush.bf16.msra.mxu0 %v1290
        %1358 = vmatmul.bf16.gmra.mxu0 %v1168
        %v1359 = vpop.f32.mrf.mxu0
        %v1360 = vadd.f32 %v1204, %v1359
        %v1361 = vpop.f32.mrf.mxu0
        %1362 = vdwg.mxu0
        %1363 = vmatpush.bf16.msra.mxu0 %v1312
        %1364 = vmatpush.bf16.msra.mxu0 %v1309
        %1365 = vmatpush.bf16.msra.mxu0 %v1306
        %1366 = vmatpush.bf16.msra.mxu0 %v1303
        %1367 = vmatpush.bf16.msra.mxu0 %v1300
        %1368 = vmatpush.bf16.msra.mxu0 %v1297
        %1369 = vmatpush.bf16.msra.mxu0 %v1294
        %1370 = vmatpush.bf16.msra.mxu0 %v1291
        %1371 = vmatmul.bf16.gmra.mxu0 %v1168
        %v1372 = vpop.f32.mrf.mxu0
        %v1373 = vadd.f32 %v1205, %v1372
        %v1374 = vpop.f32.mrf.mxu0
        %1375 = vdwg.mxu0
        %v1376 = vld [vmem:[%s1059] sm:$0xf]
        %v1377 = vld [vmem:[%s1059 + $0x4] sm:$0xf]
        %v1378 = vld [vmem:[%s1059 + $0x8] sm:$0xf]
        %v1379 = vld [vmem:[%s1059 + $0xc] sm:$0xf]
        %v1380 = vld [vmem:[%s1059 + $0x10] sm:$0xf]
        %v1381 = vld [vmem:[%s1059 + $0x14] sm:$0xf]
        %v1382 = vld [vmem:[%s1059 + $0x18] sm:$0xf]
        %v1383 = vld [vmem:[%s1059 + $0x1c] sm:$0xf]
        %v1384 = vld [vmem:[%s1059 + $0x20] sm:$0xf]
        %v1385 = vld [vmem:[%s1059 + $0x24] sm:$0xf]
        %v1386 = vld [vmem:[%s1059 + $0x28] sm:$0xf]
        %v1387 = vld [vmem:[%s1059 + $0x2c] sm:$0xf]
        %v1388 = vld [vmem:[%s1059 + $0x30] sm:$0xf]
        %v1389 = vld [vmem:[%s1059 + $0x34] sm:$0xf]
        %v1390 = vld [vmem:[%s1059 + $0x38] sm:$0xf]
        %v1391 = vld [vmem:[%s1059 + $0x3c] sm:$0xf]
        %v1392 = vld [vmem:[%s1062] sm:$0x1]
        %1394 = vrot.lane.b32.xlu0 %v1347, 96
        %v1395 = vpop.permute.xlu0 %1394
        %1397 = vrot.lane.b32.xlu0 %v1347, 64
        %v1398 = vpop.permute.xlu0 %1397
        %1400 = vrot.lane.b32.xlu0 %v1347, 32
        %v1401 = vpop.permute.xlu0 %1400
        %v1403 = vrot.slane %v1398, 4
        %vm1404 = vcmask 1047556
        %v1405 = vsel %vm1404, %v1403, %v1347
        %v1406 = vrot.slane %v1347, 4
        %v1407 = vsel %vm1404, %v1398, %v1406
        %v1409 = vunpack.c.l.s4 1983009808
        %v1410 = vunpack.c.0.s8 %v1409
        %v1411 = vperm.slane %v1405, %v1410
        %v1413 = vunpack.c.l.s4 1983009808
        %v1414 = vunpack.c.0.s8 %v1413
        %v1415 = vperm.slane %v1407, %v1414
        %v1416 = vrot.slane %v1401, 4
        %v1417 = vsel %vm1404, %v1416, %v1395
        %v1418 = vrot.slane %v1395, 4
        %v1419 = vsel %vm1404, %v1401, %v1418
        %v1421 = vunpack.c.l.s4 1983009808
        %v1422 = vunpack.c.0.s8 %v1421
        %v1423 = vperm.slane %v1417, %v1422
        %v1425 = vunpack.c.l.s4 1983009808
        %v1426 = vunpack.c.0.s8 %v1425
        %v1427 = vperm.slane %v1419, %v1426
        %v1428 = vrot.slane %v1423, 4
        %v1429 = vsel %vm1404, %v1428, %v1411
        %v1430 = vrot.slane %v1411, 4
        %v1431 = vsel %vm1404, %v1423, %v1430
        %v1433 = vunpack.c.l.s4 1934713408
        %v1434 = vunpack.c.0.s8 %v1433
        %v1435 = vperm.slane %v1429, %v1434
        %v1437 = vunpack.c.l.s4 1934713408
        %v1438 = vunpack.c.0.s8 %v1437
        %v1439 = vperm.slane %v1431, %v1438
        %v1440 = vrot.slane %v1427, 4
        %v1441 = vsel %vm1404, %v1440, %v1415
        %v1442 = vrot.slane %v1415, 4
        %v1443 = vsel %vm1404, %v1427, %v1442
        %v1445 = vunpack.c.l.s4 1934713408
        %v1446 = vunpack.c.0.s8 %v1445
        %v1447 = vperm.slane %v1441, %v1446
        %v1449 = vunpack.c.l.s4 1934713408
        %v1450 = vunpack.c.0.s8 %v1449
        %v1451 = vperm.slane %v1443, %v1450
        %v1452 = vrot.slane %v1435, 4
        %v1453 = vsel %vm1404, 0.0, %v1452
        %v1454 = vrot.slane %v1439, 4
        %v1455 = vsel %vm1404, 0.0, %v1454
        %v1456 = vrot.slane %v1447, 4
        %v1457 = vsel %vm1404, 0.0, %v1456
        %v1458 = vrot.slane %v1451, 4
        %v1459 = vsel %vm1404, 0.0, %v1458
        %v1460 = vsel %vm1404, %v1454, %v1435
        %v1462 = vunpack.c.l.s4 1983009808
        %v1463 = vunpack.c.0.s8 %v1462
        %v1464 = vperm.slane %v1460, %v1463
        %v1465 = vrot.slane %v1455, 4
        %v1466 = vsel %vm1404, %v1465, %v1453
        %v1468 = vunpack.c.l.s4 1983009808
        %v1469 = vunpack.c.0.s8 %v1468
        %v1470 = vperm.slane %v1466, %v1469
        %v1471 = vsel %vm1404, %v1458, %v1447
        %v1473 = vunpack.c.l.s4 1983009808
        %v1474 = vunpack.c.0.s8 %v1473
        %v1475 = vperm.slane %v1471, %v1474
        %v1476 = vrot.slane %v1459, 4
        %v1477 = vsel %vm1404, %v1476, %v1457
        %v1479 = vunpack.c.l.s4 1983009808
        %v1480 = vunpack.c.0.s8 %v1479
        %v1481 = vperm.slane %v1477, %v1480
        %v1482 = vrot.slane %v1470, 4
        %v1483 = vsel %vm1404, %v1482, %v1464
        %v1484 = vrot.slane %v1464, 4
        %v1485 = vsel %vm1404, %v1470, %v1484
        %v1487 = vunpack.c.l.s4 1934713408
        %v1488 = vunpack.c.0.s8 %v1487
        %v1489 = vperm.slane %v1483, %v1488
        %v1491 = vunpack.c.l.s4 1934713408
        %v1492 = vunpack.c.0.s8 %v1491
        %v1493 = vperm.slane %v1485, %v1492
        %v1494 = vrot.slane %v1481, 4
        %v1495 = vsel %vm1404, %v1494, %v1475
        %v1496 = vrot.slane %v1475, 4
        %v1497 = vsel %vm1404, %v1481, %v1496
        %v1499 = vunpack.c.l.s4 1934713408
        %v1500 = vunpack.c.0.s8 %v1499
        %v1501 = vperm.slane %v1495, %v1500
        %v1503 = vunpack.c.l.s4 1934713408
        %v1504 = vunpack.c.0.s8 %v1503
        %v1505 = vperm.slane %v1497, %v1504
        %v1506 = vrot.slane %v1501, 4
        %v1507 = vsel %vm1404, %v1506, %v1489
        %v1508 = vrot.slane %v1489, 4
        %v1509 = vsel %vm1404, %v1501, %v1508
        %v1510 = vrot.slane %v1505, 4
        %v1511 = vsel %vm1404, %v1510, %v1493
        %v1512 = vrot.slane %v1493, 4
        %v1513 = vsel %vm1404, %v1505, %v1512
        %v1514 = vpack.c.bf16 %v1507, %v1507
        %v1515 = vpack.c.bf16 %v1509, %v1509
        %v1516 = vpack.c.bf16 %v1511, %v1511
        %v1517 = vpack.c.bf16 %v1513, %v1513
        %1519 = vrot.lane.b32.xlu0 %v1360, 96
        %v1520 = vpop.permute.xlu0 %1519
        %1522 = vrot.lane.b32.xlu0 %v1360, 64
        %v1523 = vpop.permute.xlu0 %1522
        %1525 = vrot.lane.b32.xlu0 %v1360, 32
        %v1526 = vpop.permute.xlu0 %1525
        %v1528 = vrot.slane %v1523, 4
        %v1529 = vsel %vm1404, %v1528, %v1360
        %v1530 = vrot.slane %v1360, 4
        %v1531 = vsel %vm1404, %v1523, %v1530
        %v1533 = vunpack.c.l.s4 1983009808
        %v1534 = vunpack.c.0.s8 %v1533
        %v1535 = vperm.slane %v1529, %v1534
        %v1537 = vunpack.c.l.s4 1983009808
        %v1538 = vunpack.c.0.s8 %v1537
        %v1539 = vperm.slane %v1531, %v1538
        %v1540 = vrot.slane %v1526, 4
        %v1541 = vsel %vm1404, %v1540, %v1520
        %v1542 = vrot.slane %v1520, 4
        %v1543 = vsel %vm1404, %v1526, %v1542
        %v1545 = vunpack.c.l.s4 1983009808
        %v1546 = vunpack.c.0.s8 %v1545
        %v1547 = vperm.slane %v1541, %v1546
        %v1549 = vunpack.c.l.s4 1983009808
        %v1550 = vunpack.c.0.s8 %v1549
        %v1551 = vperm.slane %v1543, %v1550
        %v1552 = vrot.slane %v1547, 4
        %v1553 = vsel %vm1404, %v1552, %v1535
        %v1554 = vrot.slane %v1535, 4
        %v1555 = vsel %vm1404, %v1547, %v1554
        %v1557 = vunpack.c.l.s4 1934713408
        %v1558 = vunpack.c.0.s8 %v1557
        %v1559 = vperm.slane %v1553, %v1558
        %v1561 = vunpack.c.l.s4 1934713408
        %v1562 = vunpack.c.0.s8 %v1561
        %v1563 = vperm.slane %v1555, %v1562
        %v1564 = vrot.slane %v1551, 4
        %v1565 = vsel %vm1404, %v1564, %v1539
        %v1566 = vrot.slane %v1539, 4
        %v1567 = vsel %vm1404, %v1551, %v1566
        %v1569 = vunpack.c.l.s4 1934713408
        %v1570 = vunpack.c.0.s8 %v1569
        %v1571 = vperm.slane %v1565, %v1570
        %v1573 = vunpack.c.l.s4 1934713408
        %v1574 = vunpack.c.0.s8 %v1573
        %v1575 = vperm.slane %v1567, %v1574
        %v1576 = vrot.slane %v1559, 4
        %v1577 = vsel %vm1404, 0.0, %v1576
        %v1578 = vrot.slane %v1563, 4
        %v1579 = vsel %vm1404, 0.0, %v1578
        %v1580 = vrot.slane %v1571, 4
        %v1581 = vsel %vm1404, 0.0, %v1580
        %v1582 = vrot.slane %v1575, 4
        %v1583 = vsel %vm1404, 0.0, %v1582
        %v1584 = vsel %vm1404, %v1578, %v1559
        %v1586 = vunpack.c.l.s4 1983009808
        %v1587 = vunpack.c.0.s8 %v1586
        %v1588 = vperm.slane %v1584, %v1587
        %v1589 = vrot.slane %v1579, 4
        %v1590 = vsel %vm1404, %v1589, %v1577
        %v1592 = vunpack.c.l.s4 1983009808
        %v1593 = vunpack.c.0.s8 %v1592
        %v1594 = vperm.slane %v1590, %v1593
        %v1595 = vsel %vm1404, %v1582, %v1571
        %v1597 = vunpack.c.l.s4 1983009808
        %v1598 = vunpack.c.0.s8 %v1597
        %v1599 = vperm.slane %v1595, %v1598
        %v1600 = vrot.slane %v1583, 4
        %v1601 = vsel %vm1404, %v1600, %v1581
        %v1603 = vunpack.c.l.s4 1983009808
        %v1604 = vunpack.c.0.s8 %v1603
        %v1605 = vperm.slane %v1601, %v1604
        %v1606 = vrot.slane %v1594, 4
        %v1607 = vsel %vm1404, %v1606, %v1588
        %v1608 = vrot.slane %v1588, 4
        %v1609 = vsel %vm1404, %v1594, %v1608
        %v1611 = vunpack.c.l.s4 1934713408
        %v1612 = vunpack.c.0.s8 %v1611
        %v1613 = vperm.slane %v1607, %v1612
        %v1615 = vunpack.c.l.s4 1934713408
        %v1616 = vunpack.c.0.s8 %v1615
        %v1617 = vperm.slane %v1609, %v1616
        %v1618 = vrot.slane %v1605, 4
        %v1619 = vsel %vm1404, %v1618, %v1599
        %v1620 = vrot.slane %v1599, 4
        %v1621 = vsel %vm1404, %v1605, %v1620
        %v1623 = vunpack.c.l.s4 1934713408
        %v1624 = vunpack.c.0.s8 %v1623
        %v1625 = vperm.slane %v1619, %v1624
        %v1627 = vunpack.c.l.s4 1934713408
        %v1628 = vunpack.c.0.s8 %v1627
        %v1629 = vperm.slane %v1621, %v1628
        %v1630 = vrot.slane %v1625, 4
        %v1631 = vsel %vm1404, %v1630, %v1613
        %v1632 = vrot.slane %v1613, 4
        %v1633 = vsel %vm1404, %v1625, %v1632
        %v1634 = vrot.slane %v1629, 4
        %v1635 = vsel %vm1404, %v1634, %v1617
        %v1636 = vrot.slane %v1617, 4
        %v1637 = vsel %vm1404, %v1629, %v1636
        %v1638 = vpack.c.bf16 %v1631, %v1631
        %v1639 = vpack.c.bf16 %v1633, %v1633
        %v1640 = vpack.c.bf16 %v1635, %v1635
        %v1641 = vpack.c.bf16 %v1637, %v1637
        %1643 = vrot.lane.b32.xlu0 %v1373, 96
        %v1644 = vpop.permute.xlu0 %1643
        %1646 = vrot.lane.b32.xlu0 %v1373, 64
        %v1647 = vpop.permute.xlu0 %1646
        %1649 = vrot.lane.b32.xlu0 %v1373, 32
        %v1650 = vpop.permute.xlu0 %1649
        %v1652 = vrot.slane %v1647, 4
        %v1653 = vsel %vm1404, %v1652, %v1373
        %v1654 = vrot.slane %v1373, 4
        %v1655 = vsel %vm1404, %v1647, %v1654
        %v1657 = vunpack.c.l.s4 1983009808
        %v1658 = vunpack.c.0.s8 %v1657
        %v1659 = vperm.slane %v1653, %v1658
        %v1661 = vunpack.c.l.s4 1983009808
        %v1662 = vunpack.c.0.s8 %v1661
        %v1663 = vperm.slane %v1655, %v1662
        %v1664 = vrot.slane %v1650, 4
        %v1665 = vsel %vm1404, %v1664, %v1644
        %v1666 = vrot.slane %v1644, 4
        %v1667 = vsel %vm1404, %v1650, %v1666
        %v1669 = vunpack.c.l.s4 1983009808
        %v1670 = vunpack.c.0.s8 %v1669
        %v1671 = vperm.slane %v1665, %v1670
        %v1673 = vunpack.c.l.s4 1983009808
        %v1674 = vunpack.c.0.s8 %v1673
        %v1675 = vperm.slane %v1667, %v1674
        %v1676 = vrot.slane %v1671, 4
        %v1677 = vsel %vm1404, %v1676, %v1659
        %v1678 = vrot.slane %v1659, 4
        %v1679 = vsel %vm1404, %v1671, %v1678
        %v1681 = vunpack.c.l.s4 1934713408
        %v1682 = vunpack.c.0.s8 %v1681
        %v1683 = vperm.slane %v1677, %v1682
        %v1685 = vunpack.c.l.s4 1934713408
        %v1686 = vunpack.c.0.s8 %v1685
        %v1687 = vperm.slane %v1679, %v1686
        %v1688 = vrot.slane %v1675, 4
        %v1689 = vsel %vm1404, %v1688, %v1663
        %v1690 = vrot.slane %v1663, 4
        %v1691 = vsel %vm1404, %v1675, %v1690
        %v1693 = vunpack.c.l.s4 1934713408
        %v1694 = vunpack.c.0.s8 %v1693
        %v1695 = vperm.slane %v1689, %v1694
        %v1697 = vunpack.c.l.s4 1934713408
        %v1698 = vunpack.c.0.s8 %v1697
        %v1699 = vperm.slane %v1691, %v1698
        %v1700 = vrot.slane %v1683, 4
        %v1701 = vsel %vm1404, 0.0, %v1700
        %v1702 = vrot.slane %v1687, 4
        %v1703 = vsel %vm1404, 0.0, %v1702
        %v1704 = vrot.slane %v1695, 4
        %v1705 = vsel %vm1404, 0.0, %v1704
        %v1706 = vrot.slane %v1699, 4
        %v1707 = vsel %vm1404, 0.0, %v1706
        %v1708 = vsel %vm1404, %v1702, %v1683
        %v1710 = vunpack.c.l.s4 1983009808
        %v1711 = vunpack.c.0.s8 %v1710
        %v1712 = vperm.slane %v1708, %v1711
        %v1713 = vrot.slane %v1703, 4
        %v1714 = vsel %vm1404, %v1713, %v1701
        %v1716 = vunpack.c.l.s4 1983009808
        %v1717 = vunpack.c.0.s8 %v1716
        %v1718 = vperm.slane %v1714, %v1717
        %v1719 = vsel %vm1404, %v1706, %v1695
        %v1721 = vunpack.c.l.s4 1983009808
        %v1722 = vunpack.c.0.s8 %v1721
        %v1723 = vperm.slane %v1719, %v1722
        %v1724 = vrot.slane %v1707, 4
        %v1725 = vsel %vm1404, %v1724, %v1705
        %v1727 = vunpack.c.l.s4 1983009808
        %v1728 = vunpack.c.0.s8 %v1727
        %v1729 = vperm.slane %v1725, %v1728
        %v1730 = vrot.slane %v1718, 4
        %v1731 = vsel %vm1404, %v1730, %v1712
        %v1732 = vrot.slane %v1712, 4
        %v1733 = vsel %vm1404, %v1718, %v1732
        %v1735 = vunpack.c.l.s4 1934713408
        %v1736 = vunpack.c.0.s8 %v1735
        %v1737 = vperm.slane %v1731, %v1736
        %v1739 = vunpack.c.l.s4 1934713408
        %v1740 = vunpack.c.0.s8 %v1739
        %v1741 = vperm.slane %v1733, %v1740
        %v1742 = vrot.slane %v1729, 4
        %v1743 = vsel %vm1404, %v1742, %v1723
        %v1744 = vrot.slane %v1723, 4
        %v1745 = vsel %vm1404, %v1729, %v1744
        %v1747 = vunpack.c.l.s4 1934713408
        %v1748 = vunpack.c.0.s8 %v1747
        %v1749 = vperm.slane %v1743, %v1748
        %v1751 = vunpack.c.l.s4 1934713408
        %v1752 = vunpack.c.0.s8 %v1751
        %v1753 = vperm.slane %v1745, %v1752
        %v1754 = vrot.slane %v1749, 4
        %v1755 = vsel %vm1404, %v1754, %v1737
        %v1756 = vrot.slane %v1737, 4
        %v1757 = vsel %vm1404, %v1749, %v1756
        %v1758 = vrot.slane %v1753, 4
        %v1759 = vsel %vm1404, %v1758, %v1741
        %v1760 = vrot.slane %v1741, 4
        %v1761 = vsel %vm1404, %v1753, %v1760
        %v1762 = vpack.c.bf16 %v1755, %v1755
        %v1763 = vpack.c.bf16 %v1757, %v1757
        %v1764 = vpack.c.bf16 %v1759, %v1759
        %v1765 = vpack.c.bf16 %v1761, %v1761
        %vm1766 = vcmask 261120
        %v1768 = vsel %vm1766, %v1514, 0
        %v1771 = vsel %vm1766, %v1638, 0
        %1773 = vmatpush.bf16.xpose.msra.mxu0 0
        %1774 = vmatpush.bf16.xpose.msra.mxu0 0
        %1775 = vmatpush.bf16.xpose.msra.mxu0 0
        %1776 = vmatpush.bf16.xpose.msra.mxu0 0
        %1777 = vmatpush.bf16.xpose.msra.mxu0 0
        %1778 = vmatpush.bf16.xpose.msra.mxu0 0
        %1779 = vmatpush.bf16.xpose.msra.mxu0 0
        %1780 = vmatpush.bf16.xpose.msra.mxu0 %v1771
        %1781 = vmatmul.bf16.gmra.mxu0 %v1768
        %v1782 = vpop.f32.mrf.mxu0
        %v1783 = vadd.f32 0.0, %v1782
        %v1784 = vpop.f32.mrf.mxu0
        %1785 = vdwg.mxu0
        %v1787 = vsel %vm1766, %v1515, 0
        %v1790 = vsel %vm1766, %v1639, 0
        %1792 = vmatpush.bf16.xpose.msra.mxu0 0
        %1793 = vmatpush.bf16.xpose.msra.mxu0 0
        %1794 = vmatpush.bf16.xpose.msra.mxu0 0
        %1795 = vmatpush.bf16.xpose.msra.mxu0 0
        %1796 = vmatpush.bf16.xpose.msra.mxu0 0
        %1797 = vmatpush.bf16.xpose.msra.mxu0 0
        %1798 = vmatpush.bf16.xpose.msra.mxu0 0
        %1799 = vmatpush.bf16.xpose.msra.mxu0 %v1790
        %1800 = vmatmul.bf16.gmra.mxu0 %v1787
        %v1801 = vpop.f32.mrf.mxu0
        %v1802 = vadd.f32 0.0, %v1801
        %v1803 = vpop.f32.mrf.mxu0
        %1804 = vdwg.mxu0
        %v1806 = vsel %vm1766, %v1516, 0
        %v1809 = vsel %vm1766, %v1640, 0
        %1811 = vmatpush.bf16.xpose.msra.mxu0 0
        %1812 = vmatpush.bf16.xpose.msra.mxu0 0
        %1813 = vmatpush.bf16.xpose.msra.mxu0 0
        %1814 = vmatpush.bf16.xpose.msra.mxu0 0
        %1815 = vmatpush.bf16.xpose.msra.mxu0 0
        %1816 = vmatpush.bf16.xpose.msra.mxu0 0
        %1817 = vmatpush.bf16.xpose.msra.mxu0 0
        %1818 = vmatpush.bf16.xpose.msra.mxu0 %v1809
        %1819 = vmatmul.bf16.gmra.mxu0 %v1806
        %v1820 = vpop.f32.mrf.mxu0
        %v1821 = vadd.f32 0.0, %v1820
        %v1822 = vpop.f32.mrf.mxu0
        %1823 = vdwg.mxu0
        %v1825 = vsel %vm1766, %v1517, 0
        %v1828 = vsel %vm1766, %v1641, 0
        %1830 = vmatpush.bf16.xpose.msra.mxu0 0
        %1831 = vmatpush.bf16.xpose.msra.mxu0 0
        %1832 = vmatpush.bf16.xpose.msra.mxu0 0
        %1833 = vmatpush.bf16.xpose.msra.mxu0 0
        %1834 = vmatpush.bf16.xpose.msra.mxu0 0
        %1835 = vmatpush.bf16.xpose.msra.mxu0 0
        %1836 = vmatpush.bf16.xpose.msra.mxu0 0
        %1837 = vmatpush.bf16.xpose.msra.mxu0 %v1828
        %1838 = vmatmul.bf16.gmra.mxu0 %v1825
        %v1839 = vpop.f32.mrf.mxu0
        %v1840 = vadd.f32 0.0, %v1839
        %v1841 = vpop.f32.mrf.mxu0
        %1842 = vdwg.mxu0
        %v1843 = vmul.f32 %v1783, 0.17677669
        %v1844 = vmul.f32 %v1802, 0.17677669
        %v1845 = vmul.f32 %v1821, 0.17677669
        %v1846 = vmul.f32 %v1840, 0.17677669
        %vm1847 = vcmask 64512
        %v1848 = vsel %vm1847, %v1843, -inf
        %1849 = vmax.xlane.f32.xlu0 %v1848
        %v1850 = vpop.xlane.xlu0 %1849
        %v1851 = vsel %vm1847, %v1844, -inf
        %1852 = vmax.xlane.f32.xlu0 %v1851
        %v1853 = vpop.xlane.xlu0 %1852
        %v1854 = vsel %vm1847, %v1845, -inf
        %1855 = vmax.xlane.f32.xlu0 %v1854
        %v1856 = vpop.xlane.xlu0 %1855
        %v1857 = vsel %vm1847, %v1846, -inf
        %1858 = vmax.xlane.f32.xlu0 %v1857
        %v1859 = vpop.xlane.xlu0 %1858
        %v1860 = vsub.f32 %v1843, %v1850
        %v1861 = vsub.f32 %v1844, %v1853
        %v1862 = vsub.f32 %v1845, %v1856
        %v1863 = vsub.f32 %v1846, %v1859
        %v1864 = vmul.f32 %v1860, 1.442695
        %v1865 = vpow.pop %v1864
        %v1866 = vmul.f32 %v1861, 1.442695
        %v1867 = vpow.pop %v1866
        %v1868 = vmul.f32 %v1862, 1.442695
        %v1869 = vpow.pop %v1868
        %v1870 = vmul.f32 %v1863, 1.442695
        %v1871 = vpow.pop %v1870
        %v1872 = vsel %vm1847, %v1865, 0.0
        %1873 = vadd.xlane.f32.xlu0 %v1872
        %v1874 = vpop.xlane.xlu0 %1873
        %v1875 = vsel %vm1847, %v1867, 0.0
        %1876 = vadd.xlane.f32.xlu0 %v1875
        %v1877 = vpop.xlane.xlu0 %1876
        %v1878 = vsel %vm1847, %v1869, 0.0
        %1879 = vadd.xlane.f32.xlu0 %v1878
        %v1880 = vpop.xlane.xlu0 %1879
        %v1881 = vsel %vm1847, %v1871, 0.0
        %1882 = vadd.xlane.f32.xlu0 %v1881
        %v1883 = vpop.xlane.xlu0 %1882
        %v1884 = vrcp.pop %v1874
        %v1885 = vrcp.pop %v1877
        %v1886 = vrcp.pop %v1880
        %v1887 = vrcp.pop %v1883
        %v1888 = vmul.f32 %v1865, %v1884
        %v1889 = vmul.f32 %v1867, %v1885
        %v1890 = vmul.f32 %v1869, %v1886
        %v1891 = vmul.f32 %v1871, %v1887
        %1892 = vst.msk [vmem:[%s1023] sm:$0xff] %vm1847, %v1888
        %1893 = vst.msk [vmem:[%s1023 + $0x8] sm:$0xff] %vm1847, %v1889
        %1894 = vst.msk [vmem:[%s1023 + $0x10] sm:$0xff] %vm1847, %v1890
        %1895 = vst.msk [vmem:[%s1023 + $0x18] sm:$0xff] %vm1847, %v1891
        %v1896 = vpack.c.bf16 %v1888, %v1888
        %v1897 = vpack.c.bf16 %v1889, %v1889
        %v1898 = vpack.c.bf16 %v1890, %v1890
        %v1899 = vpack.c.bf16 %v1891, %v1891
        %v1901 = vsel %vm1847, %v1896, 0
        %vm1903 = vcmask 1043456
        %v1905 = vsel %vm1903, %v1762, 0
        %1907 = vmatpush.bf16.msra.mxu0 0
        %1908 = vmatpush.bf16.msra.mxu0 0
        %1909 = vmatpush.bf16.msra.mxu0 0
        %1910 = vmatpush.bf16.msra.mxu0 0
        %1911 = vmatpush.bf16.msra.mxu0 0
        %1912 = vmatpush.bf16.msra.mxu0 0
        %1913 = vmatpush.bf16.msra.mxu0 0
        %1914 = vmatpush.bf16.msra.mxu0 %v1905
        %1915 = vmatmul.bf16.gmra.mxu0 %v1901
        %v1916 = vpop.f32.mrf.mxu0
        %v1917 = vadd.f32 0.0, %v1916
        %v1918 = vpop.f32.mrf.mxu0
        %1919 = vdwg.mxu0
        %v1921 = vsel %vm1847, %v1897, 0
        %v1924 = vsel %vm1903, %v1763, 0
        %1926 = vmatpush.bf16.msra.mxu0 0
        %1927 = vmatpush.bf16.msra.mxu0 0
        %1928 = vmatpush.bf16.msra.mxu0 0
        %1929 = vmatpush.bf16.msra.mxu0 0
        %1930 = vmatpush.bf16.msra.mxu0 0
        %1931 = vmatpush.bf16.msra.mxu0 0
        %1932 = vmatpush.bf16.msra.mxu0 0
        %1933 = vmatpush.bf16.msra.mxu0 %v1924
        %1934 = vmatmul.bf16.gmra.mxu0 %v1921
        %v1935 = vpop.f32.mrf.mxu0
        %v1936 = vadd.f32 0.0, %v1935
        %v1937 = vpop.f32.mrf.mxu0
        %1938 = vdwg.mxu0
        %v1940 = vsel %vm1847, %v1898, 0
        %v1943 = vsel %vm1903, %v1764, 0
        %1945 = vmatpush.bf16.msra.mxu0 0
        %1946 = vmatpush.bf16.msra.mxu0 0
        %1947 = vmatpush.bf16.msra.mxu0 0
        %1948 = vmatpush.bf16.msra.mxu0 0
        %1949 = vmatpush.bf16.msra.mxu0 0
        %1950 = vmatpush.bf16.msra.mxu0 0
        %1951 = vmatpush.bf16.msra.mxu0 0
        %1952 = vmatpush.bf16.msra.mxu0 %v1943
        %1953 = vmatmul.bf16.gmra.mxu0 %v1940
        %v1954 = vpop.f32.mrf.mxu0
        %v1955 = vadd.f32 0.0, %v1954
        %v1956 = vpop.f32.mrf.mxu0
        %1957 = vdwg.mxu0
        %v1959 = vsel %vm1847, %v1899, 0
        %v1962 = vsel %vm1903, %v1765, 0
        %1964 = vmatpush.bf16.msra.mxu0 0
        %1965 = vmatpush.bf16.msra.mxu0 0
        %1966 = vmatpush.bf16.msra.mxu0 0
        %1967 = vmatpush.bf16.msra.mxu0 0
        %1968 = vmatpush.bf16.msra.mxu0 0
        %1969 = vmatpush.bf16.msra.mxu0 0
        %1970 = vmatpush.bf16.msra.mxu0 0
        %1971 = vmatpush.bf16.msra.mxu0 %v1962
        %1972 = vmatmul.bf16.gmra.mxu0 %v1959
        %v1973 = vpop.f32.mrf.mxu0
        %v1974 = vadd.f32 0.0, %v1973
        %v1975 = vpop.f32.mrf.mxu0
        %1976 = vdwg.mxu0
        %v1977 = vrot.slane %v1955, 4
        %v1978 = vsel %vm1404, %v1977, %v1917
        %v1979 = vrot.slane %v1917, 4
        %v1980 = vsel %vm1404, %v1955, %v1979
        %v1982 = vunpack.c.l.s4 1983009808
        %v1983 = vunpack.c.0.s8 %v1982
        %v1984 = vperm.slane %v1978, %v1983
        %v1986 = vunpack.c.l.s4 1983009808
        %v1987 = vunpack.c.0.s8 %v1986
        %v1988 = vperm.slane %v1980, %v1987
        %v1989 = vrot.slane %v1974, 4
        %v1990 = vsel %vm1404, %v1989, %v1936
        %v1991 = vrot.slane %v1936, 4
        %v1992 = vsel %vm1404, %v1974, %v1991
        %v1994 = vunpack.c.l.s4 1983009808
        %v1995 = vunpack.c.0.s8 %v1994
        %v1996 = vperm.slane %v1990, %v1995
        %v1998 = vunpack.c.l.s4 1983009808
        %v1999 = vunpack.c.0.s8 %v1998
        %v2000 = vperm.slane %v1992, %v1999
        %v2001 = vrot.slane %v1996, 4
        %v2002 = vsel %vm1404, %v2001, %v1984
        %v2003 = vrot.slane %v1984, 4
        %v2004 = vsel %vm1404, %v1996, %v2003
        %v2006 = vunpack.c.l.s4 1934713408
        %v2007 = vunpack.c.0.s8 %v2006
        %v2008 = vperm.slane %v2002, %v2007
        %v2010 = vunpack.c.l.s4 1934713408
        %v2011 = vunpack.c.0.s8 %v2010
        %v2012 = vperm.slane %v2004, %v2011
        %v2013 = vrot.slane %v2000, 4
        %v2014 = vsel %vm1404, %v2013, %v1988
        %v2015 = vrot.slane %v1988, 4
        %v2016 = vsel %vm1404, %v2000, %v2015
        %v2018 = vunpack.c.l.s4 1934713408
        %v2019 = vunpack.c.0.s8 %v2018
        %v2020 = vperm.slane %v2014, %v2019
        %v2022 = vunpack.c.l.s4 1934713408
        %v2023 = vunpack.c.0.s8 %v2022
        %v2024 = vperm.slane %v2016, %v2023
        %v2025 = vrot.slane %v2008, 4
        %v2026 = vsel %vm1404, 0.0, %v2025
        %v2027 = vrot.slane %v2012, 4
        %v2028 = vsel %vm1404, 0.0, %v2027
        %v2029 = vrot.slane %v2020, 4
        %v2030 = vsel %vm1404, 0.0, %v2029
        %v2031 = vrot.slane %v2024, 4
        %v2032 = vsel %vm1404, 0.0, %v2031
        %v2033 = vsel %vm1404, %v2027, %v2008
        %v2035 = vunpack.c.l.s4 1983009808
        %v2036 = vunpack.c.0.s8 %v2035
        %v2037 = vperm.slane %v2033, %v2036
        %v2038 = vrot.slane %v2028, 4
        %v2039 = vsel %vm1404, %v2038, %v2026
        %v2041 = vunpack.c.l.s4 1983009808
        %v2042 = vunpack.c.0.s8 %v2041
        %v2043 = vperm.slane %v2039, %v2042
        %v2044 = vsel %vm1404, %v2031, %v2020
        %v2046 = vunpack.c.l.s4 1983009808
        %v2047 = vunpack.c.0.s8 %v2046
        %v2048 = vperm.slane %v2044, %v2047
        %v2049 = vrot.slane %v2032, 4
        %v2050 = vsel %vm1404, %v2049, %v2030
        %v2052 = vunpack.c.l.s4 1983009808
        %v2053 = vunpack.c.0.s8 %v2052
        %v2054 = vperm.slane %v2050, %v2053
        %v2055 = vrot.slane %v2043, 4
        %v2056 = vsel %vm1404, %v2055, %v2037
        %v2057 = vrot.slane %v2037, 4
        %v2058 = vsel %vm1404, %v2043, %v2057
        %v2060 = vunpack.c.l.s4 1934713408
        %v2061 = vunpack.c.0.s8 %v2060
        %v2062 = vperm.slane %v2056, %v2061
        %v2064 = vunpack.c.l.s4 1934713408
        %v2065 = vunpack.c.0.s8 %v2064
        %v2066 = vperm.slane %v2058, %v2065
        %v2067 = vrot.slane %v2054, 4
        %v2068 = vsel %vm1404, %v2067, %v2048
        %v2069 = vrot.slane %v2048, 4
        %v2070 = vsel %vm1404, %v2054, %v2069
        %v2072 = vunpack.c.l.s4 1934713408
        %v2073 = vunpack.c.0.s8 %v2072
        %v2074 = vperm.slane %v2068, %v2073
        %v2076 = vunpack.c.l.s4 1934713408
        %v2077 = vunpack.c.0.s8 %v2076
        %v2078 = vperm.slane %v2070, %v2077
        %v2079 = vrot.slane %v2074, 4
        %v2080 = vsel %vm1404, %v2079, %v2062
        %v2081 = vrot.slane %v2062, 4
        %v2082 = vsel %vm1404, %v2074, %v2081
        %v2083 = vrot.slane %v2078, 4
        %v2084 = vsel %vm1404, %v2083, %v2066
        %v2085 = vrot.slane %v2066, 4
        %v2086 = vsel %vm1404, %v2078, %v2085
        %2088 = vrot.lane.b32.xlu0 %v2082, 32
        %v2089 = vpop.permute.xlu0 %2088
        %2092 = vrot.lane.b32.xlu0 %v2084, 64
        %v2093 = vpop.permute.xlu0 %2092
        %2096 = vrot.lane.b32.xlu0 %v2086, 96
        %v2097 = vpop.permute.xlu0 %2096
        %v2099 = vsel %vm1766, %v2080, %v2089
        %vm2100 = vcmask 523264
        %v2101 = vsel %vm2100, %v2099, %v2093
        %vm2102 = vcmask 785408
        %v2103 = vsel %vm2102, %v2101, %v2097
        %v2104 = vpack.c.bf16 %v2103, %v2103
        %v2106 = vperm.slane %v1392, 0
        %v2124 = vunpack.c.l.b16 %v1376
        %v2125 = vunpack.c.l.b16 %v1377
        %v2126 = vunpack.c.l.b16 %v1378
        %v2127 = vunpack.c.l.b16 %v1379
        %v2128 = vunpack.c.l.b16 %v1380
        %v2129 = vunpack.c.l.b16 %v1381
        %v2130 = vunpack.c.l.b16 %v1382
        %v2131 = vunpack.c.l.b16 %v1383
        %v2132 = vunpack.c.l.b16 %v1384
        %v2133 = vunpack.c.l.b16 %v1385
        %v2134 = vunpack.c.l.b16 %v1386
        %v2135 = vunpack.c.l.b16 %v1387
        %v2136 = vunpack.c.l.b16 %v1388
        %v2137 = vunpack.c.l.b16 %v1389
        %v2138 = vunpack.c.l.b16 %v1390
        %v2139 = vunpack.c.l.b16 %v1391
        %v2140 = vpack.c.b16 %v2125, %v2124
        %v2141 = vpack.c.b16 %v2127, %v2126
        %v2142 = vpack.c.b16 %v2129, %v2128
        %v2143 = vpack.c.b16 %v2131, %v2130
        %v2144 = vpack.c.b16 %v2133, %v2132
        %v2145 = vpack.c.b16 %v2135, %v2134
        %v2146 = vpack.c.b16 %v2137, %v2136
        %v2147 = vpack.c.b16 %v2139, %v2138
        %2156 = vmatpush.bf16.msra.mxu0 %v2147
        %2157 = vmatpush.bf16.msra.mxu0 %v2146
        %2158 = vmatpush.bf16.msra.mxu0 %v2145
        %2159 = vmatpush.bf16.msra.mxu0 %v2144
        %2160 = vmatpush.bf16.msra.mxu0 %v2143
        %2161 = vmatpush.bf16.msra.mxu0 %v2142
        %2162 = vmatpush.bf16.msra.mxu0 %v2141
        %2163 = vmatpush.bf16.msra.mxu0 %v2140
        %2164 = vmatmul.bf16.gmra.mxu0 %v2104
        %v2165 = vpop.f32.mrf.mxu0
        %v2166 = vadd.f32 %v2106, %v2165
        %v2167 = vpop.f32.mrf.mxu0
        %2168 = vdwg.mxu0
        %v2169 = vadd.f32 %v1128, %v2166
        %2170 = vadd.xlane.f32.xlu0 %v2169
        %v2171 = vpop.xlane.xlu0 %2170
        %v2172 = vmul.f32 %v2171, %v1139
        %v2173 = vsub.f32 %v2169, %v2172
        %v2174 = vmul.f32 %v2173, %v2173
        %2175 = vadd.xlane.f32.xlu0 %v2174
        %v2176 = vpop.xlane.xlu0 %2175
        %v2177 = vmul.f32 %v2176, %v1139
        %v2178 = vadd.f32 %v2177, 1e-05
        %v2179 = vrsqrt.pop %v2178
        %v2180 = vmul.f32 %v2179, %v2178
        %v2181 = vmul.f32 %v2180, %v2179
        %v2182 = vmul.f32 0.5, %v2181
        %v2183 = vsub.f32 1.5, %v2182
        %v2184 = vmul.f32 %v2179, %v2183
        %vm2185 = vweird.f32 %v2178
        %vm2186 = vweird.f32 %v2179
        %vm2187 = vmor %vm2185, %vm2186
        %v2188 = vsel %vm2187, %v2179, %v2184
        %v2189 = vmul.f32 %v2173, %v2188
        %v2190 = vld [vmem:[%s1065] sm:$0x1]
        %v2192 = vperm.slane %v2190, 0
        %v2194 = vmul.f32 %v2189, %v2192
        %v2195 = vld [vmem:[%s1068] sm:$0x1]
        %v2197 = vperm.slane %v2195, 0
        %v2199 = vadd.f32 %v2194, %v2197
        %v2200 = vpack.c.bf16 %v2199, %v2199
        %v2201 = vld [vmem:[%s1073] sm:$0xf]
        %v2202 = vld [vmem:[%s1073 + $0x4] sm:$0xf]
        %v2203 = vld [vmem:[%s1073 + $0x8] sm:$0xf]
        %v2204 = vld [vmem:[%s1073 + $0xc] sm:$0xf]
        %v2205 = vld [vmem:[%s1073 + $0x10] sm:$0xf]
        %v2206 = vld [vmem:[%s1073 + $0x14] sm:$0xf]
        %v2207 = vld [vmem:[%s1073 + $0x18] sm:$0xf]
        %v2208 = vld [vmem:[%s1073 + $0x1c] sm:$0xf]
        %v2209 = vld [vmem:[%s1073 + $0x20] sm:$0xf]
        %v2210 = vld [vmem:[%s1073 + $0x24] sm:$0xf]
        %v2211 = vld [vmem:[%s1073 + $0x28] sm:$0xf]
        %v2212 = vld [vmem:[%s1073 + $0x2c] sm:$0xf]
        %v2213 = vld [vmem:[%s1073 + $0x30] sm:$0xf]
        %v2214 = vld [vmem:[%s1073 + $0x34] sm:$0xf]
        %v2215 = vld [vmem:[%s1073 + $0x38] sm:$0xf]
        %v2216 = vld [vmem:[%s1073 + $0x3c] sm:$0xf]
        %v2217 = vld [vmem:[%s1076] sm:$0x1]
        %v2219 = vperm.slane %v2217, 0
        %v2237 = vunpack.c.l.b16 %v2201
        %v2238 = vunpack.c.l.b16 %v2202
        %v2239 = vunpack.c.l.b16 %v2203
        %v2240 = vunpack.c.l.b16 %v2204
        %v2241 = vunpack.c.l.b16 %v2205
        %v2242 = vunpack.c.l.b16 %v2206
        %v2243 = vunpack.c.l.b16 %v2207
        %v2244 = vunpack.c.l.b16 %v2208
        %v2245 = vunpack.c.l.b16 %v2209
        %v2246 = vunpack.c.l.b16 %v2210
        %v2247 = vunpack.c.l.b16 %v2211
        %v2248 = vunpack.c.l.b16 %v2212
        %v2249 = vunpack.c.l.b16 %v2213
        %v2250 = vunpack.c.l.b16 %v2214
        %v2251 = vunpack.c.l.b16 %v2215
        %v2252 = vunpack.c.l.b16 %v2216
        %v2253 = vpack.c.b16 %v2238, %v2237
        %v2254 = vpack.c.b16 %v2240, %v2239
        %v2255 = vpack.c.b16 %v2242, %v2241
        %v2256 = vpack.c.b16 %v2244, %v2243
        %v2257 = vpack.c.b16 %v2246, %v2245
        %v2258 = vpack.c.b16 %v2248, %v2247
        %v2259 = vpack.c.b16 %v2250, %v2249
        %v2260 = vpack.c.b16 %v2252, %v2251
        %2269 = vmatpush.bf16.msra.mxu0 %v2260
        %2270 = vmatpush.bf16.msra.mxu0 %v2259
        %2271 = vmatpush.bf16.msra.mxu0 %v2258
        %2272 = vmatpush.bf16.msra.mxu0 %v2257
        %2273 = vmatpush.bf16.msra.mxu0 %v2256
        %2274 = vmatpush.bf16.msra.mxu0 %v2255
        %2275 = vmatpush.bf16.msra.mxu0 %v2254
        %2276 = vmatpush.bf16.msra.mxu0 %v2253
        %2277 = vmatmul.bf16.gmra.mxu0 %v2200
        %v2278 = vpop.f32.mrf.mxu0
        %v2279 = vadd.f32 %v2219, %v2278
        %v2280 = vpop.f32.mrf.mxu0
        %2281 = vdwg.mxu0
        %v2282 = vpack.c.bf16 %v1130, %v1129
        %v2283 = vld [vmem:[%s1081] sm:$0xff]
        %v2284 = vld [vmem:[%s1081 + $0x8] sm:$0xff]
        %v2285 = vld [vmem:[%s1081 + $0x10] sm:$0xff]
        %v2286 = vld [vmem:[%s1081 + $0x18] sm:$0xff]
        %v2287 = vld [vmem:[%s1081 + $0x20] sm:$0xff]
        %v2288 = vld [vmem:[%s1081 + $0x28] sm:$0xff]
        %v2289 = vld [vmem:[%s1081 + $0x30] sm:$0xff]
        %v2290 = vld [vmem:[%s1081 + $0x38] sm:$0xff]
        %v2291 = vld [vmem:[%s1081 + $0x40] sm:$0xff]
        %v2292 = vld [vmem:[%s1081 + $0x48] sm:$0xff]
        %v2293 = vld [vmem:[%s1081 + $0x50] sm:$0xff]
        %v2294 = vld [vmem:[%s1081 + $0x58] sm:$0xff]
        %v2295 = vld [vmem:[%s1081 + $0x60] sm:$0xff]
        %v2296 = vld [vmem:[%s1081 + $0x68] sm:$0xff]
        %v2297 = vld [vmem:[%s1081 + $0x70] sm:$0xff]
        %v2298 = vld [vmem:[%s1081 + $0x78] sm:$0xff]
        %v2299 = vld [vmem:[%s1085] sm:$0x3]
        %v2301 = vperm.slane %v2299, 0
        %v2302 = vperm.slane %v2299, 1
        %v2321 = vunpack.c.l.b16 %v2283
        %v2322 = vunpack.c.h.b16 %v2283
        %v2323 = vunpack.c.l.b16 %v2284
        %v2324 = vunpack.c.h.b16 %v2284
        %v2325 = vunpack.c.l.b16 %v2285
        %v2326 = vunpack.c.h.b16 %v2285
        %v2327 = vunpack.c.l.b16 %v2286
        %v2328 = vunpack.c.h.b16 %v2286
        %v2329 = vunpack.c.l.b16 %v2287
        %v2330 = vunpack.c.h.b16 %v2287
        %v2331 = vunpack.c.l.b16 %v2288
        %v2332 = vunpack.c.h.b16 %v2288
        %v2333 = vunpack.c.l.b16 %v2289
        %v2334 = vunpack.c.h.b16 %v2289
        %v2335 = vunpack.c.l.b16 %v2290
        %v2336 = vunpack.c.h.b16 %v2290
        %v2337 = vunpack.c.l.b16 %v2291
        %v2338 = vunpack.c.h.b16 %v2291
        %v2339 = vunpack.c.l.b16 %v2292
        %v2340 = vunpack.c.h.b16 %v2292
        %v2341 = vunpack.c.l.b16 %v2293
        %v2342 = vunpack.c.h.b16 %v2293
        %v2343 = vunpack.c.l.b16 %v2294
        %v2344 = vunpack.c.h.b16 %v2294
        %v2345 = vunpack.c.l.b16 %v2295
        %v2346 = vunpack.c.h.b16 %v2295
        %v2347 = vunpack.c.l.b16 %v2296
        %v2348 = vunpack.c.h.b16 %v2296
        %v2349 = vunpack.c.l.b16 %v2297
        %v2350 = vunpack.c.h.b16 %v2297
        %v2351 = vunpack.c.l.b16 %v2298
        %v2352 = vunpack.c.h.b16 %v2298
        %v2353 = vpack.c.b16 %v2323, %v2321
        %v2354 = vpack.c.b16 %v2324, %v2322
        %v2355 = vpack.c.b16 %v2327, %v2325
        %v2356 = vpack.c.b16 %v2328, %v2326
        %v2357 = vpack.c.b16 %v2331, %v2329
        %v2358 = vpack.c.b16 %v2332, %v2330
        %v2359 = vpack.c.b16 %v2335, %v2333
        %v2360 = vpack.c.b16 %v2336, %v2334
        %v2361 = vpack.c.b16 %v2339, %v2337
        %v2362 = vpack.c.b16 %v2340, %v2338
        %v2363 = vpack.c.b16 %v2343, %v2341
        %v2364 = vpack.c.b16 %v2344, %v2342
        %v2365 = vpack.c.b16 %v2347, %v2345
        %v2366 = vpack.c.b16 %v2348, %v2346
        %v2367 = vpack.c.b16 %v2351, %v2349
        %v2368 = vpack.c.b16 %v2352, %v2350
        %2385 = vmatpush.bf16.msra.mxu0 %v2367
        %2386 = vmatpush.bf16.msra.mxu0 %v2365
        %2387 = vmatpush.bf16.msra.mxu0 %v2363
        %2388 = vmatpush.bf16.msra.mxu0 %v2361
        %2389 = vmatpush.bf16.msra.mxu0 %v2359
        %2390 = vmatpush.bf16.msra.mxu0 %v2357
        %2391 = vmatpush.bf16.msra.mxu0 %v2355
        %2392 = vmatpush.bf16.msra.mxu0 %v2353
        %2393 = vmatmul.bf16.gmra.mxu0 %v2282
        %v2394 = vpop.f32.mrf.mxu0
        %v2395 = vadd.f32 %v2301, %v2394
        %v2396 = vpop.f32.mrf.mxu0
        %v2397 = vadd.f32 %v2301, %v2396
        %2398 = vdwg.mxu0
        %2399 = vmatpush.bf16.msra.mxu0 %v2368
        %2400 = vmatpush.bf16.msra.mxu0 %v2366
        %2401 = vmatpush.bf16.msra.mxu0 %v2364
        %2402 = vmatpush.bf16.msra.mxu0 %v2362
        %2403 = vmatpush.bf16.msra.mxu0 %v2360
        %2404 = vmatpush.bf16.msra.mxu0 %v2358
        %2405 = vmatpush.bf16.msra.mxu0 %v2356
        %2406 = vmatpush.bf16.msra.mxu0 %v2354
        %2407 = vmatmul.bf16.gmra.mxu0 %v2282
        %v2408 = vpop.f32.mrf.mxu0
        %v2409 = vadd.f32 %v2302, %v2408
        %v2410 = vpop.f32.mrf.mxu0
        %v2411 = vadd.f32 %v2302, %v2410
        %2412 = vdwg.mxu0
        %v2413 = vld [vmem:[%s1090] sm:$0xf]
        %v2414 = vld [vmem:[%s1090 + $0x4] sm:$0xf]
        %v2415 = vld [vmem:[%s1090 + $0x8] sm:$0xf]
        %v2416 = vld [vmem:[%s1090 + $0xc] sm:$0xf]
        %v2417 = vld [vmem:[%s1090 + $0x10] sm:$0xf]
        %v2418 = vld [vmem:[%s1090 + $0x14] sm:$0xf]
        %v2419 = vld [vmem:[%s1090 + $0x18] sm:$0xf]
        %v2420 = vld [vmem:[%s1090 + $0x1c] sm:$0xf]
        %v2421 = vld [vmem:[%s1090 + $0x20] sm:$0xf]
        %v2422 = vld [vmem:[%s1090 + $0x24] sm:$0xf]
        %v2423 = vld [vmem:[%s1090 + $0x28] sm:$0xf]
        %v2424 = vld [vmem:[%s1090 + $0x2c] sm:$0xf]
        %v2425 = vld [vmem:[%s1090 + $0x30] sm:$0xf]
        %v2426 = vld [vmem:[%s1090 + $0x34] sm:$0xf]
        %v2427 = vld [vmem:[%s1090 + $0x38] sm:$0xf]
        %v2428 = vld [vmem:[%s1090 + $0x3c] sm:$0xf]
        %v2429 = vld [vmem:[%s1093] sm:$0x1]
        %2431 = vrot.lane.b32.xlu0 %v2279, 96
        %v2432 = vpop.permute.xlu0 %2431
        %2434 = vrot.lane.b32.xlu0 %v2279, 64
        %v2435 = vpop.permute.xlu0 %2434
        %2437 = vrot.lane.b32.xlu0 %v2279, 32
        %v2438 = vpop.permute.xlu0 %2437
        %v2440 = vrot.slane %v2435, 4
        %v2441 = vsel %vm1404, %v2440, %v2279
        %v2442 = vrot.slane %v2279, 4
        %v2443 = vsel %vm1404, %v2435, %v2442
        %v2445 = vunpack.c.l.s4 1983009808
        %v2446 = vunpack.c.0.s8 %v2445
        %v2447 = vperm.slane %v2441, %v2446
        %v2449 = vunpack.c.l.s4 1983009808
        %v2450 = vunpack.c.0.s8 %v2449
        %v2451 = vperm.slane %v2443, %v2450
        %v2452 = vrot.slane %v2438, 4
        %v2453 = vsel %vm1404, %v2452, %v2432
        %v2454 = vrot.slane %v2432, 4
        %v2455 = vsel %vm1404, %v2438, %v2454
        %v2457 = vunpack.c.l.s4 1983009808
        %v2458 = vunpack.c.0.s8 %v2457
        %v2459 = vperm.slane %v2453, %v2458
        %v2461 = vunpack.c.l.s4 1983009808
        %v2462 = vunpack.c.0.s8 %v2461
        %v2463 = vperm.slane %v2455, %v2462
        %v2464 = vrot.slane %v2459, 4
        %v2465 = vsel %vm1404, %v2464, %v2447
        %v2466 = vrot.slane %v2447, 4
        %v2467 = vsel %vm1404, %v2459, %v2466
        %v2469 = vunpack.c.l.s4 1934713408
        %v2470 = vunpack.c.0.s8 %v2469
        %v2471 = vperm.slane %v2465, %v2470
        %v2473 = vunpack.c.l.s4 1934713408
        %v2474 = vunpack.c.0.s8 %v2473
        %v2475 = vperm.slane %v2467, %v2474
        %v2476 = vrot.slane %v2463, 4
        %v2477 = vsel %vm1404, %v2476, %v2451
        %v2478 = vrot.slane %v2451, 4
        %v2479 = vsel %vm1404, %v2463, %v2478
        %v2481 = vunpack.c.l.s4 1934713408
        %v2482 = vunpack.c.0.s8 %v2481
        %v2483 = vperm.slane %v2477, %v2482
        %v2485 = vunpack.c.l.s4 1934713408
        %v2486 = vunpack.c.0.s8 %v2485
        %v2487 = vperm.slane %v2479, %v2486
        %v2488 = vrot.slane %v2471, 4
        %v2489 = vsel %vm1404, 0.0, %v2488
        %v2490 = vrot.slane %v2475, 4
        %v2491 = vsel %vm1404, 0.0, %v2490
        %v2492 = vrot.slane %v2483, 4
        %v2493 = vsel %vm1404, 0.0, %v2492
        %v2494 = vrot.slane %v2487, 4
        %v2495 = vsel %vm1404, 0.0, %v2494
        %v2496 = vsel %vm1404, %v2490, %v2471
        %v2498 = vunpack.c.l.s4 1983009808
        %v2499 = vunpack.c.0.s8 %v2498
        %v2500 = vperm.slane %v2496, %v2499
        %v2501 = vrot.slane %v2491, 4
        %v2502 = vsel %vm1404, %v2501, %v2489
        %v2504 = vunpack.c.l.s4 1983009808
        %v2505 = vunpack.c.0.s8 %v2504
        %v2506 = vperm.slane %v2502, %v2505
        %v2507 = vsel %vm1404, %v2494, %v2483
        %v2509 = vunpack.c.l.s4 1983009808
        %v2510 = vunpack.c.0.s8 %v2509
        %v2511 = vperm.slane %v2507, %v2510
        %v2512 = vrot.slane %v2495, 4
        %v2513 = vsel %vm1404, %v2512, %v2493
        %v2515 = vunpack.c.l.s4 1983009808
        %v2516 = vunpack.c.0.s8 %v2515
        %v2517 = vperm.slane %v2513, %v2516
        %v2518 = vrot.slane %v2506, 4
        %v2519 = vsel %vm1404, %v2518, %v2500
        %v2520 = vrot.slane %v2500, 4
        %v2521 = vsel %vm1404, %v2506, %v2520
        %v2523 = vunpack.c.l.s4 1934713408
        %v2524 = vunpack.c.0.s8 %v2523
        %v2525 = vperm.slane %v2519, %v2524
        %v2527 = vunpack.c.l.s4 1934713408
        %v2528 = vunpack.c.0.s8 %v2527
        %v2529 = vperm.slane %v2521, %v2528
        %v2530 = vrot.slane %v2517, 4
        %v2531 = vsel %vm1404, %v2530, %v2511
        %v2532 = vrot.slane %v2511, 4
        %v2533 = vsel %vm1404, %v2517, %v2532
        %v2535 = vunpack.c.l.s4 1934713408
        %v2536 = vunpack.c.0.s8 %v2535
        %v2537 = vperm.slane %v2531, %v2536
        %v2539 = vunpack.c.l.s4 1934713408
        %v2540 = vunpack.c.0.s8 %v2539
        %v2541 = vperm.slane %v2533, %v2540
        %v2542 = vrot.slane %v2537, 4
        %v2543 = vsel %vm1404, %v2542, %v2525
        %v2544 = vrot.slane %v2525, 4
        %v2545 = vsel %vm1404, %v2537, %v2544
        %v2546 = vrot.slane %v2541, 4
        %v2547 = vsel %vm1404, %v2546, %v2529
        %v2548 = vrot.slane %v2529, 4
        %v2549 = vsel %vm1404, %v2541, %v2548
        %v2550 = vpack.c.bf16 %v2543, %v2543
        %v2551 = vpack.c.bf16 %v2545, %v2545
        %v2552 = vpack.c.bf16 %v2547, %v2547
        %v2553 = vpack.c.bf16 %v2549, %v2549
        %2556 = vrot.lane.b32.xlu0 %v2395, 96
        %v2557 = vpop.permute.xlu0 %2556
        %2558 = vrot.lane.b32.xlu0 %v2397, 96
        %v2559 = vpop.permute.xlu0 %2558
        %2562 = vrot.lane.b32.xlu0 %v2395, 64
        %v2563 = vpop.permute.xlu0 %2562
        %2564 = vrot.lane.b32.xlu0 %v2397, 64
        %v2565 = vpop.permute.xlu0 %2564
        %2568 = vrot.lane.b32.xlu0 %v2395, 32
        %v2569 = vpop.permute.xlu0 %2568
        %2570 = vrot.lane.b32.xlu0 %v2397, 32
        %v2571 = vpop.permute.xlu0 %2570
        %v2574 = vrot.slane %v2563, 4
        %v2575 = vsel %vm1404, %v2574, %v2395
        %v2576 = vrot.slane %v2395, 4
        %v2577 = vsel %vm1404, %v2563, %v2576
        %v2579 = vunpack.c.l.s4 1983009808
        %v2580 = vunpack.c.0.s8 %v2579
        %v2581 = vperm.slane %v2575, %v2580
        %v2583 = vunpack.c.l.s4 1983009808
        %v2584 = vunpack.c.0.s8 %v2583
        %v2585 = vperm.slane %v2577, %v2584
        %v2586 = vrot.slane %v2569, 4
        %v2587 = vsel %vm1404, %v2586, %v2557
        %v2588 = vrot.slane %v2557, 4
        %v2589 = vsel %vm1404, %v2569, %v2588
        %v2591 = vunpack.c.l.s4 1983009808
        %v2592 = vunpack.c.0.s8 %v2591
        %v2593 = vperm.slane %v2587, %v2592
        %v2595 = vunpack.c.l.s4 1983009808
        %v2596 = vunpack.c.0.s8 %v2595
        %v2597 = vperm.slane %v2589, %v2596
        %v2598 = vrot.slane %v2593, 4
        %v2599 = vsel %vm1404, %v2598, %v2581
        %v2600 = vrot.slane %v2581, 4
        %v2601 = vsel %vm1404, %v2593, %v2600
        %v2603 = vunpack.c.l.s4 1934713408
        %v2604 = vunpack.c.0.s8 %v2603
        %v2605 = vperm.slane %v2599, %v2604
        %v2607 = vunpack.c.l.s4 1934713408
        %v2608 = vunpack.c.0.s8 %v2607
        %v2609 = vperm.slane %v2601, %v2608
        %v2610 = vrot.slane %v2597, 4
        %v2611 = vsel %vm1404, %v2610, %v2585
        %v2612 = vrot.slane %v2585, 4
        %v2613 = vsel %vm1404, %v2597, %v2612
        %v2615 = vunpack.c.l.s4 1934713408
        %v2616 = vunpack.c.0.s8 %v2615
        %v2617 = vperm.slane %v2611, %v2616
        %v2619 = vunpack.c.l.s4 1934713408
        %v2620 = vunpack.c.0.s8 %v2619
        %v2621 = vperm.slane %v2613, %v2620
        %v2622 = vrot.slane %v2605, 4
        %v2623 = vsel %vm1404, 0.0, %v2622
        %v2624 = vrot.slane %v2609, 4
        %v2625 = vsel %vm1404, 0.0, %v2624
        %v2626 = vrot.slane %v2617, 4
        %v2627 = vsel %vm1404, 0.0, %v2626
        %v2628 = vrot.slane %v2621, 4
        %v2629 = vsel %vm1404, 0.0, %v2628
        %v2630 = vrot.slane %v2565, 4
        %v2631 = vsel %vm1404, %v2630, %v2397
        %v2632 = vrot.slane %v2397, 4
        %v2633 = vsel %vm1404, %v2565, %v2632
        %v2635 = vunpack.c.l.s4 1983009808
        %v2636 = vunpack.c.0.s8 %v2635
        %v2637 = vperm.slane %v2631, %v2636
        %v2639 = vunpack.c.l.s4 1983009808
        %v2640 = vunpack.c.0.s8 %v2639
        %v2641 = vperm.slane %v2633, %v2640
        %v2642 = vrot.slane %v2571, 4
        %v2643 = vsel %vm1404, %v2642, %v2559
        %v2644 = vrot.slane %v2559, 4
        %v2645 = vsel %vm1404, %v2571, %v2644
        %v2647 = vunpack.c.l.s4 1983009808
        %v2648 = vunpack.c.0.s8 %v2647
        %v2649 = vperm.slane %v2643, %v2648
        %v2651 = vunpack.c.l.s4 1983009808
        %v2652 = vunpack.c.0.s8 %v2651
        %v2653 = vperm.slane %v2645, %v2652
        %v2654 = vrot.slane %v2649, 4
        %v2655 = vsel %vm1404, %v2654, %v2637
        %v2656 = vrot.slane %v2637, 4
        %v2657 = vsel %vm1404, %v2649, %v2656
        %v2659 = vunpack.c.l.s4 1934713408
        %v2660 = vunpack.c.0.s8 %v2659
        %v2661 = vperm.slane %v2655, %v2660
        %v2663 = vunpack.c.l.s4 1934713408
        %v2664 = vunpack.c.0.s8 %v2663
        %v2665 = vperm.slane %v2657, %v2664
        %v2666 = vrot.slane %v2653, 4
        %v2667 = vsel %vm1404, %v2666, %v2641
        %v2668 = vrot.slane %v2641, 4
        %v2669 = vsel %vm1404, %v2653, %v2668
        %v2671 = vunpack.c.l.s4 1934713408
        %v2672 = vunpack.c.0.s8 %v2671
        %v2673 = vperm.slane %v2667, %v2672
        %v2675 = vunpack.c.l.s4 1934713408
        %v2676 = vunpack.c.0.s8 %v2675
        %v2677 = vperm.slane %v2669, %v2676
        %v2678 = vrot.slane %v2661, 4
        %v2679 = vsel %vm1404, 0.0, %v2678
        %v2680 = vrot.slane %v2665, 4
        %v2681 = vsel %vm1404, 0.0, %v2680
        %v2682 = vrot.slane %v2673, 4
        %v2683 = vsel %vm1404, 0.0, %v2682
        %v2684 = vrot.slane %v2677, 4
        %v2685 = vsel %vm1404, 0.0, %v2684
        %v2686 = vsel %vm1404, %v2624, %v2605
        %v2688 = vunpack.c.l.s4 1983009808
        %v2689 = vunpack.c.0.s8 %v2688
        %v2690 = vperm.slane %v2686, %v2689
        %v2691 = vrot.slane %v2625, 4
        %v2692 = vsel %vm1404, %v2691, %v2623
        %v2694 = vunpack.c.l.s4 1983009808
        %v2695 = vunpack.c.0.s8 %v2694
        %v2696 = vperm.slane %v2692, %v2695
        %v2697 = vsel %vm1404, %v2628, %v2617
        %v2699 = vunpack.c.l.s4 1983009808
        %v2700 = vunpack.c.0.s8 %v2699
        %v2701 = vperm.slane %v2697, %v2700
        %v2702 = vrot.slane %v2629, 4
        %v2703 = vsel %vm1404, %v2702, %v2627
        %v2705 = vunpack.c.l.s4 1983009808
        %v2706 = vunpack.c.0.s8 %v2705
        %v2707 = vperm.slane %v2703, %v2706
        %v2708 = vrot.slane %v2696, 4
        %v2709 = vsel %vm1404, %v2708, %v2690
        %v2710 = vrot.slane %v2690, 4
        %v2711 = vsel %vm1404, %v2696, %v2710
        %v2713 = vunpack.c.l.s4 1934713408
        %v2714 = vunpack.c.0.s8 %v2713
        %v2715 = vperm.slane %v2709, %v2714
        %v2717 = vunpack.c.l.s4 1934713408
        %v2718 = vunpack.c.0.s8 %v2717
        %v2719 = vperm.slane %v2711, %v2718
        %v2720 = vrot.slane %v2707, 4
        %v2721 = vsel %vm1404, %v2720, %v2701
        %v2722 = vrot.slane %v2701, 4
        %v2723 = vsel %vm1404, %v2707, %v2722
        %v2725 = vunpack.c.l.s4 1934713408
        %v2726 = vunpack.c.0.s8 %v2725
        %v2727 = vperm.slane %v2721, %v2726
        %v2729 = vunpack.c.l.s4 1934713408
        %v2730 = vunpack.c.0.s8 %v2729
        %v2731 = vperm.slane %v2723, %v2730
        %v2732 = vrot.slane %v2727, 4
        %v2733 = vsel %vm1404, %v2732, %v2715
        %v2734 = vrot.slane %v2715, 4
        %v2735 = vsel %vm1404, %v2727, %v2734
        %v2736 = vrot.slane %v2731, 4
        %v2737 = vsel %vm1404, %v2736, %v2719
        %v2738 = vrot.slane %v2719, 4
        %v2739 = vsel %vm1404, %v2731, %v2738
        %v2740 = vsel %vm1404, %v2680, %v2661
        %v2742 = vunpack.c.l.s4 1983009808
        %v2743 = vunpack.c.0.s8 %v2742
        %v2744 = vperm.slane %v2740, %v2743
        %v2745 = vrot.slane %v2681, 4
        %v2746 = vsel %vm1404, %v2745, %v2679
        %v2748 = vunpack.c.l.s4 1983009808
        %v2749 = vunpack.c.0.s8 %v2748
        %v2750 = vperm.slane %v2746, %v2749
        %v2751 = vsel %vm1404, %v2684, %v2673
        %v2753 = vunpack.c.l.s4 1983009808
        %v2754 = vunpack.c.0.s8 %v2753
        %v2755 = vperm.slane %v2751, %v2754
        %v2756 = vrot.slane %v2685, 4
        %v2757 = vsel %vm1404, %v2756, %v2683
        %v2759 = vunpack.c.l.s4 1983009808
        %v2760 = vunpack.c.0.s8 %v2759
        %v2761 = vperm.slane %v2757, %v2760
        %v2762 = vrot.slane %v2750, 4
        %v2763 = vsel %vm1404, %v2762, %v2744
        %v2764 = vrot.slane %v2744, 4
        %v2765 = vsel %vm1404, %v2750, %v2764
        %v2767 = vunpack.c.l.s4 1934713408
        %v2768 = vunpack.c.0.s8 %v2767
        %v2769 = vperm.slane %v2763, %v2768
        %v2771 = vunpack.c.l.s4 1934713408
        %v2772 = vunpack.c.0.s8 %v2771
        %v2773 = vperm.slane %v2765, %v2772
        %v2774 = vrot.slane %v2761, 4
        %v2775 = vsel %vm1404, %v2774, %v2755
        %v2776 = vrot.slane %v2755, 4
        %v2777 = vsel %vm1404, %v2761, %v2776
        %v2779 = vunpack.c.l.s4 1934713408
        %v2780 = vunpack.c.0.s8 %v2779
        %v2781 = vperm.slane %v2775, %v2780
        %v2783 = vunpack.c.l.s4 1934713408
        %v2784 = vunpack.c.0.s8 %v2783
        %v2785 = vperm.slane %v2777, %v2784
        %v2786 = vrot.slane %v2781, 4
        %v2787 = vsel %vm1404, %v2786, %v2769
        %v2788 = vrot.slane %v2769, 4
        %v2789 = vsel %vm1404, %v2781, %v2788
        %v2790 = vrot.slane %v2785, 4
        %v2791 = vsel %vm1404, %v2790, %v2773
        %v2792 = vrot.slane %v2773, 4
        %v2793 = vsel %vm1404, %v2785, %v2792
        %v2794 = vpack.c.bf16 %v2733, %v2733
        %v2795 = vpack.c.bf16 %v2787, %v2787
        %v2796 = vpack.c.bf16 %v2735, %v2735
        %v2797 = vpack.c.bf16 %v2789, %v2789
        %v2798 = vpack.c.bf16 %v2737, %v2737
        %v2799 = vpack.c.bf16 %v2791, %v2791
        %v2800 = vpack.c.bf16 %v2739, %v2739
        %v2801 = vpack.c.bf16 %v2793, %v2793
        %2804 = vrot.lane.b32.xlu0 %v2409, 96
        %v2805 = vpop.permute.xlu0 %2804
        %2806 = vrot.lane.b32.xlu0 %v2411, 96
        %v2807 = vpop.permute.xlu0 %2806
        %2810 = vrot.lane.b32.xlu0 %v2409, 64
        %v2811 = vpop.permute.xlu0 %2810
        %2812 = vrot.lane.b32.xlu0 %v2411, 64
        %v2813 = vpop.permute.xlu0 %2812
        %2816 = vrot.lane.b32.xlu0 %v2409, 32
        %v2817 = vpop.permute.xlu0 %2816
        %2818 = vrot.lane.b32.xlu0 %v2411, 32
        %v2819 = vpop.permute.xlu0 %2818
        %v2822 = vrot.slane %v2811, 4
        %v2823 = vsel %vm1404, %v2822, %v2409
        %v2824 = vrot.slane %v2409, 4
        %v2825 = vsel %vm1404, %v2811, %v2824
        %v2827 = vunpack.c.l.s4 1983009808
        %v2828 = vunpack.c.0.s8 %v2827
        %v2829 = vperm.slane %v2823, %v2828
        %v2831 = vunpack.c.l.s4 1983009808
        %v2832 = vunpack.c.0.s8 %v2831
        %v2833 = vperm.slane %v2825, %v2832
        %v2834 = vrot.slane %v2817, 4
        %v2835 = vsel %vm1404, %v2834, %v2805
        %v2836 = vrot.slane %v2805, 4
        %v2837 = vsel %vm1404, %v2817, %v2836
        %v2839 = vunpack.c.l.s4 1983009808
        %v2840 = vunpack.c.0.s8 %v2839
        %v2841 = vperm.slane %v2835, %v2840
        %v2843 = vunpack.c.l.s4 1983009808
        %v2844 = vunpack.c.0.s8 %v2843
        %v2845 = vperm.slane %v2837, %v2844
        %v2846 = vrot.slane %v2841, 4
        %v2847 = vsel %vm1404, %v2846, %v2829
        %v2848 = vrot.slane %v2829, 4
        %v2849 = vsel %vm1404, %v2841, %v2848
        %v2851 = vunpack.c.l.s4 1934713408
        %v2852 = vunpack.c.0.s8 %v2851
        %v2853 = vperm.slane %v2847, %v2852
        %v2855 = vunpack.c.l.s4 1934713408
        %v2856 = vunpack.c.0.s8 %v2855
        %v2857 = vperm.slane %v2849, %v2856
        %v2858 = vrot.slane %v2845, 4
        %v2859 = vsel %vm1404, %v2858, %v2833
        %v2860 = vrot.slane %v2833, 4
        %v2861 = vsel %vm1404, %v2845, %v2860
        %v2863 = vunpack.c.l.s4 1934713408
        %v2864 = vunpack.c.0.s8 %v2863
        %v2865 = vperm.slane %v2859, %v2864
        %v2867 = vunpack.c.l.s4 1934713408
        %v2868 = vunpack.c.0.s8 %v2867
        %v2869 = vperm.slane %v2861, %v2868
        %v2870 = vrot.slane %v2853, 4
        %v2871 = vsel %vm1404, 0.0, %v2870
        %v2872 = vrot.slane %v2857, 4
        %v2873 = vsel %vm1404, 0.0, %v2872
        %v2874 = vrot.slane %v2865, 4
        %v2875 = vsel %vm1404, 0.0, %v2874
        %v2876 = vrot.slane %v2869, 4
        %v2877 = vsel %vm1404, 0.0, %v2876
        %v2878 = vrot.slane %v2813, 4
        %v2879 = vsel %vm1404, %v2878, %v2411
        %v2880 = vrot.slane %v2411, 4
        %v2881 = vsel %vm1404, %v2813, %v2880
        %v2883 = vunpack.c.l.s4 1983009808
        %v2884 = vunpack.c.0.s8 %v2883
        %v2885 = vperm.slane %v2879, %v2884
        %v2887 = vunpack.c.l.s4 1983009808
        %v2888 = vunpack.c.0.s8 %v2887
        %v2889 = vperm.slane %v2881, %v2888
        %v2890 = vrot.slane %v2819, 4
        %v2891 = vsel %vm1404, %v2890, %v2807
        %v2892 = vrot.slane %v2807, 4
        %v2893 = vsel %vm1404, %v2819, %v2892
        %v2895 = vunpack.c.l.s4 1983009808
        %v2896 = vunpack.c.0.s8 %v2895
        %v2897 = vperm.slane %v2891, %v2896
        %v2899 = vunpack.c.l.s4 1983009808
        %v2900 = vunpack.c.0.s8 %v2899
        %v2901 = vperm.slane %v2893, %v2900
        %v2902 = vrot.slane %v2897, 4
        %v2903 = vsel %vm1404, %v2902, %v2885
        %v2904 = vrot.slane %v2885, 4
        %v2905 = vsel %vm1404, %v2897, %v2904
        %v2907 = vunpack.c.l.s4 1934713408
        %v2908 = vunpack.c.0.s8 %v2907
        %v2909 = vperm.slane %v2903, %v2908
        %v2911 = vunpack.c.l.s4 1934713408
        %v2912 = vunpack.c.0.s8 %v2911
        %v2913 = vperm.slane %v2905, %v2912
        %v2914 = vrot.slane %v2901, 4
        %v2915 = vsel %vm1404, %v2914, %v2889
        %v2916 = vrot.slane %v2889, 4
        %v2917 = vsel %vm1404, %v2901, %v2916
        %v2919 = vunpack.c.l.s4 1934713408
        %v2920 = vunpack.c.0.s8 %v2919
        %v2921 = vperm.slane %v2915, %v2920
        %v2923 = vunpack.c.l.s4 1934713408
        %v2924 = vunpack.c.0.s8 %v2923
        %v2925 = vperm.slane %v2917, %v2924
        %v2926 = vrot.slane %v2909, 4
        %v2927 = vsel %vm1404, 0.0, %v2926
        %v2928 = vrot.slane %v2913, 4
        %v2929 = vsel %vm1404, 0.0, %v2928
        %v2930 = vrot.slane %v2921, 4
        %v2931 = vsel %vm1404, 0.0, %v2930
        %v2932 = vrot.slane %v2925, 4
        %v2933 = vsel %vm1404, 0.0, %v2932
        %v2934 = vsel %vm1404, %v2872, %v2853
        %v2936 = vunpack.c.l.s4 1983009808
        %v2937 = vunpack.c.0.s8 %v2936
        %v2938 = vperm.slane %v2934, %v2937
        %v2939 = vrot.slane %v2873, 4
        %v2940 = vsel %vm1404, %v2939, %v2871
        %v2942 = vunpack.c.l.s4 1983009808
        %v2943 = vunpack.c.0.s8 %v2942
        %v2944 = vperm.slane %v2940, %v2943
        %v2945 = vsel %vm1404, %v2876, %v2865
        %v2947 = vunpack.c.l.s4 1983009808
        %v2948 = vunpack.c.0.s8 %v2947
        %v2949 = vperm.slane %v2945, %v2948
        %v2950 = vrot.slane %v2877, 4
        %v2951 = vsel %vm1404, %v2950, %v2875
        %v2953 = vunpack.c.l.s4 1983009808
        %v2954 = vunpack.c.0.s8 %v2953
        %v2955 = vperm.slane %v2951, %v2954
        %v2956 = vrot.slane %v2944, 4
        %v2957 = vsel %vm1404, %v2956, %v2938
        %v2958 = vrot.slane %v2938, 4
        %v2959 = vsel %vm1404, %v2944, %v2958
        %v2961 = vunpack.c.l.s4 1934713408
        %v2962 = vunpack.c.0.s8 %v2961
        %v2963 = vperm.slane %v2957, %v2962
        %v2965 = vunpack.c.l.s4 1934713408
        %v2966 = vunpack.c.0.s8 %v2965
        %v2967 = vperm.slane %v2959, %v2966
        %v2968 = vrot.slane %v2955, 4
        %v2969 = vsel %vm1404, %v2968, %v2949
        %v2970 = vrot.slane %v2949, 4
        %v2971 = vsel %vm1404, %v2955, %v2970
        %v2973 = vunpack.c.l.s4 1934713408
        %v2974 = vunpack.c.0.s8 %v2973
        %v2975 = vperm.slane %v2969, %v2974
        %v2977 = vunpack.c.l.s4 1934713408
        %v2978 = vunpack.c.0.s8 %v2977
        %v2979 = vperm.slane %v2971, %v2978
        %v2980 = vrot.slane %v2975, 4
        %v2981 = vsel %vm1404, %v2980, %v2963
        %v2982 = vrot.slane %v2963, 4
        %v2983 = vsel %vm1404, %v2975, %v2982
        %v2984 = vrot.slane %v2979, 4
        %v2985 = vsel %vm1404, %v2984, %v2967
        %v2986 = vrot.slane %v2967, 4
        %v2987 = vsel %vm1404, %v2979, %v2986
        %v2988 = vsel %vm1404, %v2928, %v2909
        %v2990 = vunpack.c.l.s4 1983009808
        %v2991 = vunpack.c.0.s8 %v2990
        %v2992 = vperm.slane %v2988, %v2991
        %v2993 = vrot.slane %v2929, 4
        %v2994 = vsel %vm1404, %v2993, %v2927
        %v2996 = vunpack.c.l.s4 1983009808
        %v2997 = vunpack.c.0.s8 %v2996
        %v2998 = vperm.slane %v2994, %v2997
        %v2999 = vsel %vm1404, %v2932, %v2921
        %v3001 = vunpack.c.l.s4 1983009808
        %v3002 = vunpack.c.0.s8 %v3001
        %v3003 = vperm.slane %v2999, %v3002
        %v3004 = vrot.slane %v2933, 4
        %v3005 = vsel %vm1404, %v3004, %v2931
        %v3007 = vunpack.c.l.s4 1983009808
        %v3008 = vunpack.c.0.s8 %v3007
        %v3009 = vperm.slane %v3005, %v3008
        %v3010 = vrot.slane %v2998, 4
        %v3011 = vsel %vm1404, %v3010, %v2992
        %v3012 = vrot.slane %v2992, 4
        %v3013 = vsel %vm1404, %v2998, %v3012
        %v3015 = vunpack.c.l.s4 1934713408
        %v3016 = vunpack.c.0.s8 %v3015
        %v3017 = vperm.slane %v3011, %v3016
        %v3019 = vunpack.c.l.s4 1934713408
        %v3020 = vunpack.c.0.s8 %v3019
        %v3021 = vperm.slane %v3013, %v3020
        %v3022 = vrot.slane %v3009, 4
        %v3023 = vsel %vm1404, %v3022, %v3003
        %v3024 = vrot.slane %v3003, 4
        %v3025 = vsel %vm1404, %v3009, %v3024
        %v3027 = vunpack.c.l.s4 1934713408
        %v3028 = vunpack.c.0.s8 %v3027
        %v3029 = vperm.slane %v3023, %v3028
        %v3031 = vunpack.c.l.s4 1934713408
        %v3032 = vunpack.c.0.s8 %v3031
        %v3033 = vperm.slane %v3025, %v3032
        %v3034 = vrot.slane %v3029, 4
        %v3035 = vsel %vm1404, %v3034, %v3017
        %v3036 = vrot.slane %v3017, 4
        %v3037 = vsel %vm1404, %v3029, %v3036
        %v3038 = vrot.slane %v3033, 4
        %v3039 = vsel %vm1404, %v3038, %v3021
        %v3040 = vrot.slane %v3021, 4
        %v3041 = vsel %vm1404, %v3033, %v3040
        %v3042 = vpack.c.bf16 %v2981, %v2981
        %v3043 = vpack.c.bf16 %v3035, %v3035
        %v3044 = vpack.c.bf16 %v2983, %v2983
        %v3045 = vpack.c.bf16 %v3037, %v3037
        %v3046 = vpack.c.bf16 %v2985, %v2985
        %v3047 = vpack.c.bf16 %v3039, %v3039
        %v3048 = vpack.c.bf16 %v2987, %v2987
        %v3049 = vpack.c.bf16 %v3041, %v3041
        %v3052 = vunpack.c.l.b16 %v2794
        %v3053 = vunpack.c.l.b16 %v2795
        %v3054 = vpack.c.b16 %v3053, %v3052
        %v3056 = vsel %vm1766, %v2550, 0
        %v3059 = vsel %vm1766, %v3054, 0
        %3061 = vmatpush.bf16.xpose.msra.mxu0 0
        %3062 = vmatpush.bf16.xpose.msra.mxu0 0
        %3063 = vmatpush.bf16.xpose.msra.mxu0 0
        %3064 = vmatpush.bf16.xpose.msra.mxu0 0
        %3065 = vmatpush.bf16.xpose.msra.mxu0 0
        %3066 = vmatpush.bf16.xpose.msra.mxu0 0
        %3067 = vmatpush.bf16.xpose.msra.mxu0 0
        %3068 = vmatpush.bf16.xpose.msra.mxu0 %v3059
        %3069 = vmatmul.bf16.gmra.mxu0 %v3056
        %v3070 = vpop.f32.mrf.mxu0
        %v3071 = vadd.f32 0.0, %v3070
        %v3072 = vpop.f32.mrf.mxu0
        %3073 = vdwg.mxu0
        %v3076 = vunpack.c.l.b16 %v2796
        %v3077 = vunpack.c.l.b16 %v2797
        %v3078 = vpack.c.b16 %v3077, %v3076
        %v3080 = vsel %vm1766, %v2551, 0
        %v3083 = vsel %vm1766, %v3078, 0
        %3085 = vmatpush.bf16.xpose.msra.mxu0 0
        %3086 = vmatpush.bf16.xpose.msra.mxu0 0
        %3087 = vmatpush.bf16.xpose.msra.mxu0 0
        %3088 = vmatpush.bf16.xpose.msra.mxu0 0
        %3089 = vmatpush.bf16.xpose.msra.mxu0 0
        %3090 = vmatpush.bf16.xpose.msra.mxu0 0
        %3091 = vmatpush.bf16.xpose.msra.mxu0 0
        %3092 = vmatpush.bf16.xpose.msra.mxu0 %v3083
        %3093 = vmatmul.bf16.gmra.mxu0 %v3080
        %v3094 = vpop.f32.mrf.mxu0
        %v3095 = vadd.f32 0.0, %v3094
        %v3096 = vpop.f32.mrf.mxu0
        %3097 = vdwg.mxu0
        %v3100 = vunpack.c.l.b16 %v2798
        %v3101 = vunpack.c.l.b16 %v2799
        %v3102 = vpack.c.b16 %v3101, %v3100
        %v3104 = vsel %vm1766, %v2552, 0
        %v3107 = vsel %vm1766, %v3102, 0
        %3109 = vmatpush.bf16.xpose.msra.mxu0 0
        %3110 = vmatpush.bf16.xpose.msra.mxu0 0
        %3111 = vmatpush.bf16.xpose.msra.mxu0 0
        %3112 = vmatpush.bf16.xpose.msra.mxu0 0
        %3113 = vmatpush.bf16.xpose.msra.mxu0 0
        %3114 = vmatpush.bf16.xpose.msra.mxu0 0
        %3115 = vmatpush.bf16.xpose.msra.mxu0 0
        %3116 = vmatpush.bf16.xpose.msra.mxu0 %v3107
        %3117 = vmatmul.bf16.gmra.mxu0 %v3104
        %v3118 = vpop.f32.mrf.mxu0
        %v3119 = vadd.f32 0.0, %v3118
        %v3120 = vpop.f32.mrf.mxu0
        %3121 = vdwg.mxu0
        %v3124 = vunpack.c.l.b16 %v2800
        %v3125 = vunpack.c.l.b16 %v2801
        %v3126 = vpack.c.b16 %v3125, %v3124
        %v3128 = vsel %vm1766, %v2553, 0
        %v3131 = vsel %vm1766, %v3126, 0
        %3133 = vmatpush.bf16.xpose.msra.mxu0 0
        %3134 = vmatpush.bf16.xpose.msra.mxu0 0
        %3135 = vmatpush.bf16.xpose.msra.mxu0 0
        %3136 = vmatpush.bf16.xpose.msra.mxu0 0
        %3137 = vmatpush.bf16.xpose.msra.mxu0 0
        %3138 = vmatpush.bf16.xpose.msra.mxu0 0
        %3139 = vmatpush.bf16.xpose.msra.mxu0 0
        %3140 = vmatpush.bf16.xpose.msra.mxu0 %v3131
        %3141 = vmatmul.bf16.gmra.mxu0 %v3128
        %v3142 = vpop.f32.mrf.mxu0
        %v3143 = vadd.f32 0.0, %v3142
        %v3144 = vpop.f32.mrf.mxu0
        %3145 = vdwg.mxu0
        %v3146 = vmul.f32 %v3071, 0.17677669
        %v3147 = vmul.f32 %v3095, 0.17677669
        %v3148 = vmul.f32 %v3119, 0.17677669
        %v3149 = vmul.f32 %v3143, 0.17677669
        %vm3150 = vcmask 130048
        %v3151 = vsel %vm3150, %v3146, -inf
        %3152 = vmax.xlane.f32.xlu0 %v3151
        %v3153 = vpop.xlane.xlu0 %3152
        %v3154 = vsel %vm3150, %v3147, -inf
        %3155 = vmax.xlane.f32.xlu0 %v3154
        %v3156 = vpop.xlane.xlu0 %3155
        %v3157 = vsel %vm3150, %v3148, -inf
        %3158 = vmax.xlane.f32.xlu0 %v3157
        %v3159 = vpop.xlane.xlu0 %3158
        %v3160 = vsel %vm3150, %v3149, -inf
        %3161 = vmax.xlane.f32.xlu0 %v3160
        %v3162 = vpop.xlane.xlu0 %3161
        %v3163 = vsub.f32 %v3146, %v3153
        %v3164 = vsub.f32 %v3147, %v3156
        %v3165 = vsub.f32 %v3148, %v3159
        %v3166 = vsub.f32 %v3149, %v3162
        %v3167 = vmul.f32 %v3163, 1.442695
        %v3168 = vpow.pop %v3167
        %v3169 = vmul.f32 %v3164, 1.442695
        %v3170 = vpow.pop %v3169
        %v3171 = vmul.f32 %v3165, 1.442695
        %v3172 = vpow.pop %v3171
        %v3173 = vmul.f32 %v3166, 1.442695
        %v3174 = vpow.pop %v3173
        %v3175 = vsel %vm3150, %v3168, 0.0
        %3176 = vadd.xlane.f32.xlu0 %v3175
        %v3177 = vpop.xlane.xlu0 %3176
        %v3178 = vsel %vm3150, %v3170, 0.0
        %3179 = vadd.xlane.f32.xlu0 %v3178
        %v3180 = vpop.xlane.xlu0 %3179
        %v3181 = vsel %vm3150, %v3172, 0.0
        %3182 = vadd.xlane.f32.xlu0 %v3181
        %v3183 = vpop.xlane.xlu0 %3182
        %v3184 = vsel %vm3150, %v3174, 0.0
        %3185 = vadd.xlane.f32.xlu0 %v3184
        %v3186 = vpop.xlane.xlu0 %3185
        %v3187 = vrcp.pop %v3177
        %v3188 = vrcp.pop %v3180
        %v3189 = vrcp.pop %v3183
        %v3190 = vrcp.pop %v3186
        %v3191 = vmul.f32 %v3168, %v3187
        %v3192 = vmul.f32 %v3170, %v3188
        %v3193 = vmul.f32 %v3172, %v3189
        %v3194 = vmul.f32 %v3174, %v3190
        %3195 = vst.msk [vmem:[%s1030] sm:$0xff] %vm3150, %v3191
        %3196 = vst.msk [vmem:[%s1030 + $0x8] sm:$0xff] %vm3150, %v3192
        %3197 = vst.msk [vmem:[%s1030 + $0x10] sm:$0xff] %vm3150, %v3193
        %3198 = vst.msk [vmem:[%s1030 + $0x18] sm:$0xff] %vm3150, %v3194
        %v3199 = vpack.c.bf16 %v3191, %v3191
        %v3200 = vpack.c.bf16 %v3192, %v3192
        %v3201 = vpack.c.bf16 %v3193, %v3193
        %v3202 = vpack.c.bf16 %v3194, %v3194
        %v3205 = vunpack.c.l.b16 %v3042
        %v3206 = vunpack.c.l.b16 %v3043
        %v3207 = vpack.c.b16 %v3206, %v3205
        %v3210 = vsel %vm3150, %v3199, 0
        %3212 = vmatpush.bf16.msra.mxu0 0
        %3213 = vmatpush.bf16.msra.mxu0 0
        %3214 = vmatpush.bf16.msra.mxu0 0
        %3215 = vmatpush.bf16.msra.mxu0 0
        %3216 = vmatpush.bf16.msra.mxu0 0
        %3217 = vmatpush.bf16.msra.mxu0 0
        %3218 = vmatpush.bf16.msra.mxu0 0
        %3219 = vmatpush.bf16.msra.mxu0 %v3207
        %3220 = vmatmul.bf16.gmra.mxu0 %v3210
        %v3221 = vpop.f32.mrf.mxu0
        %v3222 = vadd.f32 0.0, %v3221
        %v3223 = vpop.f32.mrf.mxu0
        %3224 = vdwg.mxu0
        %v3227 = vunpack.c.l.b16 %v3044
        %v3228 = vunpack.c.l.b16 %v3045
        %v3229 = vpack.c.b16 %v3228, %v3227
        %v3232 = vsel %vm3150, %v3200, 0
        %3234 = vmatpush.bf16.msra.mxu0 0
        %3235 = vmatpush.bf16.msra.mxu0 0
        %3236 = vmatpush.bf16.msra.mxu0 0
        %3237 = vmatpush.bf16.msra.mxu0 0
        %3238 = vmatpush.bf16.msra.mxu0 0
        %3239 = vmatpush.bf16.msra.mxu0 0
        %3240 = vmatpush.bf16.msra.mxu0 0
        %3241 = vmatpush.bf16.msra.mxu0 %v3229
        %3242 = vmatmul.bf16.gmra.mxu0 %v3232
        %v3243 = vpop.f32.mrf.mxu0
        %v3244 = vadd.f32 0.0, %v3243
        %v3245 = vpop.f32.mrf.mxu0
        %3246 = vdwg.mxu0
        %v3249 = vunpack.c.l.b16 %v3046
        %v3250 = vunpack.c.l.b16 %v3047
        %v3251 = vpack.c.b16 %v3250, %v3249
        %v3254 = vsel %vm3150, %v3201, 0
        %3256 = vmatpush.bf16.msra.mxu0 0
        %3257 = vmatpush.bf16.msra.mxu0 0
        %3258 = vmatpush.bf16.msra.mxu0 0
        %3259 = vmatpush.bf16.msra.mxu0 0
        %3260 = vmatpush.bf16.msra.mxu0 0
        %3261 = vmatpush.bf16.msra.mxu0 0
        %3262 = vmatpush.bf16.msra.mxu0 0
        %3263 = vmatpush.bf16.msra.mxu0 %v3251
        %3264 = vmatmul.bf16.gmra.mxu0 %v3254
        %v3265 = vpop.f32.mrf.mxu0
        %v3266 = vadd.f32 0.0, %v3265
        %v3267 = vpop.f32.mrf.mxu0
        %3268 = vdwg.mxu0
        %v3271 = vunpack.c.l.b16 %v3048
        %v3272 = vunpack.c.l.b16 %v3049
        %v3273 = vpack.c.b16 %v3272, %v3271
        %v3276 = vsel %vm3150, %v3202, 0
        %3278 = vmatpush.bf16.msra.mxu0 0
        %3279 = vmatpush.bf16.msra.mxu0 0
        %3280 = vmatpush.bf16.msra.mxu0 0
        %3281 = vmatpush.bf16.msra.mxu0 0
        %3282 = vmatpush.bf16.msra.mxu0 0
        %3283 = vmatpush.bf16.msra.mxu0 0
        %3284 = vmatpush.bf16.msra.mxu0 0
        %3285 = vmatpush.bf16.msra.mxu0 %v3273
        %3286 = vmatmul.bf16.gmra.mxu0 %v3276
        %v3287 = vpop.f32.mrf.mxu0
        %v3288 = vadd.f32 0.0, %v3287
        %v3289 = vpop.f32.mrf.mxu0
        %3290 = vdwg.mxu0
        %v3291 = vrot.slane %v3266, 4
        %v3292 = vsel %vm1404, %v3291, %v3222
        %v3293 = vrot.slane %v3222, 4
        %v3294 = vsel %vm1404, %v3266, %v3293
        %v3296 = vunpack.c.l.s4 1983009808
        %v3297 = vunpack.c.0.s8 %v3296
        %v3298 = vperm.slane %v3292, %v3297
        %v3300 = vunpack.c.l.s4 1983009808
        %v3301 = vunpack.c.0.s8 %v3300
        %v3302 = vperm.slane %v3294, %v3301
        %v3303 = vrot.slane %v3288, 4
        %v3304 = vsel %vm1404, %v3303, %v3244
        %v3305 = vrot.slane %v3244, 4
        %v3306 = vsel %vm1404, %v3288, %v3305
        %v3308 = vunpack.c.l.s4 1983009808
        %v3309 = vunpack.c.0.s8 %v3308
        %v3310 = vperm.slane %v3304, %v3309
        %v3312 = vunpack.c.l.s4 1983009808
        %v3313 = vunpack.c.0.s8 %v3312
        %v3314 = vperm.slane %v3306, %v3313
        %v3315 = vrot.slane %v3310, 4
        %v3316 = vsel %vm1404, %v3315, %v3298
        %v3317 = vrot.slane %v3298, 4
        %v3318 = vsel %vm1404, %v3310, %v3317
        %v3320 = vunpack.c.l.s4 1934713408
        %v3321 = vunpack.c.0.s8 %v3320
        %v3322 = vperm.slane %v3316, %v3321
        %v3324 = vunpack.c.l.s4 1934713408
        %v3325 = vunpack.c.0.s8 %v3324
        %v3326 = vperm.slane %v3318, %v3325
        %v3327 = vrot.slane %v3314, 4
        %v3328 = vsel %vm1404, %v3327, %v3302
        %v3329 = vrot.slane %v3302, 4
        %v3330 = vsel %vm1404, %v3314, %v3329
        %v3332 = vunpack.c.l.s4 1934713408
        %v3333 = vunpack.c.0.s8 %v3332
        %v3334 = vperm.slane %v3328, %v3333
        %v3336 = vunpack.c.l.s4 1934713408
        %v3337 = vunpack.c.0.s8 %v3336
        %v3338 = vperm.slane %v3330, %v3337
        %v3339 = vrot.slane %v3322, 4
        %v3340 = vsel %vm1404, 0.0, %v3339
        %v3341 = vrot.slane %v3326, 4
        %v3342 = vsel %vm1404, 0.0, %v3341
        %v3343 = vrot.slane %v3334, 4
        %v3344 = vsel %vm1404, 0.0, %v3343
        %v3345 = vrot.slane %v3338, 4
        %v3346 = vsel %vm1404, 0.0, %v3345
        %v3347 = vsel %vm1404, %v3341, %v3322
        %v3349 = vunpack.c.l.s4 1983009808
        %v3350 = vunpack.c.0.s8 %v3349
        %v3351 = vperm.slane %v3347, %v3350
        %v3352 = vrot.slane %v3342, 4
        %v3353 = vsel %vm1404, %v3352, %v3340
        %v3355 = vunpack.c.l.s4 1983009808
        %v3356 = vunpack.c.0.s8 %v3355
        %v3357 = vperm.slane %v3353, %v3356
        %v3358 = vsel %vm1404, %v3345, %v3334
        %v3360 = vunpack.c.l.s4 1983009808
        %v3361 = vunpack.c.0.s8 %v3360
        %v3362 = vperm.slane %v3358, %v3361
        %v3363 = vrot.slane %v3346, 4
        %v3364 = vsel %vm1404, %v3363, %v3344
        %v3366 = vunpack.c.l.s4 1983009808
        %v3367 = vunpack.c.0.s8 %v3366
        %v3368 = vperm.slane %v3364, %v3367
        %v3369 = vrot.slane %v3357, 4
        %v3370 = vsel %vm1404, %v3369, %v3351
        %v3371 = vrot.slane %v3351, 4
        %v3372 = vsel %vm1404, %v3357, %v3371
        %v3374 = vunpack.c.l.s4 1934713408
        %v3375 = vunpack.c.0.s8 %v3374
        %v3376 = vperm.slane %v3370, %v3375
        %v3378 = vunpack.c.l.s4 1934713408
        %v3379 = vunpack.c.0.s8 %v3378
        %v3380 = vperm.slane %v3372, %v3379
        %v3381 = vrot.slane %v3368, 4
        %v3382 = vsel %vm1404, %v3381, %v3362
        %v3383 = vrot.slane %v3362, 4
        %v3384 = vsel %vm1404, %v3368, %v3383
        %v3386 = vunpack.c.l.s4 1934713408
        %v3387 = vunpack.c.0.s8 %v3386
        %v3388 = vperm.slane %v3382, %v3387
        %v3390 = vunpack.c.l.s4 1934713408
        %v3391 = vunpack.c.0.s8 %v3390
        %v3392 = vperm.slane %v3384, %v3391
        %v3393 = vrot.slane %v3388, 4
        %v3394 = vsel %vm1404, %v3393, %v3376
        %v3395 = vrot.slane %v3376, 4
        %v3396 = vsel %vm1404, %v3388, %v3395
        %v3397 = vrot.slane %v3392, 4
        %v3398 = vsel %vm1404, %v3397, %v3380
        %v3399 = vrot.slane %v3380, 4
        %v3400 = vsel %vm1404, %v3392, %v3399
        %3402 = vrot.lane.b32.xlu0 %v3396, 32
        %v3403 = vpop.permute.xlu0 %3402
        %3406 = vrot.lane.b32.xlu0 %v3398, 64
        %v3407 = vpop.permute.xlu0 %3406
        %3410 = vrot.lane.b32.xlu0 %v3400, 96
        %v3411 = vpop.permute.xlu0 %3410
        %v3413 = vsel %vm1766, %v3394, %v3403
        %v3414 = vsel %vm2100, %v3413, %v3407
        %v3415 = vsel %vm2102, %v3414, %v3411
        %v3416 = vpack.c.bf16 %v3415, %v3415
        %v3418 = vperm.slane %v2429, 0
        %v3436 = vunpack.c.l.b16 %v2413
        %v3437 = vunpack.c.l.b16 %v2414
        %v3438 = vunpack.c.l.b16 %v2415
        %v3439 = vunpack.c.l.b16 %v2416
        %v3440 = vunpack.c.l.b16 %v2417
        %v3441 = vunpack.c.l.b16 %v2418
        %v3442 = vunpack.c.l.b16 %v2419
        %v3443 = vunpack.c.l.b16 %v2420
        %v3444 = vunpack.c.l.b16 %v2421
        %v3445 = vunpack.c.l.b16 %v2422
        %v3446 = vunpack.c.l.b16 %v2423
        %v3447 = vunpack.c.l.b16 %v2424
        %v3448 = vunpack.c.l.b16 %v2425
        %v3449 = vunpack.c.l.b16 %v2426
        %v3450 = vunpack.c.l.b16 %v2427
        %v3451 = vunpack.c.l.b16 %v2428
        %v3452 = vpack.c.b16 %v3437, %v3436
        %v3453 = vpack.c.b16 %v3439, %v3438
        %v3454 = vpack.c.b16 %v3441, %v3440
        %v3455 = vpack.c.b16 %v3443, %v3442
        %v3456 = vpack.c.b16 %v3445, %v3444
        %v3457 = vpack.c.b16 %v3447, %v3446
        %v3458 = vpack.c.b16 %v3449, %v3448
        %v3459 = vpack.c.b16 %v3451, %v3450
        %3468 = vmatpush.bf16.msra.mxu0 %v3459
        %3469 = vmatpush.bf16.msra.mxu0 %v3458
        %3470 = vmatpush.bf16.msra.mxu0 %v3457
        %3471 = vmatpush.bf16.msra.mxu0 %v3456
        %3472 = vmatpush.bf16.msra.mxu0 %v3455
        %3473 = vmatpush.bf16.msra.mxu0 %v3454
        %3474 = vmatpush.bf16.msra.mxu0 %v3453
        %3475 = vmatpush.bf16.msra.mxu0 %v3452
        %3476 = vmatmul.bf16.gmra.mxu0 %v3416
        %v3477 = vpop.f32.mrf.mxu0
        %v3478 = vadd.f32 %v3418, %v3477
        %v3479 = vpop.f32.mrf.mxu0
        %3480 = vdwg.mxu0
        %v3481 = vadd.f32 %v2169, %v3478
        %3482 = vadd.xlane.f32.xlu0 %v3481
        %v3483 = vpop.xlane.xlu0 %3482
        %v3484 = vmul.f32 %v3483, %v1139
        %v3485 = vsub.f32 %v3481, %v3484
        %v3486 = vmul.f32 %v3485, %v3485
        %3487 = vadd.xlane.f32.xlu0 %v3486
        %v3488 = vpop.xlane.xlu0 %3487
        %v3489 = vmul.f32 %v3488, %v1139
        %v3490 = vadd.f32 %v3489, 1e-05
        %v3491 = vrsqrt.pop %v3490
        %v3492 = vmul.f32 %v3491, %v3490
        %v3493 = vmul.f32 %v3492, %v3491
        %v3494 = vmul.f32 0.5, %v3493
        %v3495 = vsub.f32 1.5, %v3494
        %v3496 = vmul.f32 %v3491, %v3495
        %vm3497 = vweird.f32 %v3490
        %vm3498 = vweird.f32 %v3491
        %vm3499 = vmor %vm3497, %vm3498
        %v3500 = vsel %vm3499, %v3491, %v3496
        %v3501 = vmul.f32 %v3485, %v3500
        %v3502 = vld [vmem:[%s1096] sm:$0x1]
        %v3504 = vperm.slane %v3502, 0
        %v3506 = vmul.f32 %v3501, %v3504
        %v3507 = vld [vmem:[%s1099] sm:$0x1]
        %v3509 = vperm.slane %v3507, 0
        %v3511 = vadd.f32 %v3506, %v3509
        %v3512 = vld [vmem:[%s1104] sm:$0xff]
        %v3513 = vld [vmem:[%s1104 + $0x8] sm:$0xff]
        %v3514 = vld [vmem:[%s1104 + $0x10] sm:$0xff]
        %v3515 = vld [vmem:[%s1104 + $0x18] sm:$0xff]
        %v3516 = vld [vmem:[%s1104 + $0x20] sm:$0xff]
        %v3517 = vld [vmem:[%s1104 + $0x28] sm:$0xff]
        %v3518 = vld [vmem:[%s1104 + $0x30] sm:$0xff]
        %v3519 = vld [vmem:[%s1104 + $0x38] sm:$0xff]
        %v3520 = vld [vmem:[%s1104 + $0x40] sm:$0xff]
        %v3521 = vld [vmem:[%s1104 + $0x48] sm:$0xff]
        %v3522 = vld [vmem:[%s1104 + $0x50] sm:$0xff]
        %v3523 = vld [vmem:[%s1104 + $0x58] sm:$0xff]
        %v3524 = vld [vmem:[%s1104 + $0x60] sm:$0xff]
        %v3525 = vld [vmem:[%s1104 + $0x68] sm:$0xff]
        %v3526 = vld [vmem:[%s1104 + $0x70] sm:$0xff]
        %v3527 = vld [vmem:[%s1104 + $0x78] sm:$0xff]
        %v3528 = vld [vmem:[%s1104 + $0x80] sm:$0xff]
        %v3529 = vld [vmem:[%s1104 + $0x88] sm:$0xff]
        %v3530 = vld [vmem:[%s1104 + $0x90] sm:$0xff]
        %v3531 = vld [vmem:[%s1104 + $0x98] sm:$0xff]
        %v3532 = vld [vmem:[%s1104 + $0xa0] sm:$0xff]
        %v3533 = vld [vmem:[%s1104 + $0xa8] sm:$0xff]
        %v3534 = vld [vmem:[%s1104 + $0xb0] sm:$0xff]
        %v3535 = vld [vmem:[%s1104 + $0xb8] sm:$0xff]
        %v3536 = vld [vmem:[%s1104 + $0xc0] sm:$0xff]
        %v3537 = vld [vmem:[%s1104 + $0xc8] sm:$0xff]
        %v3538 = vld [vmem:[%s1104 + $0xd0] sm:$0xff]
        %v3539 = vld [vmem:[%s1104 + $0xd8] sm:$0xff]
        %v3540 = vld [vmem:[%s1104 + $0xe0] sm:$0xff]
        %v3541 = vld [vmem:[%s1104 + $0xe8] sm:$0xff]
        %v3542 = vld [vmem:[%s1104 + $0xf0] sm:$0xff]
        %v3543 = vld [vmem:[%s1104 + $0xf8] sm:$0xff]
        %v3544 = vld [vmem:[%s1104 + $0x100] sm:$0xff]
        %v3545 = vld [vmem:[%s1104 + $0x108] sm:$0xff]
        %v3546 = vld [vmem:[%s1104 + $0x110] sm:$0xff]
        %v3547 = vld [vmem:[%s1104 + $0x118] sm:$0xff]
        %v3548 = vld [vmem:[%s1104 + $0x120] sm:$0xff]
        %v3549 = vld [vmem:[%s1104 + $0x128] sm:$0xff]
        %v3550 = vld [vmem:[%s1104 + $0x130] sm:$0xff]
        %v3551 = vld [vmem:[%s1104 + $0x138] sm:$0xff]
        %v3552 = vld [vmem:[%s1104 + $0x140] sm:$0xff]
        %v3553 = vld [vmem:[%s1104 + $0x148] sm:$0xff]
        %v3554 = vld [vmem:[%s1104 + $0x150] sm:$0xff]
        %v3555 = vld [vmem:[%s1104 + $0x158] sm:$0xff]
        %v3556 = vld [vmem:[%s1104 + $0x160] sm:$0xff]
        %v3557 = vld [vmem:[%s1104 + $0x168] sm:$0xff]
        %v3558 = vld [vmem:[%s1104 + $0x170] sm:$0xff]
        %v3559 = vld [vmem:[%s1104 + $0x178] sm:$0xff]
        %v3560 = vld [vmem:[%s1104 + $0x180] sm:$0xff]
        %v3561 = vld [vmem:[%s1104 + $0x188] sm:$0xff]
        %v3562 = vld [vmem:[%s1104 + $0x190] sm:$0xff]
        %v3563 = vld [vmem:[%s1104 + $0x198] sm:$0xff]
        %v3564 = vld [vmem:[%s1104 + $0x1a0] sm:$0xff]
        %v3565 = vld [vmem:[%s1104 + $0x1a8] sm:$0xff]
        %v3566 = vld [vmem:[%s1104 + $0x1b0] sm:$0xff]
        %v3567 = vld [vmem:[%s1104 + $0x1b8] sm:$0xff]
        %v3568 = vld [vmem:[%s1104 + $0x1c0] sm:$0xff]
        %v3569 = vld [vmem:[%s1104 + $0x1c8] sm:$0xff]
        %v3570 = vld [vmem:[%s1104 + $0x1d0] sm:$0xff]
        %v3571 = vld [vmem:[%s1104 + $0x1d8] sm:$0xff]
        %v3572 = vld [vmem:[%s1104 + $0x1e0] sm:$0xff]
        %v3573 = vld [vmem:[%s1104 + $0x1e8] sm:$0xff]
        %v3574 = vld [vmem:[%s1104 + $0x1f0] sm:$0xff]
        %v3575 = vld [vmem:[%s1104 + $0x1f8] sm:$0xff]
        %v3576 = vld [vmem:[%s1104 + $0x200] sm:$0xff]
        %v3577 = vld [vmem:[%s1104 + $0x208] sm:$0xff]
        %v3578 = vld [vmem:[%s1104 + $0x210] sm:$0xff]
        %v3579 = vld [vmem:[%s1104 + $0x218] sm:$0xff]
        %v3580 = vld [vmem:[%s1104 + $0x220] sm:$0xff]
        %v3581 = vld [vmem:[%s1104 + $0x228] sm:$0xff]
        %v3582 = vld [vmem:[%s1104 + $0x230] sm:$0xff]
        %v3583 = vld [vmem:[%s1104 + $0x238] sm:$0xff]
        %v3584 = vld [vmem:[%s1104 + $0x240] sm:$0xff]
        %v3585 = vld [vmem:[%s1104 + $0x248] sm:$0xff]
        %v3586 = vld [vmem:[%s1104 + $0x250] sm:$0xff]
        %v3587 = vld [vmem:[%s1104 + $0x258] sm:$0xff]
        %v3588 = vld [vmem:[%s1104 + $0x260] sm:$0xff]
        %v3589 = vld [vmem:[%s1104 + $0x268] sm:$0xff]
        %v3590 = vld [vmem:[%s1104 + $0x270] sm:$0xff]
        %v3591 = vld [vmem:[%s1104 + $0x278] sm:$0xff]
        %v3592 = vld [vmem:[%s1108] sm:$0x3]
        %v3593 = vlaneseq
        %v3594 = vshrl.u32 %v3593, 7
        %v3595 = vrot.slane %v3511, 6
        %v3596 = vadd.s32 %v3594, 4294967294
        %vm3597 = vcmp.ge.s32.totalorder %v3596, 0
        %vm3598 = vcmp.lt.s32.totalorder %v3596, 8
        %vm3599 = vmand %vm3597, %vm3598
        %v3600 = vsel %vm3599, %v3595, 0.0
        %v3601 = vrot.slane %v3511, 7
        %v3602 = vadd.s32 %v3594, 4294967295
        %vm3603 = vcmp.ge.s32.totalorder %v3602, 0
        %vm3604 = vcmp.lt.s32.totalorder %v3602, 8
        %vm3605 = vmand %vm3603, %vm3604
        %v3606 = vsel %vm3605, %v3601, 0.0
        %vm3607 = vcmp.ge.s32.totalorder %v3594, 0
        %vm3608 = vcmp.lt.s32.totalorder %v3594, 8
        %vm3609 = vmand %vm3607, %vm3608
        %v3610 = vsel %vm3609, %v3511, 0.0
        %v3611 = vrot.slane %v3511, 1
        %v3612 = vadd.s32 %v3594, 1
        %vm3613 = vcmp.ge.s32.totalorder %v3612, 0
        %vm3614 = vcmp.lt.s32.totalorder %v3612, 8
        %vm3615 = vmand %vm3613, %vm3614
        %v3616 = vsel %vm3615, %v3611, 0.0
        %v3617 = vrot.slane %v3511, 2
        %v3618 = vadd.s32 %v3594, 2
        %vm3619 = vcmp.ge.s32.totalorder %v3618, 0
        %vm3620 = vcmp.lt.s32.totalorder %v3618, 8
        %vm3621 = vmand %vm3619, %vm3620
        %v3622 = vsel %vm3621, %v3617, 0.0
        %v3623 = vpack.c.bf16 %v3600, %v3600
        %v3624 = vpack.c.bf16 %v3606, %v3606
        %v3625 = vpack.c.bf16 %v3610, %v3610
        %v3626 = vpack.c.bf16 %v3616, %v3616
        %v3627 = vpack.c.bf16 %v3622, %v3622
        %v3629 = vperm.slane %v3592, 0
        %v3630 = vperm.slane %v3592, 1
        %v3713 = vunpack.c.l.b16 %v3512
        %v3714 = vunpack.c.h.b16 %v3512
        %v3715 = vunpack.c.l.b16 %v3513
        %v3716 = vunpack.c.h.b16 %v3513
        %v3717 = vunpack.c.l.b16 %v3514
        %v3718 = vunpack.c.h.b16 %v3514
        %v3719 = vunpack.c.l.b16 %v3515
        %v3720 = vunpack.c.h.b16 %v3515
        %v3721 = vunpack.c.l.b16 %v3516
        %v3722 = vunpack.c.h.b16 %v3516
        %v3723 = vunpack.c.l.b16 %v3517
        %v3724 = vunpack.c.h.b16 %v3517
        %v3725 = vunpack.c.l.b16 %v3518
        %v3726 = vunpack.c.h.b16 %v3518
        %v3727 = vunpack.c.l.b16 %v3519
        %v3728 = vunpack.c.h.b16 %v3519
        %v3729 = vunpack.c.l.b16 %v3520
        %v3730 = vunpack.c.h.b16 %v3520
        %v3731 = vunpack.c.l.b16 %v3521
        %v3732 = vunpack.c.h.b16 %v3521
        %v3733 = vunpack.c.l.b16 %v3522
        %v3734 = vunpack.c.h.b16 %v3522
        %v3735 = vunpack.c.l.b16 %v3523
        %v3736 = vunpack.c.h.b16 %v3523
        %v3737 = vunpack.c.l.b16 %v3524
        %v3738 = vunpack.c.h.b16 %v3524
        %v3739 = vunpack.c.l.b16 %v3525
        %v3740 = vunpack.c.h.b16 %v3525
        %v3741 = vunpack.c.l.b16 %v3526
        %v3742 = vunpack.c.h.b16 %v3526
        %v3743 = vunpack.c.l.b16 %v3527
        %v3744 = vunpack.c.h.b16 %v3527
        %v3745 = vunpack.c.l.b16 %v3528
        %v3746 = vunpack.c.h.b16 %v3528
        %v3747 = vunpack.c.l.b16 %v3529
        %v3748 = vunpack.c.h.b16 %v3529
        %v3749 = vunpack.c.l.b16 %v3530
        %v3750 = vunpack.c.h.b16 %v3530
        %v3751 = vunpack.c.l.b16 %v3531
        %v3752 = vunpack.c.h.b16 %v3531
        %v3753 = vunpack.c.l.b16 %v3532
        %v3754 = vunpack.c.h.b16 %v3532
        %v3755 = vunpack.c.l.b16 %v3533
        %v3756 = vunpack.c.h.b16 %v3533
        %v3757 = vunpack.c.l.b16 %v3534
        %v3758 = vunpack.c.h.b16 %v3534
        %v3759 = vunpack.c.l.b16 %v3535
        %v3760 = vunpack.c.h.b16 %v3535
        %v3761 = vunpack.c.l.b16 %v3536
        %v3762 = vunpack.c.h.b16 %v3536
        %v3763 = vunpack.c.l.b16 %v3537
        %v3764 = vunpack.c.h.b16 %v3537
        %v3765 = vunpack.c.l.b16 %v3538
        %v3766 = vunpack.c.h.b16 %v3538
        %v3767 = vunpack.c.l.b16 %v3539
        %v3768 = vunpack.c.h.b16 %v3539
        %v3769 = vunpack.c.l.b16 %v3540
        %v3770 = vunpack.c.h.b16 %v3540
        %v3771 = vunpack.c.l.b16 %v3541
        %v3772 = vunpack.c.h.b16 %v3541
        %v3773 = vunpack.c.l.b16 %v3542
        %v3774 = vunpack.c.h.b16 %v3542
        %v3775 = vunpack.c.l.b16 %v3543
        %v3776 = vunpack.c.h.b16 %v3543
        %v3777 = vunpack.c.l.b16 %v3544
        %v3778 = vunpack.c.h.b16 %v3544
        %v3779 = vunpack.c.l.b16 %v3545
        %v3780 = vunpack.c.h.b16 %v3545
        %v3781 = vunpack.c.l.b16 %v3546
        %v3782 = vunpack.c.h.b16 %v3546
        %v3783 = vunpack.c.l.b16 %v3547
        %v3784 = vunpack.c.h.b16 %v3547
        %v3785 = vunpack.c.l.b16 %v3548
        %v3786 = vunpack.c.h.b16 %v3548
        %v3787 = vunpack.c.l.b16 %v3549
        %v3788 = vunpack.c.h.b16 %v3549
        %v3789 = vunpack.c.l.b16 %v3550
        %v3790 = vunpack.c.h.b16 %v3550
        %v3791 = vunpack.c.l.b16 %v3551
        %v3792 = vunpack.c.h.b16 %v3551
        %v3793 = vunpack.c.l.b16 %v3552
        %v3794 = vunpack.c.h.b16 %v3552
        %v3795 = vunpack.c.l.b16 %v3553
        %v3796 = vunpack.c.h.b16 %v3553
        %v3797 = vunpack.c.l.b16 %v3554
        %v3798 = vunpack.c.h.b16 %v3554
        %v3799 = vunpack.c.l.b16 %v3555
        %v3800 = vunpack.c.h.b16 %v3555
        %v3801 = vunpack.c.l.b16 %v3556
        %v3802 = vunpack.c.h.b16 %v3556
        %v3803 = vunpack.c.l.b16 %v3557
        %v3804 = vunpack.c.h.b16 %v3557
        %v3805 = vunpack.c.l.b16 %v3558
        %v3806 = vunpack.c.h.b16 %v3558
        %v3807 = vunpack.c.l.b16 %v3559
        %v3808 = vunpack.c.h.b16 %v3559
        %v3809 = vunpack.c.l.b16 %v3560
        %v3810 = vunpack.c.h.b16 %v3560
        %v3811 = vunpack.c.l.b16 %v3561
        %v3812 = vunpack.c.h.b16 %v3561
        %v3813 = vunpack.c.l.b16 %v3562
        %v3814 = vunpack.c.h.b16 %v3562
        %v3815 = vunpack.c.l.b16 %v3563
        %v3816 = vunpack.c.h.b16 %v3563
        %v3817 = vunpack.c.l.b16 %v3564
        %v3818 = vunpack.c.h.b16 %v3564
        %v3819 = vunpack.c.l.b16 %v3565
        %v3820 = vunpack.c.h.b16 %v3565
        %v3821 = vunpack.c.l.b16 %v3566
        %v3822 = vunpack.c.h.b16 %v3566
        %v3823 = vunpack.c.l.b16 %v3567
        %v3824 = vunpack.c.h.b16 %v3567
        %v3825 = vunpack.c.l.b16 %v3568
        %v3826 = vunpack.c.h.b16 %v3568
        %v3827 = vunpack.c.l.b16 %v3569
        %v3828 = vunpack.c.h.b16 %v3569
        %v3829 = vunpack.c.l.b16 %v3570
        %v3830 = vunpack.c.h.b16 %v3570
        %v3831 = vunpack.c.l.b16 %v3571
        %v3832 = vunpack.c.h.b16 %v3571
        %v3833 = vunpack.c.l.b16 %v3572
        %v3834 = vunpack.c.h.b16 %v3572
        %v3835 = vunpack.c.l.b16 %v3573
        %v3836 = vunpack.c.h.b16 %v3573
        %v3837 = vunpack.c.l.b16 %v3574
        %v3838 = vunpack.c.h.b16 %v3574
        %v3839 = vunpack.c.l.b16 %v3575
        %v3840 = vunpack.c.h.b16 %v3575
        %v3841 = vunpack.c.l.b16 %v3576
        %v3842 = vunpack.c.h.b16 %v3576
        %v3843 = vunpack.c.l.b16 %v3577
        %v3844 = vunpack.c.h.b16 %v3577
        %v3845 = vunpack.c.l.b16 %v3578
        %v3846 = vunpack.c.h.b16 %v3578
        %v3847 = vunpack.c.l.b16 %v3579
        %v3848 = vunpack.c.h.b16 %v3579
        %v3849 = vunpack.c.l.b16 %v3580
        %v3850 = vunpack.c.h.b16 %v3580
        %v3851 = vunpack.c.l.b16 %v3581
        %v3852 = vunpack.c.h.b16 %v3581
        %v3853 = vunpack.c.l.b16 %v3582
        %v3854 = vunpack.c.h.b16 %v3582
        %v3855 = vunpack.c.l.b16 %v3583
        %v3856 = vunpack.c.h.b16 %v3583
        %v3857 = vunpack.c.l.b16 %v3584
        %v3858 = vunpack.c.h.b16 %v3584
        %v3859 = vunpack.c.l.b16 %v3585
        %v3860 = vunpack.c.h.b16 %v3585
        %v3861 = vunpack.c.l.b16 %v3586
        %v3862 = vunpack.c.h.b16 %v3586
        %v3863 = vunpack.c.l.b16 %v3587
        %v3864 = vunpack.c.h.b16 %v3587
        %v3865 = vunpack.c.l.b16 %v3588
        %v3866 = vunpack.c.h.b16 %v3588
        %v3867 = vunpack.c.l.b16 %v3589
        %v3868 = vunpack.c.h.b16 %v3589
        %v3869 = vunpack.c.l.b16 %v3590
        %v3870 = vunpack.c.h.b16 %v3590
        %v3871 = vunpack.c.l.b16 %v3591
        %v3872 = vunpack.c.h.b16 %v3591
        %v3873 = vpack.c.b16 %v3715, %v3713
        %v3874 = vpack.c.b16 %v3716, %v3714
        %v3875 = vpack.c.b16 %v3719, %v3717
        %v3876 = vpack.c.b16 %v3720, %v3718
        %v3877 = vpack.c.b16 %v3723, %v3721
        %v3878 = vpack.c.b16 %v3724, %v3722
        %v3879 = vpack.c.b16 %v3727, %v3725
        %v3880 = vpack.c.b16 %v3728, %v3726
        %v3881 = vpack.c.b16 %v3731, %v3729
        %v3882 = vpack.c.b16 %v3732, %v3730
        %v3883 = vpack.c.b16 %v3735, %v3733
        %v3884 = vpack.c.b16 %v3736, %v3734
        %v3885 = vpack.c.b16 %v3739, %v3737
        %v3886 = vpack.c.b16 %v3740, %v3738
        %v3887 = vpack.c.b16 %v3743, %v3741
        %v3888 = vpack.c.b16 %v3744, %v3742
        %v3889 = vpack.c.b16 %v3747, %v3745
        %v3890 = vpack.c.b16 %v3748, %v3746
        %v3891 = vpack.c.b16 %v3751, %v3749
        %v3892 = vpack.c.b16 %v3752, %v3750
        %v3893 = vpack.c.b16 %v3755, %v3753
        %v3894 = vpack.c.b16 %v3756, %v3754
        %v3895 = vpack.c.b16 %v3759, %v3757
        %v3896 = vpack.c.b16 %v3760, %v3758
        %v3897 = vpack.c.b16 %v3763, %v3761
        %v3898 = vpack.c.b16 %v3764, %v3762
        %v3899 = vpack.c.b16 %v3767, %v3765
        %v3900 = vpack.c.b16 %v3768, %v3766
        %v3901 = vpack.c.b16 %v3771, %v3769
        %v3902 = vpack.c.b16 %v3772, %v3770
        %v3903 = vpack.c.b16 %v3775, %v3773
        %v3904 = vpack.c.b16 %v3776, %v3774
        %v3905 = vpack.c.b16 %v3779, %v3777
        %v3906 = vpack.c.b16 %v3780, %v3778
        %v3907 = vpack.c.b16 %v3783, %v3781
        %v3908 = vpack.c.b16 %v3784, %v3782
        %v3909 = vpack.c.b16 %v3787, %v3785
        %v3910 = vpack.c.b16 %v3788, %v3786
        %v3911 = vpack.c.b16 %v3791, %v3789
        %v3912 = vpack.c.b16 %v3792, %v3790
        %v3913 = vpack.c.b16 %v3795, %v3793
        %v3914 = vpack.c.b16 %v3796, %v3794
        %v3915 = vpack.c.b16 %v3799, %v3797
        %v3916 = vpack.c.b16 %v3800, %v3798
        %v3917 = vpack.c.b16 %v3803, %v3801
        %v3918 = vpack.c.b16 %v3804, %v3802
        %v3919 = vpack.c.b16 %v3807, %v3805
        %v3920 = vpack.c.b16 %v3808, %v3806
        %v3921 = vpack.c.b16 %v3811, %v3809
        %v3922 = vpack.c.b16 %v3812, %v3810
        %v3923 = vpack.c.b16 %v3815, %v3813
        %v3924 = vpack.c.b16 %v3816, %v3814
        %v3925 = vpack.c.b16 %v3819, %v3817
        %v3926 = vpack.c.b16 %v3820, %v3818
        %v3927 = vpack.c.b16 %v3823, %v3821
        %v3928 = vpack.c.b16 %v3824, %v3822
        %v3929 = vpack.c.b16 %v3827, %v3825
        %v3930 = vpack.c.b16 %v3828, %v3826
        %v3931 = vpack.c.b16 %v3831, %v3829
        %v3932 = vpack.c.b16 %v3832, %v3830
        %v3933 = vpack.c.b16 %v3835, %v3833
        %v3934 = vpack.c.b16 %v3836, %v3834
        %v3935 = vpack.c.b16 %v3839, %v3837
        %v3936 = vpack.c.b16 %v3840, %v3838
        %v3937 = vpack.c.b16 %v3843, %v3841
        %v3938 = vpack.c.b16 %v3844, %v3842
        %v3939 = vpack.c.b16 %v3847, %v3845
        %v3940 = vpack.c.b16 %v3848, %v3846
        %v3941 = vpack.c.b16 %v3851, %v3849
        %v3942 = vpack.c.b16 %v3852, %v3850
        %v3943 = vpack.c.b16 %v3855, %v3853
        %v3944 = vpack.c.b16 %v3856, %v3854
        %v3945 = vpack.c.b16 %v3859, %v3857
        %v3946 = vpack.c.b16 %v3860, %v3858
        %v3947 = vpack.c.b16 %v3863, %v3861
        %v3948 = vpack.c.b16 %v3864, %v3862
        %v3949 = vpack.c.b16 %v3867, %v3865
        %v3950 = vpack.c.b16 %v3868, %v3866
        %v3951 = vpack.c.b16 %v3871, %v3869
        %v3952 = vpack.c.b16 %v3872, %v3870
        %4033 = vmatpush.bf16.msra.mxu0 %v3887
        %4034 = vmatpush.bf16.msra.mxu0 %v3885
        %4035 = vmatpush.bf16.msra.mxu0 %v3883
        %4036 = vmatpush.bf16.msra.mxu0 %v3881
        %4037 = vmatpush.bf16.msra.mxu0 %v3879
        %4038 = vmatpush.bf16.msra.mxu0 %v3877
        %4039 = vmatpush.bf16.msra.mxu0 %v3875
        %4040 = vmatpush.bf16.msra.mxu0 %v3873
        %4041 = vmatmul.bf16.gmra.mxu0 %v3623
        %v4042 = vpop.f32.mrf.mxu0
        %v4043 = vadd.f32 %v3629, %v4042
        %v4044 = vpop.f32.mrf.mxu0
        %4045 = vdwg.mxu0
        %4046 = vmatpush.bf16.msra.mxu0 %v3903
        %4047 = vmatpush.bf16.msra.mxu0 %v3901
        %4048 = vmatpush.bf16.msra.mxu0 %v3899
        %4049 = vmatpush.bf16.msra.mxu0 %v3897
        %4050 = vmatpush.bf16.msra.mxu0 %v3895
        %4051 = vmatpush.bf16.msra.mxu0 %v3893
        %4052 = vmatpush.bf16.msra.mxu0 %v3891
        %4053 = vmatpush.bf16.msra.mxu0 %v3889
        %4054 = vmatmul.bf16.gmra.mxu0 %v3624
        %v4055 = vpop.f32.mrf.mxu0
        %v4056 = vadd.f32 %v4043, %v4055
        %v4057 = vpop.f32.mrf.mxu0
        %4058 = vdwg.mxu0
        %4059 = vmatpush.bf16.msra.mxu0 %v3919
        %4060 = vmatpush.bf16.msra.mxu0 %v3917
        %4061 = vmatpush.bf16.msra.mxu0 %v3915
        %4062 = vmatpush.bf16.msra.mxu0 %v3913
        %4063 = vmatpush.bf16.msra.mxu0 %v3911
        %4064 = vmatpush.bf16.msra.mxu0 %v3909
        %4065 = vmatpush.bf16.msra.mxu0 %v3907
        %4066 = vmatpush.bf16.msra.mxu0 %v3905
        %4067 = vmatmul.bf16.gmra.mxu0 %v3625
        %v4068 = vpop.f32.mrf.mxu0
        %v4069 = vadd.f32 %v4056, %v4068
        %v4070 = vpop.f32.mrf.mxu0
        %4071 = vdwg.mxu0
        %4072 = vmatpush.bf16.msra.mxu0 %v3935
        %4073 = vmatpush.bf16.msra.mxu0 %v3933
        %4074 = vmatpush.bf16.msra.mxu0 %v3931
        %4075 = vmatpush.bf16.msra.mxu0 %v3929
        %4076 = vmatpush.bf16.msra.mxu0 %v3927
        %4077 = vmatpush.bf16.msra.mxu0 %v3925
        %4078 = vmatpush.bf16.msra.mxu0 %v3923
        %4079 = vmatpush.bf16.msra.mxu0 %v3921
        %4080 = vmatmul.bf16.gmra.mxu0 %v3626
        %v4081 = vpop.f32.mrf.mxu0
        %v4082 = vadd.f32 %v4069, %v4081
        %v4083 = vpop.f32.mrf.mxu0
        %4084 = vdwg.mxu0
        %4085 = vmatpush.bf16.msra.mxu0 %v3951
        %4086 = vmatpush.bf16.msra.mxu0 %v3949
        %4087 = vmatpush.bf16.msra.mxu0 %v3947
        %4088 = vmatpush.bf16.msra.mxu0 %v3945
        %4089 = vmatpush.bf16.msra.mxu0 %v3943
        %4090 = vmatpush.bf16.msra.mxu0 %v3941
        %4091 = vmatpush.bf16.msra.mxu0 %v3939
        %4092 = vmatpush.bf16.msra.mxu0 %v3937
        %4093 = vmatmul.bf16.gmra.mxu0 %v3627
        %v4094 = vpop.f32.mrf.mxu0
        %v4095 = vadd.f32 %v4082, %v4094
        %v4096 = vpop.f32.mrf.mxu0
        %4097 = vdwg.mxu0
        %4098 = vmatpush.bf16.msra.mxu0 %v3888
        %4099 = vmatpush.bf16.msra.mxu0 %v3886
        %4100 = vmatpush.bf16.msra.mxu0 %v3884
        %4101 = vmatpush.bf16.msra.mxu0 %v3882
        %4102 = vmatpush.bf16.msra.mxu0 %v3880
        %4103 = vmatpush.bf16.msra.mxu0 %v3878
        %4104 = vmatpush.bf16.msra.mxu0 %v3876
        %4105 = vmatpush.bf16.msra.mxu0 %v3874
        %4106 = vmatmul.bf16.gmra.mxu0 %v3623
        %v4107 = vpop.f32.mrf.mxu0
        %v4108 = vadd.f32 %v3630, %v4107
        %v4109 = vpop.f32.mrf.mxu0
        %4110 = vdwg.mxu0
        %4111 = vmatpush.bf16.msra.mxu0 %v3904
        %4112 = vmatpush.bf16.msra.mxu0 %v3902
        %4113 = vmatpush.bf16.msra.mxu0 %v3900
        %4114 = vmatpush.bf16.msra.mxu0 %v3898
        %4115 = vmatpush.bf16.msra.mxu0 %v3896
        %4116 = vmatpush.bf16.msra.mxu0 %v3894
        %4117 = vmatpush.bf16.msra.mxu0 %v3892
        %4118 = vmatpush.bf16.msra.mxu0 %v3890
        %4119 = vmatmul.bf16.gmra.mxu0 %v3624
        %v4120 = vpop.f32.mrf.mxu0
        %v4121 = vadd.f32 %v4108, %v4120
        %v4122 = vpop.f32.mrf.mxu0
        %4123 = vdwg.mxu0
        %4124 = vmatpush.bf16.msra.mxu0 %v3920
        %4125 = vmatpush.bf16.msra.mxu0 %v3918
        %4126 = vmatpush.bf16.msra.mxu0 %v3916
        %4127 = vmatpush.bf16.msra.mxu0 %v3914
        %4128 = vmatpush.bf16.msra.mxu0 %v3912
        %4129 = vmatpush.bf16.msra.mxu0 %v3910
        %4130 = vmatpush.bf16.msra.mxu0 %v3908
        %4131 = vmatpush.bf16.msra.mxu0 %v3906
        %4132 = vmatmul.bf16.gmra.mxu0 %v3625
        %v4133 = vpop.f32.mrf.mxu0
        %v4134 = vadd.f32 %v4121, %v4133
        %v4135 = vpop.f32.mrf.mxu0
        %4136 = vdwg.mxu0
        %4137 = vmatpush.bf16.msra.mxu0 %v3936
        %4138 = vmatpush.bf16.msra.mxu0 %v3934
        %4139 = vmatpush.bf16.msra.mxu0 %v3932
        %4140 = vmatpush.bf16.msra.mxu0 %v3930
        %4141 = vmatpush.bf16.msra.mxu0 %v3928
        %4142 = vmatpush.bf16.msra.mxu0 %v3926
        %4143 = vmatpush.bf16.msra.mxu0 %v3924
        %4144 = vmatpush.bf16.msra.mxu0 %v3922
        %4145 = vmatmul.bf16.gmra.mxu0 %v3626
        %v4146 = vpop.f32.mrf.mxu0
        %v4147 = vadd.f32 %v4134, %v4146
        %v4148 = vpop.f32.mrf.mxu0
        %4149 = vdwg.mxu0
        %4150 = vmatpush.bf16.msra.mxu0 %v3952
        %4151 = vmatpush.bf16.msra.mxu0 %v3950
        %4152 = vmatpush.bf16.msra.mxu0 %v3948
        %4153 = vmatpush.bf16.msra.mxu0 %v3946
        %4154 = vmatpush.bf16.msra.mxu0 %v3944
        %4155 = vmatpush.bf16.msra.mxu0 %v3942
        %4156 = vmatpush.bf16.msra.mxu0 %v3940
        %4157 = vmatpush.bf16.msra.mxu0 %v3938
        %4158 = vmatmul.bf16.gmra.mxu0 %v3627
        %v4159 = vpop.f32.mrf.mxu0
        %v4160 = vadd.f32 %v4147, %v4159
        %v4161 = vpop.f32.mrf.mxu0
        %4162 = vdwg.mxu0
        %v4163 = vmax.f32 %v4095, 0.0
        %v4164 = vmax.f32 %v4160, 0.0
        %v4165 = vld [vmem:[%s1113] sm:$0xf]
        %v4166 = vld [vmem:[%s1113 + $0x4] sm:$0xf]
        %v4167 = vld [vmem:[%s1113 + $0x8] sm:$0xf]
        %v4168 = vld [vmem:[%s1113 + $0xc] sm:$0xf]
        %v4169 = vld [vmem:[%s1113 + $0x10] sm:$0xf]
        %v4170 = vld [vmem:[%s1113 + $0x14] sm:$0xf]
        %v4171 = vld [vmem:[%s1113 + $0x18] sm:$0xf]
        %v4172 = vld [vmem:[%s1113 + $0x1c] sm:$0xf]
        %v4173 = vld [vmem:[%s1113 + $0x20] sm:$0xf]
        %v4174 = vld [vmem:[%s1113 + $0x24] sm:$0xf]
        %v4175 = vld [vmem:[%s1113 + $0x28] sm:$0xf]
        %v4176 = vld [vmem:[%s1113 + $0x2c] sm:$0xf]
        %v4177 = vld [vmem:[%s1113 + $0x30] sm:$0xf]
        %v4178 = vld [vmem:[%s1113 + $0x34] sm:$0xf]
        %v4179 = vld [vmem:[%s1113 + $0x38] sm:$0xf]
        %v4180 = vld [vmem:[%s1113 + $0x3c] sm:$0xf]
        %v4181 = vld [vmem:[%s1113 + $0x40] sm:$0xf]
        %v4182 = vld [vmem:[%s1113 + $0x44] sm:$0xf]
        %v4183 = vld [vmem:[%s1113 + $0x48] sm:$0xf]
        %v4184 = vld [vmem:[%s1113 + $0x4c] sm:$0xf]
        %v4185 = vld [vmem:[%s1113 + $0x50] sm:$0xf]
        %v4186 = vld [vmem:[%s1113 + $0x54] sm:$0xf]
        %v4187 = vld [vmem:[%s1113 + $0x58] sm:$0xf]
        %v4188 = vld [vmem:[%s1113 + $0x5c] sm:$0xf]
        %v4189 = vld [vmem:[%s1113 + $0x60] sm:$0xf]
        %v4190 = vld [vmem:[%s1113 + $0x64] sm:$0xf]
        %v4191 = vld [vmem:[%s1113 + $0x68] sm:$0xf]
        %v4192 = vld [vmem:[%s1113 + $0x6c] sm:$0xf]
        %v4193 = vld [vmem:[%s1113 + $0x70] sm:$0xf]
        %v4194 = vld [vmem:[%s1113 + $0x74] sm:$0xf]
        %v4195 = vld [vmem:[%s1113 + $0x78] sm:$0xf]
        %v4196 = vld [vmem:[%s1113 + $0x7c] sm:$0xf]
        %v4197 = vld [vmem:[%s1116] sm:$0x1]
        %v4198 = vpack.c.bf16 %v4163, %v4163
        %v4199 = vpack.c.bf16 %v4164, %v4164
        %v4201 = vperm.slane %v4197, 0
        %v4235 = vunpack.c.l.b16 %v4165
        %v4236 = vunpack.c.l.b16 %v4166
        %v4237 = vunpack.c.l.b16 %v4167
        %v4238 = vunpack.c.l.b16 %v4168
        %v4239 = vunpack.c.l.b16 %v4169
        %v4240 = vunpack.c.l.b16 %v4170
        %v4241 = vunpack.c.l.b16 %v4171
        %v4242 = vunpack.c.l.b16 %v4172
        %v4243 = vunpack.c.l.b16 %v4173
        %v4244 = vunpack.c.l.b16 %v4174
        %v4245 = vunpack.c.l.b16 %v4175
        %v4246 = vunpack.c.l.b16 %v4176
        %v4247 = vunpack.c.l.b16 %v4177
        %v4248 = vunpack.c.l.b16 %v4178
        %v4249 = vunpack.c.l.b16 %v4179
        %v4250 = vunpack.c.l.b16 %v4180
        %v4251 = vunpack.c.l.b16 %v4181
        %v4252 = vunpack.c.l.b16 %v4182
        %v4253 = vunpack.c.l.b16 %v4183
        %v4254 = vunpack.c.l.b16 %v4184
        %v4255 = vunpack.c.l.b16 %v4185
        %v4256 = vunpack.c.l.b16 %v4186
        %v4257 = vunpack.c.l.b16 %v4187
        %v4258 = vunpack.c.l.b16 %v4188
        %v4259 = vunpack.c.l.b16 %v4189
        %v4260 = vunpack.c.l.b16 %v4190
        %v4261 = vunpack.c.l.b16 %v4191
        %v4262 = vunpack.c.l.b16 %v4192
        %v4263 = vunpack.c.l.b16 %v4193
        %v4264 = vunpack.c.l.b16 %v4194
        %v4265 = vunpack.c.l.b16 %v4195
        %v4266 = vunpack.c.l.b16 %v4196
        %v4267 = vpack.c.b16 %v4236, %v4235
        %v4268 = vpack.c.b16 %v4238, %v4237
        %v4269 = vpack.c.b16 %v4240, %v4239
        %v4270 = vpack.c.b16 %v4242, %v4241
        %v4271 = vpack.c.b16 %v4244, %v4243
        %v4272 = vpack.c.b16 %v4246, %v4245
        %v4273 = vpack.c.b16 %v4248, %v4247
        %v4274 = vpack.c.b16 %v4250, %v4249
        %v4275 = vpack.c.b16 %v4252, %v4251
        %v4276 = vpack.c.b16 %v4254, %v4253
        %v4277 = vpack.c.b16 %v4256, %v4255
        %v4278 = vpack.c.b16 %v4258, %v4257
        %v4279 = vpack.c.b16 %v4260, %v4259
        %v4280 = vpack.c.b16 %v4262, %v4261
        %v4281 = vpack.c.b16 %v4264, %v4263
        %v4282 = vpack.c.b16 %v4266, %v4265
        %4299 = vmatpush.bf16.msra.mxu0 %v4274
        %4300 = vmatpush.bf16.msra.mxu0 %v4273
        %4301 = vmatpush.bf16.msra.mxu0 %v4272
        %4302 = vmatpush.bf16.msra.mxu0 %v4271
        %4303 = vmatpush.bf16.msra.mxu0 %v4270
        %4304 = vmatpush.bf16.msra.mxu0 %v4269
        %4305 = vmatpush.bf16.msra.mxu0 %v4268
        %4306 = vmatpush.bf16.msra.mxu0 %v4267
        %4307 = vmatmul.bf16.gmra.mxu0 %v4198
        %v4308 = vpop.f32.mrf.mxu0
        %v4309 = vadd.f32 %v4201, %v4308
        %v4310 = vpop.f32.mrf.mxu0
        %4311 = vdwg.mxu0
        %4312 = vmatpush.bf16.msra.mxu0 %v4282
        %4313 = vmatpush.bf16.msra.mxu0 %v4281
        %4314 = vmatpush.bf16.msra.mxu0 %v4280
        %4315 = vmatpush.bf16.msra.mxu0 %v4279
        %4316 = vmatpush.bf16.msra.mxu0 %v4278
        %4317 = vmatpush.bf16.msra.mxu0 %v4277
        %4318 = vmatpush.bf16.msra.mxu0 %v4276
        %4319 = vmatpush.bf16.msra.mxu0 %v4275
        %4320 = vmatmul.bf16.gmra.mxu0 %v4199
        %v4321 = vpop.f32.mrf.mxu0
        %v4322 = vadd.f32 %v4309, %v4321
        %v4323 = vpop.f32.mrf.mxu0
        %4324 = vdwg.mxu0
        %v4325 = vadd.f32 %v3481, %v4322
        %4326 = vst [vmem:[#allocation2] sm:$0xff] %v4325
        %p4327 = scmp.eq.s32.totalorder %s47, 1
        // Predicated region
        $region113: #{decoder_forward.4} parent=107 // pred_check
          %p4328 = pneg %p4327
        $region114: #{decoder_forward.4} parent=107 // pred_check_branch
          %4330 = sbr.rel (%p4328) target = $region116
        $region115: #{decoder_forward.4} parent=107 // pred_region
          %v4331 = vpack.c.bf16 %v4325, %v4325
          %4332 = vst [vmem:[%s1120] sm:$0xf] %v4331
        $region116: #{decoder_forward.4} parent=107 // pred_fallthru
          _
        %p4333 = scmp.lt.s32.totalorder %s46, 1
        %s4334 = scalar_select %p4333, %s46, 1
        %s4335 = smul.addr %s4334, 4
        %s4336 = scalar_lea.vmem %s22, %s4335
        %s4337 = sand.u32 %s662, 1
        %s4338 = scalar_lea.sflag [#allocation4], %s4337
        %s4339 = sand.u32 %s662, 1
        %s4340 = smul.addr %s4339, 32
        %s4341 = scalar_lea.vmem [#allocation3], %s4340
        %s4342 = sand.u32 %s690, 1
        %s4343 = scalar_lea.sflag [#allocation6], %s4342
        %s4344 = sand.u32 %s690, 1
        %s4345 = smul.addr %s4344, 32
        %s4346 = scalar_lea.vmem [#allocation5], %s4345
        // Predicated region
        $region117: #{decoder_forward.4} parent=107 // pred_check
          %p4347 = pneg %p644
        $region118: #{decoder_forward.4} parent=107 // pred_check_branch
          %4349 = sbr.rel (%p4347) target = $region120
        $region119: #{decoder_forward.4} parent=107 // pred_region
          _
        $region120: #{decoder_forward.4} parent=107 // pred_fallthru
          _
        // Predicated region
        $region121: #{decoder_forward.4} parent=107 // pred_check
          %p4350 = pneg %p672
        $region122: #{decoder_forward.4} parent=107 // pred_check_branch
          %4352 = sbr.rel (%p4350) target = $region124
        $region123: #{decoder_forward.4} parent=107 // pred_region
          %4354 = vsyncadd %s4338, 0
          %s4355 = smul.addr %s46, 4
          %s4356 = smul.addr %s47, 8
          %s4357 = sadd.s32 %s4355, %s4356
          %s4358 = smul.addr %s4357, 8
          %s4359 = scalar_lea.hbm %s23, %s4358
          %s4360 = sshll.u32 %s4341, 4
          %s4361 = int_to_ptr.vmem [resolvable:$true] %s4360
          %s4362 = sshll.u32 %s4359, 4
          %s4363 = int_to_ptr.hbm [resolvable:$true] %s4362
          %4368 = dma.vmem_to_hbm [thread:$0]  %s4361, 512, %s4363, %s4338, 128, 128, 8
        $region124: #{decoder_forward.4} parent=107 // pred_fallthru
          _
        // Predicated region
        $region125: #{decoder_forward.4} parent=107 // pred_check
          %p4369 = pneg %p700
        $region126: #{decoder_forward.4} parent=107 // pred_check_branch
          %4371 = sbr.rel (%p4369) target = $region128
        $region127: #{decoder_forward.4} parent=107 // pred_region
          %4373 = vsyncadd %s4343, 0
          %s4374 = smul.addr %s46, 4
          %s4375 = smul.addr %s47, 8
          %s4376 = sadd.s32 %s4374, %s4375
          %s4377 = smul.addr %s4376, 8
          %s4378 = scalar_lea.hbm %s24, %s4377
          %s4379 = sshll.u32 %s4346, 4
          %s4380 = int_to_ptr.vmem [resolvable:$true] %s4379
          %s4381 = sshll.u32 %s4378, 4
          %s4382 = int_to_ptr.hbm [resolvable:$true] %s4381
          %4387 = dma.vmem_to_hbm [thread:$0]  %s4380, 512, %s4382, %s4343, 128, 128, 8
        $region128: #{decoder_forward.4} parent=107 // pred_fallthru
          _
      $region108: #{decoder_forward.4} parent=5 // pred_fallthru
        _
      %p4388 = scmp.le.s32.totalorder 2, %s37
      // Predicated region
      $region129: #{decoder_forward.4} parent=5 // pred_check
        %p4389 = pneg %p4388
      $region130: #{decoder_forward.4} parent=5 // pred_check_branch
        %4391 = sbr.rel (%p4389) target = $region132
      $region131: #{decoder_forward.4} parent=5 // pred_region
        %s4392 = ssub.s32 %s37, 2
        // Predicated region
        $region133: #{decoder_forward.4} parent=131 // pred_check
          %p4393 = pneg %p650
        $region134: #{decoder_forward.4} parent=131 // pred_check_branch
          %4395 = sbr.rel (%p4393) target = $region136
        $region135: #{decoder_forward.4} parent=131 // pred_region
          %p4396 = scmp.lt.s32.totalorder %s48, 1
          %s4397 = scalar_select %p4396, %s48, 1
          %s4398 = smul.addr %s4397, 4
          %s4399 = scalar_lea.vmem %s22, %s4398
        $region136: #{decoder_forward.4} parent=131 // pred_fallthru
          _
        // Predicated region
        $region137: #{decoder_forward.4} parent=131 // pred_check
          %p4400 = pneg %p678
        $region138: #{decoder_forward.4} parent=131 // pred_check_branch
          %4402 = sbr.rel (%p4400) target = $region140
        $region139: #{decoder_forward.4} parent=131 // pred_region
          %s4403 = sand.u32 %s663, 1
          %s4404 = scalar_lea.sflag [#allocation4], %s4403
          %s4405 = sand.u32 %s663, 1
          %s4406 = smul.addr %s4405, 32
          %s4407 = scalar_lea.vmem [#allocation3], %s4406
          %4409 = dma.done %s4404, 512
        $region140: #{decoder_forward.4} parent=131 // pred_fallthru
          _
        // Predicated region
        $region141: #{decoder_forward.4} parent=131 // pred_check
          %p4410 = pneg %p706
        $region142: #{decoder_forward.4} parent=131 // pred_check_branch
          %4412 = sbr.rel (%p4410) target = $region144
        $region143: #{decoder_forward.4} parent=131 // pred_region
          %s4413 = sand.u32 %s691, 1
          %s4414 = scalar_lea.sflag [#allocation6], %s4413
          %s4415 = sand.u32 %s691, 1
          %s4416 = smul.addr %s4415, 32
          %s4417 = scalar_lea.vmem [#allocation5], %s4416
          %4419 = dma.done %s4414, 512
        $region144: #{decoder_forward.4} parent=131 // pred_fallthru
          _
      $region132: #{decoder_forward.4} parent=5 // pred_fallthru
        _
    $region6: #{decoder_forward.4} parent=1 // loop_footer
      %s41 = sadd.s32 1, %s37
    $region7: #{decoder_forward.4} parent=1 // loop_footer_branch
      %36 = sbr.rel target = $region3
    $region8: #{decoder_forward.4} parent=1 // loop_exit
      _
    %4420 = vsyncpa [#allocation4], 1
    %s4421 = scalar_lea.sflag [#allocation4], 1
    %4422 = vsyncpa %s4421, 1
    %4423 = vsyncpa [#allocation6], 1
    %s4424 = scalar_lea.sflag [#allocation6], 1
    %4425 = vsyncpa %s4424, 1

</llo_original>
